<compile_context>
chip_gen: v7x
topology: tpu7x:2x2x1
jax: 0.10.0
libtpu: 0.0.40
codegen_flags: <defaults>
</compile_context>

<pallas_src>
import jax
import jax.numpy as jnp
from jax.experimental import pallas as pl
from jax.experimental.pallas import tpu as pltpu

# ----------------------------- config (small, TPU-friendly) -----------------------------
B = 2                 # batch size
H = 128               # hidden_size == embedding_size (lane-aligned)
E = H
N_TREES = 7           # max_num_trees
V_SRC = 64            # source_vocab_size
V_TGT = 128           # target_vocab_size
MAX_TGT_LEN = 6       # max_target_len -> 5 decode steps
T_DEC = MAX_TGT_LEN - 1
DROPOUT_RATE = 0.0    # TODO(synk): nn.Dropout (training-mode RNG) has no deterministic Pallas equivalent; rate=0.


# ----------------------------- Pallas kernels -----------------------------
def _tree_encoder_kernel(lch_ref, rch_ref, emb_ref, w_ref, b_ref, h_out_ref, c_out_ref):
    """One grid step = one tree node (processed in decreasing node index).

    h_out_ref / c_out_ref (N_TREES, B, H) stay VMEM-resident across the whole grid
    (constant index_map) and double as the node-state scratch for child gathers.
    """
    s = pl.program_id(0)
    node = N_TREES - 1 - s

    @pl.when(s == 0)
    def _init():
        h_out_ref[...] = jnp.zeros_like(h_out_ref)
        c_out_ref[...] = jnp.zeros_like(c_out_ref)

    x = emb_ref[0]                                    # (B, E) f32, this node's embeddings

    # Gather child states per batch row (child indices differ per batch element).
    hls, hrs, cls, crs = [], [], [], []
    for b in range(B):
        li = lch_ref[b, node]
        ri = rch_ref[b, node]
        lsafe = jnp.maximum(li, 0)
        rsafe = jnp.maximum(ri, 0)
        lval = (li >= 0).astype(jnp.float32)          # missing child -> zeros
        rval = (ri >= 0).astype(jnp.float32)
        hls.append(h_out_ref[lsafe][b:b + 1, :] * lval)
        cls.append(c_out_ref[lsafe][b:b + 1, :] * lval)
        hrs.append(h_out_ref[rsafe][b:b + 1, :] * rval)
        crs.append(c_out_ref[rsafe][b:b + 1, :] * rval)
    hl = jnp.concatenate(hls, axis=0)                 # (B, H)
    hr = jnp.concatenate(hrs, axis=0)
    cl = jnp.concatenate(cls, axis=0)
    cr = jnp.concatenate(crs, axis=0)

    # Single fused gate matmul: [x, hl, hr] (B,3H) @ (3H,5H); cols = [i | fl | fr | o | u].
    xin = jnp.concatenate([x, hl, hr], axis=1).astype(jnp.bfloat16)
    gates = jnp.dot(xin, w_ref[...], preferred_element_type=jnp.float32) + b_ref[...]

    i = jax.nn.sigmoid(gates[:, 0 * H:1 * H])
    fl = jax.nn.sigmoid(gates[:, 1 * H:2 * H])
    fr = jax.nn.sigmoid(gates[:, 2 * H:3 * H])
    o = jax.nn.sigmoid(gates[:, 3 * H:4 * H])
    u = jnp.tanh(gates[:, 4 * H:5 * H])
    c = i * u + fl * cl + fr * cr
    h = o * jnp.tanh(c)

    h_out_ref[node] = h
    c_out_ref[node] = c


def _decoder_step_kernel(emb_ref, h0_ref, c0_ref, enc_ref, maskb_ref,
                         wl_ref, bl_ref, wa_ref, ba_ref, wo_ref, bo_ref,
                         logp_ref, h_scr, c_scr):
    """One grid step = one decode step: LSTM cell + attention + output proj + log-softmax."""
    s = pl.program_id(0)

    @pl.when(s == 0)
    def _init():
        h_scr[...] = h0_ref[...]
        c_scr[...] = c0_ref[...]

    x = emb_ref[0]                                    # (B, E)
    h = h_scr[...]
    c = c_scr[...]

    # Fused LSTM gates: [x, h] (B,2H) @ (2H,4H); torch gate order (i, f, g, o).
    xi = jnp.concatenate([x, h], axis=1).astype(jnp.bfloat16)
    gates = jnp.dot(xi, wl_ref[...], preferred_element_type=jnp.float32) + bl_ref[...]
    i = jax.nn.sigmoid(gates[:, 0 * H:1 * H])
    f = jax.nn.sigmoid(gates[:, 1 * H:2 * H])
    g = jnp.tanh(gates[:, 2 * H:3 * H])
    o = jax.nn.sigmoid(gates[:, 3 * H:4 * H])
    c_new = f * c + i * g
    h_new = o * jnp.tanh(c_new)
    h_scr[...] = h_new
    c_scr[...] = c_new

    # Attention (finite additive mask instead of -inf fill).
    enc = enc_ref[...]                                           # (B, T, H)
    dotted = jnp.sum(enc * h_new[:, None, :], axis=-1) + maskb_ref[...]   # (B, T)
    m = jnp.max(dotted, axis=-1, keepdims=True)
    e = jnp.exp(dotted - m)
    attn = e / jnp.sum(e, axis=-1, keepdims=True)
    enc_att = jnp.sum(enc * attn[:, :, None], axis=1)            # (B, H)

    # tanh(att_enc_linear(enc_att) + att_dec_linear(h)) as one fused (B,2H)@(2H,H) matmul.
    ares = jnp.concatenate([enc_att, h_new], axis=1).astype(jnp.bfloat16)
    res = jnp.tanh(jnp.dot(ares, wa_ref[...], preferred_element_type=jnp.float32) + ba_ref[...])

    logits = jnp.dot(res.astype(jnp.bfloat16), wo_ref[...],
                     preferred_element_type=jnp.float32) + bo_ref[...]
    lm = jnp.max(logits, axis=-1, keepdims=True)
    lse = lm + jnp.log(jnp.sum(jnp.exp(logits - lm), axis=-1, keepdims=True))
    logp_ref[0] = logits - lse                                   # LogSoftmax


# ----------------------------- parameter init + fusion (host-side, once) -----------------------------
def init_params(key):
    def nxt():
        nonlocal key
        key, sub = jax.random.split(key)
        return sub

    def lin(out_f, in_f):
        w = jax.random.normal(nxt(), (out_f, in_f), jnp.float32) * 0.1     # torch layout (out, in)
        b = jax.random.normal(nxt(), (1, out_f), jnp.float32) * 0.1
        return w, b

    p = {}
    p['enc_emb'] = jax.random.normal(nxt(), (V_SRC, E), jnp.float32) * 0.1
    # TreeLSTM gates, stacked as [i, f, o, u] along the output dim (torch layout).
    ws, bs = zip(*(lin(H, H) for _ in range(4)))          # ix, fx, ox, ux
    p['tree_wx'], p['tree_bx'] = jnp.concatenate(ws, 0), jnp.concatenate(bs, 1)
    ws, bs = zip(*(lin(H, H) for _ in range(4)))          # ilh, flh, olh, ulh
    p['tree_wl'], p['tree_bl'] = jnp.concatenate(ws, 0), jnp.concatenate(bs, 1)
    ws, bs = zip(*(lin(H, H) for _ in range(4)))          # irh, frh, orh, urh
    p['tree_wr'], p['tree_br'] = jnp.concatenate(ws, 0), jnp.concatenate(bs, 1)
    # decoder
    p['dec_emb'] = jax.random.normal(nxt(), (V_TGT, E), jnp.float32) * 0.1
    p['lstm_wih'], p['lstm_bih'] = lin(4 * H, E)
    p['lstm_whh'], p['lstm_bhh'] = lin(4 * H, H)
    p['attn_enc_w'], p['attn_enc_b'] = lin(H, H)
    p['attn_dec_w'], p['attn_dec_b'] = lin(H, H)
    p['out_w'], p['out_b'] = lin(V_TGT, H)
    return p


def fuse_params(p, mxu_dtype=jnp.bfloat16):
    """Pre-transpose to (in, out) and pre-concatenate for single-push kernel matmuls."""
    def wg(w, k):                       # gate block k of a (4H, H) stacked weight, transposed
        return w[k * H:(k + 1) * H, :].T

    def bg(b, k):
        return b[:, k * H:(k + 1) * H]

    z = jnp.zeros((H, H), jnp.float32)
    wx, wl, wr = p['tree_wx'], p['tree_wl'], p['tree_wr']
    # rows: [x ; h_left ; h_right], cols: [i | f_left | f_right | o | u]  (fx feeds both f cols)
    row_x = jnp.concatenate([wg(wx, 0), wg(wx, 1), wg(wx, 1), wg(wx, 2), wg(wx, 3)], axis=1)
    row_l = jnp.concatenate([wg(wl, 0), wg(wl, 1), z,         wg(wl, 2), wg(wl, 3)], axis=1)
    row_r = jnp.concatenate([wg(wr, 0), z,         wg(wr, 1), wg(wr, 2), wg(wr, 3)], axis=1)
    w_tree = jnp.concatenate([row_x, row_l, row_r], axis=0)                 # (3H, 5H)
    bx, bl, br = p['tree_bx'], p['tree_bl'], p['tree_br']
    b_tree = jnp.concatenate([bg(bx, 0) + bg(bl, 0) + bg(br, 0),
                              bg(bx, 1) + bg(bl, 1),
                              bg(bx, 1) + bg(br, 1),
                              bg(bx, 2) + bg(bl, 2) + bg(br, 2),
                              bg(bx, 3) + bg(bl, 3) + bg(br, 3)], axis=1)   # (1, 5H)

    w_lstm = jnp.concatenate([p['lstm_wih'].T, p['lstm_whh'].T], axis=0)    # (E+H, 4H)
    b_lstm = p['lstm_bih'] + p['lstm_bhh']                                  # (1, 4H)
    w_att = jnp.concatenate([p['attn_enc_w'].T, p['attn_dec_w'].T], axis=0) # (2H, H)
    b_att = p['attn_enc_b'] + p['attn_dec_b']                               # (1, H)
    w_out = p['out_w'].T                                                    # (H, V)
    b_out = p['out_b']                                                      # (1, V)
    return {
        'w_tree': w_tree.astype(mxu_dtype), 'b_tree': b_tree,
        'w_lstm': w_lstm.astype(mxu_dtype), 'b_lstm': b_lstm,
        'w_att':  w_att.astype(mxu_dtype),  'b_att':  b_att,
        'w_out':  w_out.astype(mxu_dtype),  'b_out':  b_out,
    }


# ----------------------------- forward pass -----------------------------
def tree_encoder_forward(p, fp, roots, lchild, rchild, num_trees):
    emb_nodes = p['enc_emb'][roots.T]                    # (N_TREES, B, E), node order

    node_h, node_c = pl.pallas_call(
        _tree_encoder_kernel,
        out_shape=(jax.ShapeDtypeStruct((N_TREES, B, H), jnp.float32),
                   jax.ShapeDtypeStruct((N_TREES, B, H), jnp.float32)),
        grid_spec=pltpu.PrefetchScalarGridSpec(
            num_scalar_prefetch=2,                        # lchild, rchild -> SMEM
            grid=(N_TREES,),
            in_specs=[
                pl.BlockSpec((1, B, E), lambda s, lch, rch: (N_TREES - 1 - s, 0, 0)),
                pl.BlockSpec((3 * H, 5 * H), lambda s, lch, rch: (0, 0)),   # resident weights
                pl.BlockSpec((1, 5 * H), lambda s, lch, rch: (0, 0)),
            ],
            out_specs=[
                pl.BlockSpec((N_TREES, B, H), lambda s, lch, rch: (0, 0, 0)),  # resident states
                pl.BlockSpec((N_TREES, B, H), lambda s, lch, rch: (0, 0, 0)),
            ],
        ),
        compiler_params=pltpu.CompilerParams(dimension_semantics=("arbitrary",)),
    )(lchild, rchild, emb_nodes, fp['w_tree'], fp['b_tree'])

    valid = jnp.arange(N_TREES)[None, :] < num_trees[:, None]               # (B, N)
    enc_out = jnp.where(valid[:, :, None], jnp.transpose(node_h, (1, 0, 2)), 0.0)  # PAD -> zeros
    mask_bias = jnp.where(valid, 0.0, -1e9).astype(jnp.float32)             # finite "-inf"
    return enc_out, mask_bias, node_h[0], node_c[0]                         # root (node 0) state


def decode_forward(p, fp, enc_out, mask_bias, h0, c0, decoder_inputs):
    # Teacher forcing: embedding for decode step s is decoder_inputs[:, s].
    emb_steps = p['dec_emb'][decoder_inputs[:, :T_DEC].T]                   # (T_DEC, B, E)

    logp = pl.pallas_call(
        _decoder_step_kernel,
        out_shape=jax.ShapeDtypeStruct((T_DEC, B, V_TGT), jnp.float32),
        grid_spec=pltpu.PrefetchScalarGridSpec(
            num_scalar_prefetch=0,
            grid=(T_DEC,),
            in_specs=[
                pl.BlockSpec((1, B, E), lambda s: (s, 0, 0)),               # per-step embedding
                pl.BlockSpec((B, H), lambda s: (0, 0)),                     # h0
                pl.BlockSpec((B, H), lambda s: (0, 0)),                     # c0
                pl.BlockSpec((B, N_TREES, H), lambda s: (0, 0, 0)),         # encoder outputs
                pl.BlockSpec((B, N_TREES), lambda s: (0, 0)),               # mask bias
                pl.BlockSpec((2 * H, 4 * H), lambda s: (0, 0)),             # resident weights
                pl.BlockSpec((1, 4 * H), lambda s: (0, 0)),
                pl.BlockSpec((2 * H, H), lambda s: (0, 0)),
                pl.BlockSpec((1, H), lambda s: (0, 0)),
                pl.BlockSpec((H, V_TGT), lambda s: (0, 0)),
                pl.BlockSpec((1, V_TGT), lambda s: (0, 0)),
            ],
            out_specs=pl.BlockSpec((1, B, V_TGT), lambda s: (s, 0, 0)),
            scratch_shapes=[pltpu.VMEM((B, H), jnp.float32),                # carried h
                            pltpu.VMEM((B, H), jnp.float32)],               # carried c
        ),
        compiler_params=pltpu.CompilerParams(dimension_semantics=("arbitrary",)),
    )(emb_steps, h0, c0, enc_out, mask_bias,
      fp['w_lstm'], fp['b_lstm'], fp['w_att'], fp['b_att'], fp['w_out'], fp['b_out'])
    return logp


def tree2seq_forward(p, fp, roots, lchild, rchild, num_trees, decoder_inputs):
    # TODO(synk): feed_previous=True (greedy argmax feedback) is not fused here; the
    # reference forward / this test exercise the teacher-forcing path only.
    enc_out, mask_bias, h0, c0 = tree_encoder_forward(p, fp, roots, lchild, rchild, num_trees)
    logp = decode_forward(p, fp, enc_out, mask_bias, h0, c0, decoder_inputs)
    return [logp[t] for t in range(T_DEC)]


# ----------------------------- main -----------------------------
if __name__ == "__main__":
    key = jax.random.PRNGKey(0)
    params = init_params(key)
    fused = fuse_params(params)

    # Tree tables: batch 0 = complete binary tree (7 nodes), batch 1 = 5-node tree (+padding).
    def complete(n_used):
        lch, rch = [], []
        for i in range(N_TREES):
            l, r = 2 * i + 1, 2 * i + 2
            lch.append(l if (l < n_used and i < n_used) else -1)
            rch.append(r if (r < n_used and i < n_used) else -1)
        return lch, rch

    l0, r0 = complete(7)
    l1, r1 = complete(5)
    lchild = jnp.array([l0, l1], jnp.int32)                # (B, N_TREES)
    rchild = jnp.array([r0, r1], jnp.int32)
    num_trees = jnp.array([7, 5], jnp.int32)

    k1, k2 = jax.random.split(jax.random.PRNGKey(0))
    roots = jax.random.randint(k1, (B, N_TREES), 0, V_SRC, jnp.int32)
    decoder_inputs = jax.random.randint(k2, (B, MAX_TGT_LEN), 0, V_TGT, jnp.int32)

    fwd = jax.jit(tree2seq_forward)
    preds = fwd(params, fused, roots, lchild, rchild, num_trees, decoder_inputs)
    preds = [jax.block_until_ready(x) for x in preds]

    # sanity: log-softmax rows sum (in prob space) to ~1 and are finite
    ok = True
    for lp in preds:
        ok &= bool(jnp.all(jnp.isfinite(lp)))
        ok &= bool(jnp.allclose(jnp.sum(jnp.exp(lp), axis=-1), 1.0, atol=1e-3))
        ok &= lp.shape == (B, V_TGT)
    ok &= len(preds) == MAX_TGT_LEN - 1
    print("KERNEL_OK" if ok else "KERNEL_FAIL")
</pallas_src>

<mosaic_0001>
module attributes {stable_mosaic.version = 11 : i64} {
  func.func @_tree_encoder_kernel(%arg0: i32, %arg1: memref<2x7xi32, #tpu.memory_space<smem>>, %arg2: memref<2x7xi32, #tpu.memory_space<smem>>, %arg3: memref<1x2x128xf32, #tpu.memory_space<vmem>>, %arg4: memref<384x640xbf16, #tpu.memory_space<vmem>>, %arg5: memref<1x640xf32, #tpu.memory_space<vmem>>, %arg6: memref<7x2x128xf32, #tpu.memory_space<vmem>>, %arg7: memref<7x2x128xf32, #tpu.memory_space<vmem>>) attributes {dimension_semantics = [#tpu.dimension_semantics<arbitrary>], iteration_bounds = array<i64: 7>, scalar_prefetch = 2 : i64, scratch_operands = 0 : i64, tpu.core_type = #tpu.core_type<tc>, window_params = [{transform_indices = @transform_0, window_bounds = array<i64: 1, 2, 128>}, {pipeline_mode = #tpu.pipeline_mode<synchronous>, transform_indices = @transform_1, window_bounds = array<i64: 384, 640>}, {pipeline_mode = #tpu.pipeline_mode<synchronous>, transform_indices = @transform_2, window_bounds = array<i64: 1, 640>}, {pipeline_mode = #tpu.pipeline_mode<synchronous>, transform_indices = @transform_3, window_bounds = array<i64: 7, 2, 128>}, {pipeline_mode = #tpu.pipeline_mode<synchronous>, transform_indices = @transform_4, window_bounds = array<i64: 7, 2, 128>}]} {
    %c6_i32 = arith.constant 6 : i32
    %0 = arith.subi %c6_i32, %arg0 : i32
    %c0_i32 = arith.constant 0 : i32
    %1 = arith.cmpi eq, %arg0, %c0_i32 : i32
    %2 = arith.extui %1 : i1 to i32
    %c0_i32_0 = arith.constant 0 : i32
    %3 = arith.cmpi ne, %2, %c0_i32_0 : i32
    scf.if %3 {
      %cst_42 = arith.constant 0.000000e+00 : f32
      %130 = vector.broadcast %cst_42 : f32 to vector<7x2x128xf32>
      %c0_43 = arith.constant 0 : index
      %c0_44 = arith.constant 0 : index
      %c0_45 = arith.constant 0 : index
      %131 = vector.load %arg6[%c0_43, %c0_44, %c0_45] : memref<7x2x128xf32, #tpu.memory_space<vmem>>, vector<7x2x128xf32>
      tpu.vector_store %arg6[%c0_43, %c0_44, %c0_45], %130 {strides = array<i32>} : memref<7x2x128xf32, #tpu.memory_space<vmem>>, vector<7x2x128xf32>,
      %cst_46 = arith.constant 0.000000e+00 : f32
      %132 = vector.broadcast %cst_46 : f32 to vector<7x2x128xf32>
      %c0_47 = arith.constant 0 : index
      %c0_48 = arith.constant 0 : index
      %c0_49 = arith.constant 0 : index
      %133 = vector.load %arg7[%c0_47, %c0_48, %c0_49] : memref<7x2x128xf32, #tpu.memory_space<vmem>>, vector<7x2x128xf32>
      tpu.vector_store %arg7[%c0_47, %c0_48, %c0_49], %132 {strides = array<i32>} : memref<7x2x128xf32, #tpu.memory_space<vmem>>, vector<7x2x128xf32>,
    } else {
    }
    %c0 = arith.constant 0 : index
    %c0_1 = arith.constant 0 : index
    %c0_2 = arith.constant 0 : index
    %4 = vector.load %arg3[%c0, %c0_1, %c0_2] : memref<1x2x128xf32, #tpu.memory_space<vmem>>, vector<1x2x128xf32>
    %5 = vector.shape_cast %4 : vector<1x2x128xf32> to vector<2x128xf32>
    %c0_3 = arith.constant 0 : index
    %6 = arith.index_cast %0 : i32 to index
    %7 = memref.load %arg1[%c0_3, %6] : memref<2x7xi32, #tpu.memory_space<smem>>
    %c0_4 = arith.constant 0 : index
    %8 = arith.index_cast %0 : i32 to index
    %9 = memref.load %arg2[%c0_4, %8] : memref<2x7xi32, #tpu.memory_space<smem>>
    %c0_i32_5 = arith.constant 0 : i32
    %10 = arith.maxsi %7, %c0_i32_5 : i32
    %c0_i32_6 = arith.constant 0 : i32
    %11 = arith.maxsi %9, %c0_i32_6 : i32
    %c0_i32_7 = arith.constant 0 : i32
    %12 = arith.cmpi sge, %7, %c0_i32_7 : i32
    %13 = arith.extui %12 : i1 to i32
    %14 = arith.sitofp %13 : i32 to f32
    %c0_i32_8 = arith.constant 0 : i32
    %15 = arith.cmpi sge, %9, %c0_i32_8 : i32
    %16 = arith.extui %15 : i1 to i32
    %17 = arith.sitofp %16 : i32 to f32
    %18 = arith.index_cast %10 : i32 to index
    %c0_9 = arith.constant 0 : index
    %c0_10 = arith.constant 0 : index
    %19 = vector.load %arg6[%18, %c0_9, %c0_10] : memref<7x2x128xf32, #tpu.memory_space<vmem>>, vector<1x2x128xf32>
    %20 = vector.shape_cast %19 : vector<1x2x128xf32> to vector<2x128xf32>
    %21 = vector.extract_strided_slice %20 {offsets = [0, 0], sizes = [1, 128], strides = [1, 1]} : vector<2x128xf32> to vector<1x128xf32>
    %22 = vector.broadcast %14 : f32 to vector<1x128xf32>
    %23 = arith.mulf %21, %22 : vector<1x128xf32>
    %24 = arith.index_cast %10 : i32 to index
    %c0_11 = arith.constant 0 : index
    %c0_12 = arith.constant 0 : index
    %25 = vector.load %arg7[%24, %c0_11, %c0_12] : memref<7x2x128xf32, #tpu.memory_space<vmem>>, vector<1x2x128xf32>
    %26 = vector.shape_cast %25 : vector<1x2x128xf32> to vector<2x128xf32>
    %27 = vector.extract_strided_slice %26 {offsets = [0, 0], sizes = [1, 128], strides = [1, 1]} : vector<2x128xf32> to vector<1x128xf32>
    %28 = vector.broadcast %14 : f32 to vector<1x128xf32>
    %29 = arith.mulf %27, %28 : vector<1x128xf32>
    %30 = arith.index_cast %11 : i32 to index
    %c0_13 = arith.constant 0 : index
    %c0_14 = arith.constant 0 : index
    %31 = vector.load %arg6[%30, %c0_13, %c0_14] : memref<7x2x128xf32, #tpu.memory_space<vmem>>, vector<1x2x128xf32>
    %32 = vector.shape_cast %31 : vector<1x2x128xf32> to vector<2x128xf32>
    %33 = vector.extract_strided_slice %32 {offsets = [0, 0], sizes = [1, 128], strides = [1, 1]} : vector<2x128xf32> to vector<1x128xf32>
    %34 = vector.broadcast %17 : f32 to vector<1x128xf32>
    %35 = arith.mulf %33, %34 : vector<1x128xf32>
    %36 = arith.index_cast %11 : i32 to index
    %c0_15 = arith.constant 0 : index
    %c0_16 = arith.constant 0 : index
    %37 = vector.load %arg7[%36, %c0_15, %c0_16] : memref<7x2x128xf32, #tpu.memory_space<vmem>>, vector<1x2x128xf32>
    %38 = vector.shape_cast %37 : vector<1x2x128xf32> to vector<2x128xf32>
    %39 = vector.extract_strided_slice %38 {offsets = [0, 0], sizes = [1, 128], strides = [1, 1]} : vector<2x128xf32> to vector<1x128xf32>
    %40 = vector.broadcast %17 : f32 to vector<1x128xf32>
    %41 = arith.mulf %39, %40 : vector<1x128xf32>
    %c1 = arith.constant 1 : index
    %42 = arith.index_cast %0 : i32 to index
    %43 = memref.load %arg1[%c1, %42] : memref<2x7xi32, #tpu.memory_space<smem>>
    %c1_17 = arith.constant 1 : index
    %44 = arith.index_cast %0 : i32 to index
    %45 = memref.load %arg2[%c1_17, %44] : memref<2x7xi32, #tpu.memory_space<smem>>
    %c0_i32_18 = arith.constant 0 : i32
    %46 = arith.maxsi %43, %c0_i32_18 : i32
    %c0_i32_19 = arith.constant 0 : i32
    %47 = arith.maxsi %45, %c0_i32_19 : i32
    %c0_i32_20 = arith.constant 0 : i32
    %48 = arith.cmpi sge, %43, %c0_i32_20 : i32
    %49 = arith.extui %48 : i1 to i32
    %50 = arith.sitofp %49 : i32 to f32
    %c0_i32_21 = arith.constant 0 : i32
    %51 = arith.cmpi sge, %45, %c0_i32_21 : i32
    %52 = arith.extui %51 : i1 to i32
    %53 = arith.sitofp %52 : i32 to f32
    %54 = arith.index_cast %46 : i32 to index
    %c0_22 = arith.constant 0 : index
    %c0_23 = arith.constant 0 : index
    %55 = vector.load %arg6[%54, %c0_22, %c0_23] : memref<7x2x128xf32, #tpu.memory_space<vmem>>, vector<1x2x128xf32>
    %56 = vector.shape_cast %55 : vector<1x2x128xf32> to vector<2x128xf32>
    %57 = vector.extract_strided_slice %56 {offsets = [1, 0], sizes = [1, 128], strides = [1, 1]} : vector<2x128xf32> to vector<1x128xf32>
    %58 = vector.broadcast %50 : f32 to vector<1x128xf32>
    %59 = arith.mulf %57, %58 : vector<1x128xf32>
    %60 = arith.index_cast %46 : i32 to index
    %c0_24 = arith.constant 0 : index
    %c0_25 = arith.constant 0 : index
    %61 = vector.load %arg7[%60, %c0_24, %c0_25] : memref<7x2x128xf32, #tpu.memory_space<vmem>>, vector<1x2x128xf32>
    %62 = vector.shape_cast %61 : vector<1x2x128xf32> to vector<2x128xf32>
    %63 = vector.extract_strided_slice %62 {offsets = [1, 0], sizes = [1, 128], strides = [1, 1]} : vector<2x128xf32> to vector<1x128xf32>
    %64 = vector.broadcast %50 : f32 to vector<1x128xf32>
    %65 = arith.mulf %63, %64 : vector<1x128xf32>
    %66 = arith.index_cast %47 : i32 to index
    %c0_26 = arith.constant 0 : index
    %c0_27 = arith.constant 0 : index
    %67 = vector.load %arg6[%66, %c0_26, %c0_27] : memref<7x2x128xf32, #tpu.memory_space<vmem>>, vector<1x2x128xf32>
    %68 = vector.shape_cast %67 : vector<1x2x128xf32> to vector<2x128xf32>
    %69 = vector.extract_strided_slice %68 {offsets = [1, 0], sizes = [1, 128], strides = [1, 1]} : vector<2x128xf32> to vector<1x128xf32>
    %70 = vector.broadcast %53 : f32 to vector<1x128xf32>
    %71 = arith.mulf %69, %70 : vector<1x128xf32>
    %72 = arith.index_cast %47 : i32 to index
    %c0_28 = arith.constant 0 : index
    %c0_29 = arith.constant 0 : index
    %73 = vector.load %arg7[%72, %c0_28, %c0_29] : memref<7x2x128xf32, #tpu.memory_space<vmem>>, vector<1x2x128xf32>
    %74 = vector.shape_cast %73 : vector<1x2x128xf32> to vector<2x128xf32>
    %75 = vector.extract_strided_slice %74 {offsets = [1, 0], sizes = [1, 128], strides = [1, 1]} : vector<2x128xf32> to vector<1x128xf32>
    %76 = vector.broadcast %53 : f32 to vector<1x128xf32>
    %77 = arith.mulf %75, %76 : vector<1x128xf32>
    %78 = tpu.concatenate %23, %59 in 0 : vector<1x128xf32>, vector<1x128xf32> -> vector<2x128xf32>
    %79 = tpu.concatenate %35, %71 in 0 : vector<1x128xf32>, vector<1x128xf32> -> vector<2x128xf32>
    %80 = tpu.concatenate %29, %65 in 0 : vector<1x128xf32>, vector<1x128xf32> -> vector<2x128xf32>
    %81 = tpu.concatenate %41, %77 in 0 : vector<1x128xf32>, vector<1x128xf32> -> vector<2x128xf32>
    %82 = tpu.concatenate %5, %78, %79 in 1 : vector<2x128xf32>, vector<2x128xf32>, vector<2x128xf32> -> vector<2x384xf32>
    %83 = arith.truncf %82 : vector<2x384xf32> to vector<2x384xbf16>
    %c0_30 = arith.constant 0 : index
    %c0_31 = arith.constant 0 : index
    %84 = vector.load %arg4[%c0_30, %c0_31] : memref<384x640xbf16, #tpu.memory_space<vmem>>, vector<384x640xbf16>
    %cst = arith.constant dense<0.000000e+00> : vector<2x640xf32>
    %85 = tpu.matmul %83, %84, %cst {dimension_numbers = #tpu.dot_dimension_numbers<[1], [0], [0], [1], [0, 0, 1, 1], [], []>} : vector<2x384xbf16>, vector<384x640xbf16>, vector<2x640xf32> -> vector<2x640xf32>
    %c0_32 = arith.constant 0 : index
    %c0_33 = arith.constant 0 : index
    %86 = vector.load %arg5[%c0_32, %c0_33] : memref<1x640xf32, #tpu.memory_space<vmem>>, vector<1x640xf32>
    %87 = vector.broadcast %86 : vector<1x640xf32> to vector<2x640xf32>
    %88 = arith.addf %85, %87 : vector<2x640xf32>
    %89 = vector.extract_strided_slice %88 {offsets = [0, 0], sizes = [2, 128], strides = [1, 1]} : vector<2x640xf32> to vector<2x128xf32>
    %90 = arith.negf %89 : vector<2x128xf32>
    %91 = math.exp %90 : vector<2x128xf32>
    %cst_34 = arith.constant 1.000000e+00 : f32
    %92 = vector.broadcast %cst_34 : f32 to vector<2x128xf32>
    %93 = arith.addf %92, %91 : vector<2x128xf32>
    %94 = arith.divf %92, %93 : vector<2x128xf32>
    %95 = vector.extract_strided_slice %88 {offsets = [0, 128], sizes = [2, 128], strides = [1, 1]} : vector<2x640xf32> to vector<2x128xf32>
    %96 = arith.negf %95 : vector<2x128xf32>
    %97 = math.exp %96 : vector<2x128xf32>
    %cst_35 = arith.constant 1.000000e+00 : f32
    %98 = vector.broadcast %cst_35 : f32 to vector<2x128xf32>
    %99 = arith.addf %98, %97 : vector<2x128xf32>
    %100 = arith.divf %98, %99 : vector<2x128xf32>
    %101 = vector.extract_strided_slice %88 {offsets = [0, 256], sizes = [2, 128], strides = [1, 1]} : vector<2x640xf32> to vector<2x128xf32>
    %102 = arith.negf %101 : vector<2x128xf32>
    %103 = math.exp %102 : vector<2x128xf32>
    %cst_36 = arith.constant 1.000000e+00 : f32
    %104 = vector.broadcast %cst_36 : f32 to vector<2x128xf32>
    %105 = arith.addf %104, %103 : vector<2x128xf32>
    %106 = arith.divf %104, %105 : vector<2x128xf32>
    %107 = vector.extract_strided_slice %88 {offsets = [0, 384], sizes = [2, 128], strides = [1, 1]} : vector<2x640xf32> to vector<2x128xf32>
    %108 = arith.negf %107 : vector<2x128xf32>
    %109 = math.exp %108 : vector<2x128xf32>
    %cst_37 = arith.constant 1.000000e+00 : f32
    %110 = vector.broadcast %cst_37 : f32 to vector<2x128xf32>
    %111 = arith.addf %110, %109 : vector<2x128xf32>
    %112 = arith.divf %110, %111 : vector<2x128xf32>
    %113 = vector.extract_strided_slice %88 {offsets = [0, 512], sizes = [2, 128], strides = [1, 1]} : vector<2x640xf32> to vector<2x128xf32>
    %114 = math.tanh %113 : vector<2x128xf32>
    %115 = arith.mulf %94, %114 : vector<2x128xf32>
    %116 = arith.mulf %100, %80 : vector<2x128xf32>
    %117 = arith.addf %115, %116 : vector<2x128xf32>
    %118 = arith.mulf %106, %81 : vector<2x128xf32>
    %119 = arith.addf %117, %118 : vector<2x128xf32>
    %120 = math.tanh %119 : vector<2x128xf32>
    %121 = arith.mulf %112, %120 : vector<2x128xf32>
    %122 = arith.index_cast %0 : i32 to index
    %c0_38 = arith.constant 0 : index
    %c0_39 = arith.constant 0 : index
    %123 = vector.load %arg6[%122, %c0_38, %c0_39] : memref<7x2x128xf32, #tpu.memory_space<vmem>>, vector<1x2x128xf32>
    %124 = vector.shape_cast %123 : vector<1x2x128xf32> to vector<2x128xf32>
    %125 = vector.shape_cast %121 : vector<2x128xf32> to vector<1x2x128xf32>
    tpu.vector_store %arg6[%122, %c0_38, %c0_39], %125 {strides = array<i32>} : memref<7x2x128xf32, #tpu.memory_space<vmem>>, vector<1x2x128xf32>,
    %126 = arith.index_cast %0 : i32 to index
    %c0_40 = arith.constant 0 : index
    %c0_41 = arith.constant 0 : index
    %127 = vector.load %arg7[%126, %c0_40, %c0_41] : memref<7x2x128xf32, #tpu.memory_space<vmem>>, vector<1x2x128xf32>
    %128 = vector.shape_cast %127 : vector<1x2x128xf32> to vector<2x128xf32>
    %129 = vector.shape_cast %119 : vector<2x128xf32> to vector<1x2x128xf32>
    tpu.vector_store %arg7[%126, %c0_40, %c0_41], %129 {strides = array<i32>} : memref<7x2x128xf32, #tpu.memory_space<vmem>>, vector<1x2x128xf32>,
    return
  }
  func.func @transform_0(%arg0: i32, %arg1: memref<2x7xi32, #tpu.memory_space<smem>>, %arg2: memref<2x7xi32, #tpu.memory_space<smem>>) -> (i32, i32, i32) {
    %c6_i32 = arith.constant 6 : i32
    %0 = arith.subi %c6_i32, %arg0 : i32
    %c0_i32 = arith.constant 0 : i32
    %c0_i32_0 = arith.constant 0 : i32
    %c0_i32_1 = arith.constant 0 : i32
    return %0, %c0_i32, %c0_i32_0 : i32, i32, i32
  }
  func.func @transform_1(%arg0: i32, %arg1: memref<2x7xi32, #tpu.memory_space<smem>>, %arg2: memref<2x7xi32, #tpu.memory_space<smem>>) -> (i32, i32) {
    %c0_i32 = arith.constant 0 : i32
    %c0_i32_0 = arith.constant 0 : i32
    %c0_i32_1 = arith.constant 0 : i32
    return %c0_i32, %c0_i32_0 : i32, i32
  }
  func.func @transform_2(%arg0: i32, %arg1: memref<2x7xi32, #tpu.memory_space<smem>>, %arg2: memref<2x7xi32, #tpu.memory_space<smem>>) -> (i32, i32) {
    %c0_i32 = arith.constant 0 : i32
    %c0_i32_0 = arith.constant 0 : i32
    %c0_i32_1 = arith.constant 0 : i32
    return %c0_i32, %c0_i32_0 : i32, i32
  }
  func.func @transform_3(%arg0: i32, %arg1: memref<2x7xi32, #tpu.memory_space<smem>>, %arg2: memref<2x7xi32, #tpu.memory_space<smem>>) -> (i32, i32, i32) {
    %c0_i32 = arith.constant 0 : i32
    %c0_i32_0 = arith.constant 0 : i32
    %c0_i32_1 = arith.constant 0 : i32
    %c0_i32_2 = arith.constant 0 : i32
    return %c0_i32, %c0_i32_0, %c0_i32_1 : i32, i32, i32
  }
  func.func @transform_4(%arg0: i32, %arg1: memref<2x7xi32, #tpu.memory_space<smem>>, %arg2: memref<2x7xi32, #tpu.memory_space<smem>>) -> (i32, i32, i32) {
    %c0_i32 = arith.constant 0 : i32
    %c0_i32_0 = arith.constant 0 : i32
    %c0_i32_1 = arith.constant 0 : i32
    %c0_i32_2 = arith.constant 0 : i32
    return %c0_i32, %c0_i32_0, %c0_i32_1 : i32, i32, i32
  }
}

module attributes {stable_mosaic.version = 11 : i64} {
  func.func @_decoder_step_kernel(%arg0: i32, %arg1: memref<1x2x128xf32, #tpu.memory_space<vmem>>, %arg2: memref<2x128xf32, #tpu.memory_space<vmem>>, %arg3: memref<2x128xf32, #tpu.memory_space<vmem>>, %arg4: memref<2x7x128xf32, #tpu.memory_space<vmem>>, %arg5: memref<2x7xf32, #tpu.memory_space<vmem>>, %arg6: memref<256x512xbf16, #tpu.memory_space<vmem>>, %arg7: memref<1x512xf32, #tpu.memory_space<vmem>>, %arg8: memref<256x128xbf16, #tpu.memory_space<vmem>>, %arg9: memref<1x128xf32, #tpu.memory_space<vmem>>, %arg10: memref<128x128xbf16, #tpu.memory_space<vmem>>, %arg11: memref<1x128xf32, #tpu.memory_space<vmem>>, %arg12: memref<1x2x128xf32, #tpu.memory_space<vmem>>, %arg13: memref<2x128xf32, #tpu.memory_space<vmem>>, %arg14: memref<2x128xf32, #tpu.memory_space<vmem>>) attributes {dimension_semantics = [#tpu.dimension_semantics<arbitrary>], iteration_bounds = array<i64: 5>, scalar_prefetch = 0 : i64, scratch_operands = 2 : i64, tpu.core_type = #tpu.core_type<tc>, window_params = [{transform_indices = @transform_0, window_bounds = array<i64: 1, 2, 128>}, {pipeline_mode = #tpu.pipeline_mode<synchronous>, transform_indices = @transform_1, window_bounds = array<i64: 2, 128>}, {pipeline_mode = #tpu.pipeline_mode<synchronous>, transform_indices = @transform_2, window_bounds = array<i64: 2, 128>}, {pipeline_mode = #tpu.pipeline_mode<synchronous>, transform_indices = @transform_3, window_bounds = array<i64: 2, 7, 128>}, {pipeline_mode = #tpu.pipeline_mode<synchronous>, transform_indices = @transform_4, window_bounds = array<i64: 2, 7>}, {pipeline_mode = #tpu.pipeline_mode<synchronous>, transform_indices = @transform_5, window_bounds = array<i64: 256, 512>}, {pipeline_mode = #tpu.pipeline_mode<synchronous>, transform_indices = @transform_6, window_bounds = array<i64: 1, 512>}, {pipeline_mode = #tpu.pipeline_mode<synchronous>, transform_indices = @transform_7, window_bounds = array<i64: 256, 128>}, {pipeline_mode = #tpu.pipeline_mode<synchronous>, transform_indices = @transform_8, window_bounds = array<i64: 1, 128>}, {pipeline_mode = #tpu.pipeline_mode<synchronous>, transform_indices = @transform_9, window_bounds = array<i64: 128, 128>}, {pipeline_mode = #tpu.pipeline_mode<synchronous>, transform_indices = @transform_10, window_bounds = array<i64: 1, 128>}, {transform_indices = @transform_11, window_bounds = array<i64: 1, 2, 128>}]} {
    %c0_i32 = arith.constant 0 : i32
    %0 = arith.cmpi eq, %arg0, %c0_i32 : i32
    %1 = arith.extui %0 : i1 to i32
    %c0_i32_0 = arith.constant 0 : i32
    %2 = arith.cmpi ne, %1, %c0_i32_0 : i32
    scf.if %2 {
      %c0_42 = arith.constant 0 : index
      %c0_43 = arith.constant 0 : index
      %89 = vector.load %arg2[%c0_42, %c0_43] : memref<2x128xf32, #tpu.memory_space<vmem>>, vector<2x128xf32>
      %c0_44 = arith.constant 0 : index
      %c0_45 = arith.constant 0 : index
      %90 = vector.load %arg13[%c0_44, %c0_45] : memref<2x128xf32, #tpu.memory_space<vmem>>, vector<2x128xf32>
      tpu.vector_store %arg13[%c0_44, %c0_45], %89 {strides = array<i32>} : memref<2x128xf32, #tpu.memory_space<vmem>>, vector<2x128xf32>,
      %c0_46 = arith.constant 0 : index
      %c0_47 = arith.constant 0 : index
      %91 = vector.load %arg3[%c0_46, %c0_47] : memref<2x128xf32, #tpu.memory_space<vmem>>, vector<2x128xf32>
      %c0_48 = arith.constant 0 : index
      %c0_49 = arith.constant 0 : index
      %92 = vector.load %arg14[%c0_48, %c0_49] : memref<2x128xf32, #tpu.memory_space<vmem>>, vector<2x128xf32>
      tpu.vector_store %arg14[%c0_48, %c0_49], %91 {strides = array<i32>} : memref<2x128xf32, #tpu.memory_space<vmem>>, vector<2x128xf32>,
    } else {
    }
    %c0 = arith.constant 0 : index
    %c0_1 = arith.constant 0 : index
    %c0_2 = arith.constant 0 : index
    %3 = vector.load %arg1[%c0, %c0_1, %c0_2] : memref<1x2x128xf32, #tpu.memory_space<vmem>>, vector<1x2x128xf32>
    %4 = vector.shape_cast %3 : vector<1x2x128xf32> to vector<2x128xf32>
    %c0_3 = arith.constant 0 : index
    %c0_4 = arith.constant 0 : index
    %5 = vector.load %arg13[%c0_3, %c0_4] : memref<2x128xf32, #tpu.memory_space<vmem>>, vector<2x128xf32>
    %c0_5 = arith.constant 0 : index
    %c0_6 = arith.constant 0 : index
    %6 = vector.load %arg14[%c0_5, %c0_6] : memref<2x128xf32, #tpu.memory_space<vmem>>, vector<2x128xf32>
    %7 = tpu.concatenate %4, %5 in 1 : vector<2x128xf32>, vector<2x128xf32> -> vector<2x256xf32>
    %8 = arith.truncf %7 : vector<2x256xf32> to vector<2x256xbf16>
    %c0_7 = arith.constant 0 : index
    %c0_8 = arith.constant 0 : index
    %9 = vector.load %arg6[%c0_7, %c0_8] : memref<256x512xbf16, #tpu.memory_space<vmem>>, vector<256x512xbf16>
    %cst = arith.constant dense<0.000000e+00> : vector<2x512xf32>
    %10 = tpu.matmul %8, %9, %cst {dimension_numbers = #tpu.dot_dimension_numbers<[1], [0], [0], [1], [0, 0, 1, 1], [], []>} : vector<2x256xbf16>, vector<256x512xbf16>, vector<2x512xf32> -> vector<2x512xf32>
    %c0_9 = arith.constant 0 : index
    %c0_10 = arith.constant 0 : index
    %11 = vector.load %arg7[%c0_9, %c0_10] : memref<1x512xf32, #tpu.memory_space<vmem>>, vector<1x512xf32>
    %12 = vector.broadcast %11 : vector<1x512xf32> to vector<2x512xf32>
    %13 = arith.addf %10, %12 : vector<2x512xf32>
    %14 = vector.extract_strided_slice %13 {offsets = [0, 0], sizes = [2, 128], strides = [1, 1]} : vector<2x512xf32> to vector<2x128xf32>
    %15 = arith.negf %14 : vector<2x128xf32>
    %16 = math.exp %15 : vector<2x128xf32>
    %cst_11 = arith.constant 1.000000e+00 : f32
    %17 = vector.broadcast %cst_11 : f32 to vector<2x128xf32>
    %18 = arith.addf %17, %16 : vector<2x128xf32>
    %19 = arith.divf %17, %18 : vector<2x128xf32>
    %20 = vector.extract_strided_slice %13 {offsets = [0, 128], sizes = [2, 128], strides = [1, 1]} : vector<2x512xf32> to vector<2x128xf32>
    %21 = arith.negf %20 : vector<2x128xf32>
    %22 = math.exp %21 : vector<2x128xf32>
    %cst_12 = arith.constant 1.000000e+00 : f32
    %23 = vector.broadcast %cst_12 : f32 to vector<2x128xf32>
    %24 = arith.addf %23, %22 : vector<2x128xf32>
    %25 = arith.divf %23, %24 : vector<2x128xf32>
    %26 = vector.extract_strided_slice %13 {offsets = [0, 256], sizes = [2, 128], strides = [1, 1]} : vector<2x512xf32> to vector<2x128xf32>
    %27 = math.tanh %26 : vector<2x128xf32>
    %28 = vector.extract_strided_slice %13 {offsets = [0, 384], sizes = [2, 128], strides = [1, 1]} : vector<2x512xf32> to vector<2x128xf32>
    %29 = arith.negf %28 : vector<2x128xf32>
    %30 = math.exp %29 : vector<2x128xf32>
    %cst_13 = arith.constant 1.000000e+00 : f32
    %31 = vector.broadcast %cst_13 : f32 to vector<2x128xf32>
    %32 = arith.addf %31, %30 : vector<2x128xf32>
    %33 = arith.divf %31, %32 : vector<2x128xf32>
    %34 = arith.mulf %25, %6 : vector<2x128xf32>
    %35 = arith.mulf %19, %27 : vector<2x128xf32>
    %36 = arith.addf %34, %35 : vector<2x128xf32>
    %37 = math.tanh %36 : vector<2x128xf32>
    %38 = arith.mulf %33, %37 : vector<2x128xf32>
    %c0_14 = arith.constant 0 : index
    %c0_15 = arith.constant 0 : index
    %39 = vector.load %arg13[%c0_14, %c0_15] : memref<2x128xf32, #tpu.memory_space<vmem>>, vector<2x128xf32>
    tpu.vector_store %arg13[%c0_14, %c0_15], %38 {strides = array<i32>} : memref<2x128xf32, #tpu.memory_space<vmem>>, vector<2x128xf32>,
    %c0_16 = arith.constant 0 : index
    %c0_17 = arith.constant 0 : index
    %40 = vector.load %arg14[%c0_16, %c0_17] : memref<2x128xf32, #tpu.memory_space<vmem>>, vector<2x128xf32>
    tpu.vector_store %arg14[%c0_16, %c0_17], %36 {strides = array<i32>} : memref<2x128xf32, #tpu.memory_space<vmem>>, vector<2x128xf32>,
    %c0_18 = arith.constant 0 : index
    %c0_19 = arith.constant 0 : index
    %c0_20 = arith.constant 0 : index
    %41 = vector.load %arg4[%c0_18, %c0_19, %c0_20] : memref<2x7x128xf32, #tpu.memory_space<vmem>>, vector<2x7x128xf32>
    %42 = vector.shape_cast %38 : vector<2x128xf32> to vector<2x1x128xf32>
    %43 = vector.broadcast %42 : vector<2x1x128xf32> to vector<2x7x128xf32>
    %44 = arith.mulf %41, %43 : vector<2x7x128xf32>
    %cst_21 = arith.constant dense<0.000000e+00> : vector<2x7xf32>
    %45 = vector.multi_reduction <add>, %44, %cst_21 [2] : vector<2x7x128xf32> to vector<2x7xf32>
    %c0_22 = arith.constant 0 : index
    %c0_23 = arith.constant 0 : index
    %46 = vector.load %arg5[%c0_22, %c0_23] : memref<2x7xf32, #tpu.memory_space<vmem>>, vector<2x7xf32>
    %47 = arith.addf %45, %46 : vector<2x7xf32>
    %cst_24 = arith.constant dense<0xFF800000> : vector<2xf32>
    %48 = vector.multi_reduction <maximumf>, %47, %cst_24 [1] : vector<2x7xf32> to vector<2xf32>
    %49 = vector.shape_cast %48 : vector<2xf32> to vector<2x1xf32>
    %50 = vector.broadcast %49 : vector<2x1xf32> to vector<2x7xf32>
    %51 = arith.subf %47, %50 : vector<2x7xf32>
    %52 = math.exp %51 : vector<2x7xf32>
    %cst_25 = arith.constant dense<0.000000e+00> : vector<2xf32>
    %53 = vector.multi_reduction <add>, %52, %cst_25 [1] : vector<2x7xf32> to vector<2xf32>
    %54 = vector.shape_cast %53 : vector<2xf32> to vector<2x1xf32>
    %55 = vector.broadcast %54 : vector<2x1xf32> to vector<2x7xf32>
    %56 = arith.divf %52, %55 : vector<2x7xf32>
    %57 = vector.shape_cast %56 : vector<2x7xf32> to vector<2x7x1xf32>
    %58 = vector.broadcast %57 : vector<2x7x1xf32> to vector<2x7x128xf32>
    %59 = arith.mulf %41, %58 : vector<2x7x128xf32>
    %cst_26 = arith.constant dense<0.000000e+00> : vector<2x128xf32>
    %60 = vector.multi_reduction <add>, %59, %cst_26 [1] : vector<2x7x128xf32> to vector<2x128xf32>
    %61 = tpu.concatenate %60, %38 in 1 : vector<2x128xf32>, vector<2x128xf32> -> vector<2x256xf32>
    %62 = arith.truncf %61 : vector<2x256xf32> to vector<2x256xbf16>
    %c0_27 = arith.constant 0 : index
    %c0_28 = arith.constant 0 : index
    %63 = vector.load %arg8[%c0_27, %c0_28] : memref<256x128xbf16, #tpu.memory_space<vmem>>, vector<256x128xbf16>
    %cst_29 = arith.constant dense<0.000000e+00> : vector<2x128xf32>
    %64 = tpu.matmul %62, %63, %cst_29 {dimension_numbers = #tpu.dot_dimension_numbers<[1], [0], [0], [1], [0, 0, 1, 1], [], []>} : vector<2x256xbf16>, vector<256x128xbf16>, vector<2x128xf32> -> vector<2x128xf32>
    %c0_30 = arith.constant 0 : index
    %c0_31 = arith.constant 0 : index
    %65 = vector.load %arg9[%c0_30, %c0_31] : memref<1x128xf32, #tpu.memory_space<vmem>>, vector<1x128xf32>
    %66 = vector.broadcast %65 : vector<1x128xf32> to vector<2x128xf32>
    %67 = arith.addf %64, %66 : vector<2x128xf32>
    %68 = math.tanh %67 : vector<2x128xf32>
    %69 = arith.truncf %68 : vector<2x128xf32> to vector<2x128xbf16>
    %c0_32 = arith.constant 0 : index
    %c0_33 = arith.constant 0 : index
    %70 = vector.load %arg10[%c0_32, %c0_33] : memref<128x128xbf16, #tpu.memory_space<vmem>>, vector<128x128xbf16>
    %cst_34 = arith.constant dense<0.000000e+00> : vector<2x128xf32>
    %71 = tpu.matmul %69, %70, %cst_34 {dimension_numbers = #tpu.dot_dimension_numbers<[1], [0], [0], [1], [0, 0, 1, 1], [], []>} : vector<2x128xbf16>, vector<128x128xbf16>, vector<2x128xf32> -> vector<2x128xf32>
    %c0_35 = arith.constant 0 : index
    %c0_36 = arith.constant 0 : index
    %72 = vector.load %arg11[%c0_35, %c0_36] : memref<1x128xf32, #tpu.memory_space<vmem>>, vector<1x128xf32>
    %73 = vector.broadcast %72 : vector<1x128xf32> to vector<2x128xf32>
    %74 = arith.addf %71, %73 : vector<2x128xf32>
    %cst_37 = arith.constant dense<0xFF800000> : vector<2xf32>
    %75 = vector.multi_reduction <maximumf>, %74, %cst_37 [1] : vector<2x128xf32> to vector<2xf32>
    %76 = vector.shape_cast %75 : vector<2xf32> to vector<2x1xf32>
    %77 = vector.broadcast %76 : vector<2x1xf32> to vector<2x128xf32>
    %78 = arith.subf %74, %77 : vector<2x128xf32>
    %79 = math.exp %78 : vector<2x128xf32>
    %cst_38 = arith.constant dense<0.000000e+00> : vector<2xf32>
    %80 = vector.multi_reduction <add>, %79, %cst_38 [1] : vector<2x128xf32> to vector<2xf32>
    %81 = vector.shape_cast %80 : vector<2xf32> to vector<2x1xf32>
    %82 = math.log %81 : vector<2x1xf32>
    %83 = arith.addf %76, %82 : vector<2x1xf32>
    %84 = vector.broadcast %83 : vector<2x1xf32> to vector<2x128xf32>
    %85 = arith.subf %74, %84 : vector<2x128xf32>
    %c0_39 = arith.constant 0 : index
    %c0_40 = arith.constant 0 : index
    %c0_41 = arith.constant 0 : index
    %86 = vector.load %arg12[%c0_39, %c0_40, %c0_41] : memref<1x2x128xf32, #tpu.memory_space<vmem>>, vector<1x2x128xf32>
    %87 = vector.shape_cast %86 : vector<1x2x128xf32> to vector<2x128xf32>
    %88 = vector.shape_cast %85 : vector<2x128xf32> to vector<1x2x128xf32>
    tpu.vector_store %arg12[%c0_39, %c0_40, %c0_41], %88 {strides = array<i32>} : memref<1x2x128xf32, #tpu.memory_space<vmem>>, vector<1x2x128xf32>,
    return
  }
  func.func @transform_0(%arg0: i32) -> (i32, i32, i32) {
    %c0_i32 = arith.constant 0 : i32
    %c0_i32_0 = arith.constant 0 : i32
    %c0_i32_1 = arith.constant 0 : i32
    return %arg0, %c0_i32, %c0_i32_0 : i32, i32, i32
  }
  func.func @transform_1(%arg0: i32) -> (i32, i32) {
    %c0_i32 = arith.constant 0 : i32
    %c0_i32_0 = arith.constant 0 : i32
    %c0_i32_1 = arith.constant 0 : i32
    return %c0_i32, %c0_i32_0 : i32, i32
  }
  func.func @transform_2(%arg0: i32) -> (i32, i32) {
    %c0_i32 = arith.constant 0 : i32
    %c0_i32_0 = arith.constant 0 : i32
    %c0_i32_1 = arith.constant 0 : i32
    return %c0_i32, %c0_i32_0 : i32, i32
  }
  func.func @transform_3(%arg0: i32) -> (i32, i32, i32) {
    %c0_i32 = arith.constant 0 : i32
    %c0_i32_0 = arith.constant 0 : i32
    %c0_i32_1 = arith.constant 0 : i32
    %c0_i32_2 = arith.constant 0 : i32
    return %c0_i32, %c0_i32_0, %c0_i32_1 : i32, i32, i32
  }
  func.func @transform_4(%arg0: i32) -> (i32, i32) {
    %c0_i32 = arith.constant 0 : i32
    %c0_i32_0 = arith.constant 0 : i32
    %c0_i32_1 = arith.constant 0 : i32
    return %c0_i32, %c0_i32_0 : i32, i32
  }
  func.func @transform_5(%arg0: i32) -> (i32, i32) {
    %c0_i32 = arith.constant 0 : i32
    %c0_i32_0 = arith.constant 0 : i32
    %c0_i32_1 = arith.constant 0 : i32
    return %c0_i32, %c0_i32_0 : i32, i32
  }
  func.func @transform_6(%arg0: i32) -> (i32, i32) {
    %c0_i32 = arith.constant 0 : i32
    %c0_i32_0 = arith.constant 0 : i32
    %c0_i32_1 = arith.constant 0 : i32
    return %c0_i32, %c0_i32_0 : i32, i32
  }
  func.func @transform_7(%arg0: i32) -> (i32, i32) {
    %c0_i32 = arith.constant 0 : i32
    %c0_i32_0 = arith.constant 0 : i32
    %c0_i32_1 = arith.constant 0 : i32
    return %c0_i32, %c0_i32_0 : i32, i32
  }
  func.func @transform_8(%arg0: i32) -> (i32, i32) {
    %c0_i32 = arith.constant 0 : i32
    %c0_i32_0 = arith.constant 0 : i32
    %c0_i32_1 = arith.constant 0 : i32
    return %c0_i32, %c0_i32_0 : i32, i32
  }
  func.func @transform_9(%arg0: i32) -> (i32, i32) {
    %c0_i32 = arith.constant 0 : i32
    %c0_i32_0 = arith.constant 0 : i32
    %c0_i32_1 = arith.constant 0 : i32
    return %c0_i32, %c0_i32_0 : i32, i32
  }
  func.func @transform_10(%arg0: i32) -> (i32, i32) {
    %c0_i32 = arith.constant 0 : i32
    %c0_i32_0 = arith.constant 0 : i32
    %c0_i32_1 = arith.constant 0 : i32
    return %c0_i32, %c0_i32_0 : i32, i32
  }
  func.func @transform_11(%arg0: i32) -> (i32, i32, i32) {
    %c0_i32 = arith.constant 0 : i32
    %c0_i32_0 = arith.constant 0 : i32
    %c0_i32_1 = arith.constant 0 : i32
    return %arg0, %c0_i32, %c0_i32_0 : i32, i32, i32
  }
}

</mosaic_0001>

<llo_original>
// kernel: tree2seq_forward.3
$region0: #{tree2seq_forward.3}
  #allocation0 [shape = 'u32[]', space=smem, size = 0x4, offset = 0x4, fixed_abs, tag = 'smem constant byte address 0x4 - core index']
  #allocation1 [shape = 'u32[144,128]{1,0:T(1,128)}', space=vmem, size = 0x12000, scoped, tag = 'internal scratch']
  #allocation2 [shape = 'f32[2,128]{1,0:T(2,128)}', space=vmem, size = 0x400, scoped, tag = 'scratch operand']
  #allocation3 [shape = 'f32[2,128]{1,0:T(2,128)}', space=vmem, size = 0x400, scoped, tag = 'scratch operand']
  %s0 = inlined_call_operand.vmem [shape: f32[5,2,128], index: 0, kind: input, shape index: {}]
  %s1 = inlined_call_operand.vmem [shape: f32[2,128], index: 1, kind: input, shape index: {}]
  %s2 = inlined_call_operand.vmem [shape: f32[2,128], index: 2, kind: input, shape index: {}]
  %s3 = inlined_call_operand.vmem [shape: f32[2,7,128], index: 3, kind: input, shape index: {}]
  %s4 = inlined_call_operand.vmem [shape: f32[2,7], index: 4, kind: input, shape index: {}]
  %s5 = inlined_call_operand.vmem [shape: bf16[256,512], index: 5, kind: input, shape index: {}]
  %s6 = inlined_call_operand.vmem [shape: f32[1,512], index: 6, kind: input, shape index: {}]
  %s7 = inlined_call_operand.vmem [shape: bf16[256,128], index: 7, kind: input, shape index: {}]
  %s8 = inlined_call_operand.vmem [shape: f32[1,128], index: 8, kind: input, shape index: {}]
  %s9 = inlined_call_operand.vmem [shape: bf16[128,128], index: 9, kind: input, shape index: {}]
  %s10 = inlined_call_operand.vmem [shape: f32[1,128], index: 10, kind: input, shape index: {}]
  %s11 = inlined_call_operand.vmem [shape: f32[5,2,128], index: 11, kind: output, shape index: {}]
  %s12 = sld [smem:[#allocation0]]
  $region81: #{tree2seq_forward.3} parent=0
    _
  %s14 = ssub.s32 1, %s12
  %s15 = scalar_select 0, %s14, %s12
  loop: start=0, step=1, limit=7
  $region2: #{tree2seq_forward.3} parent=0 // loop_pre_header
    _
  $region3: #{tree2seq_forward.3} parent=0 // loop_header
    %s17 = sphi 0, %s21
    %p18 = scmp.ge.s32.totalorder %s17, 7
    %s27 = sphi 0, %s29
    %s30 = sphi 0, %s27
    %s31 = sphi 0, %s30
    %s47 = sphi 0, %s31
    %s51 = sphi 0, %s51
    %s53 = sphi 0, %s51
    %s54 = sphi 0, %s53
    %s68 = sphi 0, %s54
    %s72 = sphi 0, %s72
    %s74 = sphi 0, %s72
    %s75 = sphi 0, %s74
    %s89 = sphi 0, %s75
    %s93 = sphi 0, %s93
    %s95 = sphi 0, %s93
    %s96 = sphi 0, %s95
    %s110 = sphi 0, %s96
    %s114 = sphi 0, %s114
    %s116 = sphi 0, %s114
    %s117 = sphi 0, %s116
    %s131 = sphi 0, %s117
    %s135 = sphi 0, %s135
    %s137 = sphi 0, %s135
    %s138 = sphi 0, %s137
    %s152 = sphi 0, %s138
    %s156 = sphi 0, %s156
    %s158 = sphi 0, %s156
    %s159 = sphi 0, %s158
    %s173 = sphi 0, %s159
    %s177 = sphi 0, %s177
    %s179 = sphi 0, %s177
    %s180 = sphi 0, %s179
    %s194 = sphi 0, %s180
    %s198 = sphi 0, %s198
    %s200 = sphi 0, %s198
    %s201 = sphi 0, %s200
    %s215 = sphi 0, %s201
    %s219 = sphi 0, %s219
    %s221 = sphi 0, %s219
    %s222 = sphi 0, %s221
    %s236 = sphi 0, %s222
    %s240 = sphi 0, %s240
    %s242 = sphi 0, %s240
    %s243 = sphi 0, %s242
    %s257 = sphi 0, %s243
    %s263 = sphi 0, %s265
    %s266 = sphi 0, %s263
    %s267 = sphi 0, %s266
    %s283 = sphi 0, %s267
  $region4: #{tree2seq_forward.3} parent=0 // loop_header_branch
    %20 = sbr.rel (%p18) target = $region8
  $region5: #{tree2seq_forward.3} parent=0 // loop_body
    %s22 = ssub.s32 %s17, 1
    %s23 = ssub.s32 %s17, 2
    %s24 = sadd.s32 %s17, 1
    %s25 = ssub.s32 %s17, %s24
    %p26 = scmp.eq.s32.totalorder %s25, 0
    %s28 = sadd.s32 %s27, 1
    %s29 = scalar_select %p26, %s27, %s28
    %p32 = pneg %p26
    %p33 = scmp.eq.s32.totalorder %s17, 4
    %p34 = por %p32, %p33
    %p35 = scmp.ne.s32.totalorder %s27, %s30
    %p36 = scmp.eq.s32.totalorder %s17, 0
    %p37 = por %p35, %p36
    %p38 = scmp.ne.s32.totalorder %s27, %s30
    %p39 = scmp.eq.s32.totalorder %s22, 4
    %p40 = por %p38, %p39
    %p41 = scmp.ne.s32.totalorder %s30, %s31
    %p42 = scmp.eq.s32.totalorder %s22, 0
    %p43 = por %p41, %p42
    %p44 = scmp.ne.s32.totalorder %s30, %s31
    %p45 = scmp.eq.s32.totalorder %s23, 4
    %p46 = por %p44, %p45
    %p48 = scmp.ne.s32.totalorder %s31, %s47
    %p49 = scmp.eq.s32.totalorder %s23, 0
    %p50 = por %p48, %p49
    %s52 = sadd.s32 %s51, 1
    %p55 = scmp.eq.s32.totalorder %s17, 4
    %p56 = scmp.ne.s32.totalorder %s51, %s53
    %p57 = scmp.eq.s32.totalorder %s17, 0
    %p58 = por %p56, %p57
    %p59 = scmp.ne.s32.totalorder %s51, %s53
    %p60 = scmp.eq.s32.totalorder %s22, 4
    %p61 = por %p59, %p60
    %p62 = scmp.ne.s32.totalorder %s53, %s54
    %p63 = scmp.eq.s32.totalorder %s22, 0
    %p64 = por %p62, %p63
    %p65 = scmp.ne.s32.totalorder %s53, %s54
    %p66 = scmp.eq.s32.totalorder %s23, 4
    %p67 = por %p65, %p66
    %p69 = scmp.ne.s32.totalorder %s54, %s68
    %p70 = scmp.eq.s32.totalorder %s23, 0
    %p71 = por %p69, %p70
    %s73 = sadd.s32 %s72, 1
    %p76 = scmp.eq.s32.totalorder %s17, 4
    %p77 = scmp.ne.s32.totalorder %s72, %s74
    %p78 = scmp.eq.s32.totalorder %s17, 0
    %p79 = por %p77, %p78
    %p80 = scmp.ne.s32.totalorder %s72, %s74
    %p81 = scmp.eq.s32.totalorder %s22, 4
    %p82 = por %p80, %p81
    %p83 = scmp.ne.s32.totalorder %s74, %s75
    %p84 = scmp.eq.s32.totalorder %s22, 0
    %p85 = por %p83, %p84
    %p86 = scmp.ne.s32.totalorder %s74, %s75
    %p87 = scmp.eq.s32.totalorder %s23, 4
    %p88 = por %p86, %p87
    %p90 = scmp.ne.s32.totalorder %s75, %s89
    %p91 = scmp.eq.s32.totalorder %s23, 0
    %p92 = por %p90, %p91
    %s94 = sadd.s32 %s93, 1
    %p97 = scmp.eq.s32.totalorder %s17, 4
    %p98 = scmp.ne.s32.totalorder %s93, %s95
    %p99 = scmp.eq.s32.totalorder %s17, 0
    %p100 = por %p98, %p99
    %p101 = scmp.ne.s32.totalorder %s93, %s95
    %p102 = scmp.eq.s32.totalorder %s22, 4
    %p103 = por %p101, %p102
    %p104 = scmp.ne.s32.totalorder %s95, %s96
    %p105 = scmp.eq.s32.totalorder %s22, 0
    %p106 = por %p104, %p105
    %p107 = scmp.ne.s32.totalorder %s95, %s96
    %p108 = scmp.eq.s32.totalorder %s23, 4
    %p109 = por %p107, %p108
    %p111 = scmp.ne.s32.totalorder %s96, %s110
    %p112 = scmp.eq.s32.totalorder %s23, 0
    %p113 = por %p111, %p112
    %s115 = sadd.s32 %s114, 1
    %p118 = scmp.eq.s32.totalorder %s17, 4
    %p119 = scmp.ne.s32.totalorder %s114, %s116
    %p120 = scmp.eq.s32.totalorder %s17, 0
    %p121 = por %p119, %p120
    %p122 = scmp.ne.s32.totalorder %s114, %s116
    %p123 = scmp.eq.s32.totalorder %s22, 4
    %p124 = por %p122, %p123
    %p125 = scmp.ne.s32.totalorder %s116, %s117
    %p126 = scmp.eq.s32.totalorder %s22, 0
    %p127 = por %p125, %p126
    %p128 = scmp.ne.s32.totalorder %s116, %s117
    %p129 = scmp.eq.s32.totalorder %s23, 4
    %p130 = por %p128, %p129
    %p132 = scmp.ne.s32.totalorder %s117, %s131
    %p133 = scmp.eq.s32.totalorder %s23, 0
    %p134 = por %p132, %p133
    %s136 = sadd.s32 %s135, 1
    %p139 = scmp.eq.s32.totalorder %s17, 4
    %p140 = scmp.ne.s32.totalorder %s135, %s137
    %p141 = scmp.eq.s32.totalorder %s17, 0
    %p142 = por %p140, %p141
    %p143 = scmp.ne.s32.totalorder %s135, %s137
    %p144 = scmp.eq.s32.totalorder %s22, 4
    %p145 = por %p143, %p144
    %p146 = scmp.ne.s32.totalorder %s137, %s138
    %p147 = scmp.eq.s32.totalorder %s22, 0
    %p148 = por %p146, %p147
    %p149 = scmp.ne.s32.totalorder %s137, %s138
    %p150 = scmp.eq.s32.totalorder %s23, 4
    %p151 = por %p149, %p150
    %p153 = scmp.ne.s32.totalorder %s138, %s152
    %p154 = scmp.eq.s32.totalorder %s23, 0
    %p155 = por %p153, %p154
    %s157 = sadd.s32 %s156, 1
    %p160 = scmp.eq.s32.totalorder %s17, 4
    %p161 = scmp.ne.s32.totalorder %s156, %s158
    %p162 = scmp.eq.s32.totalorder %s17, 0
    %p163 = por %p161, %p162
    %p164 = scmp.ne.s32.totalorder %s156, %s158
    %p165 = scmp.eq.s32.totalorder %s22, 4
    %p166 = por %p164, %p165
    %p167 = scmp.ne.s32.totalorder %s158, %s159
    %p168 = scmp.eq.s32.totalorder %s22, 0
    %p169 = por %p167, %p168
    %p170 = scmp.ne.s32.totalorder %s158, %s159
    %p171 = scmp.eq.s32.totalorder %s23, 4
    %p172 = por %p170, %p171
    %p174 = scmp.ne.s32.totalorder %s159, %s173
    %p175 = scmp.eq.s32.totalorder %s23, 0
    %p176 = por %p174, %p175
    %s178 = sadd.s32 %s177, 1
    %p181 = scmp.eq.s32.totalorder %s17, 4
    %p182 = scmp.ne.s32.totalorder %s177, %s179
    %p183 = scmp.eq.s32.totalorder %s17, 0
    %p184 = por %p182, %p183
    %p185 = scmp.ne.s32.totalorder %s177, %s179
    %p186 = scmp.eq.s32.totalorder %s22, 4
    %p187 = por %p185, %p186
    %p188 = scmp.ne.s32.totalorder %s179, %s180
    %p189 = scmp.eq.s32.totalorder %s22, 0
    %p190 = por %p188, %p189
    %p191 = scmp.ne.s32.totalorder %s179, %s180
    %p192 = scmp.eq.s32.totalorder %s23, 4
    %p193 = por %p191, %p192
    %p195 = scmp.ne.s32.totalorder %s180, %s194
    %p196 = scmp.eq.s32.totalorder %s23, 0
    %p197 = por %p195, %p196
    %s199 = sadd.s32 %s198, 1
    %p202 = scmp.eq.s32.totalorder %s17, 4
    %p203 = scmp.ne.s32.totalorder %s198, %s200
    %p204 = scmp.eq.s32.totalorder %s17, 0
    %p205 = por %p203, %p204
    %p206 = scmp.ne.s32.totalorder %s198, %s200
    %p207 = scmp.eq.s32.totalorder %s22, 4
    %p208 = por %p206, %p207
    %p209 = scmp.ne.s32.totalorder %s200, %s201
    %p210 = scmp.eq.s32.totalorder %s22, 0
    %p211 = por %p209, %p210
    %p212 = scmp.ne.s32.totalorder %s200, %s201
    %p213 = scmp.eq.s32.totalorder %s23, 4
    %p214 = por %p212, %p213
    %p216 = scmp.ne.s32.totalorder %s201, %s215
    %p217 = scmp.eq.s32.totalorder %s23, 0
    %p218 = por %p216, %p217
    %s220 = sadd.s32 %s219, 1
    %p223 = scmp.eq.s32.totalorder %s17, 4
    %p224 = scmp.ne.s32.totalorder %s219, %s221
    %p225 = scmp.eq.s32.totalorder %s17, 0
    %p226 = por %p224, %p225
    %p227 = scmp.ne.s32.totalorder %s219, %s221
    %p228 = scmp.eq.s32.totalorder %s22, 4
    %p229 = por %p227, %p228
    %p230 = scmp.ne.s32.totalorder %s221, %s222
    %p231 = scmp.eq.s32.totalorder %s22, 0
    %p232 = por %p230, %p231
    %p233 = scmp.ne.s32.totalorder %s221, %s222
    %p234 = scmp.eq.s32.totalorder %s23, 4
    %p235 = por %p233, %p234
    %p237 = scmp.ne.s32.totalorder %s222, %s236
    %p238 = scmp.eq.s32.totalorder %s23, 0
    %p239 = por %p237, %p238
    %s241 = sadd.s32 %s240, 1
    %p244 = scmp.eq.s32.totalorder %s17, 4
    %p245 = scmp.ne.s32.totalorder %s240, %s242
    %p246 = scmp.eq.s32.totalorder %s17, 0
    %p247 = por %p245, %p246
    %p248 = scmp.ne.s32.totalorder %s240, %s242
    %p249 = scmp.eq.s32.totalorder %s22, 4
    %p250 = por %p248, %p249
    %p251 = scmp.ne.s32.totalorder %s242, %s243
    %p252 = scmp.eq.s32.totalorder %s22, 0
    %p253 = por %p251, %p252
    %p254 = scmp.ne.s32.totalorder %s242, %s243
    %p255 = scmp.eq.s32.totalorder %s23, 4
    %p256 = por %p254, %p255
    %p258 = scmp.ne.s32.totalorder %s243, %s257
    %p259 = scmp.eq.s32.totalorder %s23, 0
    %p260 = por %p258, %p259
    %s261 = ssub.s32 %s17, %s24
    %p262 = scmp.eq.s32.totalorder %s261, 0
    %s264 = sadd.s32 %s263, 1
    %s265 = scalar_select %p262, %s263, %s264
    %p268 = pneg %p262
    %p269 = scmp.eq.s32.totalorder %s17, 4
    %p270 = por %p268, %p269
    %p271 = scmp.ne.s32.totalorder %s263, %s266
    %p272 = scmp.eq.s32.totalorder %s17, 0
    %p273 = por %p271, %p272
    %p274 = scmp.ne.s32.totalorder %s263, %s266
    %p275 = scmp.eq.s32.totalorder %s22, 4
    %p276 = por %p274, %p275
    %p277 = scmp.ne.s32.totalorder %s266, %s267
    %p278 = scmp.eq.s32.totalorder %s22, 0
    %p279 = por %p277, %p278
    %p280 = scmp.ne.s32.totalorder %s266, %s267
    %p281 = scmp.eq.s32.totalorder %s23, 4
    %p282 = por %p280, %p281
    %p284 = scmp.ne.s32.totalorder %s267, %s283
    %p285 = scmp.eq.s32.totalorder %s23, 0
    %p286 = por %p284, %p285
    %p287 = scmp.le.s32.totalorder 1, %s17
    %p288 = scmp.lt.s32.totalorder %s17, 6
    %p289 = pnand %p287, %p288
    %p290 = pneg %p289
    // Predicated region
    $region9: #{tree2seq_forward.3} parent=5 // pred_check
      _
    $region10: #{tree2seq_forward.3} parent=5 // pred_check_branch
      %292 = sbr.rel (%p289) target = $region12
    $region11: #{tree2seq_forward.3} parent=5 // pred_region
      %s293 = ssub.s32 %s17, 1
      // Predicated region
      $region13: #{tree2seq_forward.3} parent=11 // pred_check
        %p294 = pneg %p64
      $region14: #{tree2seq_forward.3} parent=11 // pred_check_branch
        %296 = sbr.rel (%p294) target = $region16
      $region15: #{tree2seq_forward.3} parent=11 // pred_region
        _
      $region16: #{tree2seq_forward.3} parent=11 // pred_fallthru
        _
      // Predicated region
      $region17: #{tree2seq_forward.3} parent=11 // pred_check
        %p297 = pneg %p85
      $region18: #{tree2seq_forward.3} parent=11 // pred_check_branch
        %299 = sbr.rel (%p297) target = $region20
      $region19: #{tree2seq_forward.3} parent=11 // pred_region
        _
      $region20: #{tree2seq_forward.3} parent=11 // pred_fallthru
        _
      // Predicated region
      $region21: #{tree2seq_forward.3} parent=11 // pred_check
        %p300 = pneg %p106
      $region22: #{tree2seq_forward.3} parent=11 // pred_check_branch
        %302 = sbr.rel (%p300) target = $region24
      $region23: #{tree2seq_forward.3} parent=11 // pred_region
        _
      $region24: #{tree2seq_forward.3} parent=11 // pred_fallthru
        _
      // Predicated region
      $region25: #{tree2seq_forward.3} parent=11 // pred_check
        %p303 = pneg %p127
      $region26: #{tree2seq_forward.3} parent=11 // pred_check_branch
        %305 = sbr.rel (%p303) target = $region28
      $region27: #{tree2seq_forward.3} parent=11 // pred_region
        _
      $region28: #{tree2seq_forward.3} parent=11 // pred_fallthru
        _
      // Predicated region
      $region29: #{tree2seq_forward.3} parent=11 // pred_check
        %p306 = pneg %p148
      $region30: #{tree2seq_forward.3} parent=11 // pred_check_branch
        %308 = sbr.rel (%p306) target = $region32
      $region31: #{tree2seq_forward.3} parent=11 // pred_region
        _
      $region32: #{tree2seq_forward.3} parent=11 // pred_fallthru
        _
      // Predicated region
      $region33: #{tree2seq_forward.3} parent=11 // pred_check
        %p309 = pneg %p169
      $region34: #{tree2seq_forward.3} parent=11 // pred_check_branch
        %311 = sbr.rel (%p309) target = $region36
      $region35: #{tree2seq_forward.3} parent=11 // pred_region
        _
      $region36: #{tree2seq_forward.3} parent=11 // pred_fallthru
        _
      // Predicated region
      $region37: #{tree2seq_forward.3} parent=11 // pred_check
        %p312 = pneg %p190
      $region38: #{tree2seq_forward.3} parent=11 // pred_check_branch
        %314 = sbr.rel (%p312) target = $region40
      $region39: #{tree2seq_forward.3} parent=11 // pred_region
        _
      $region40: #{tree2seq_forward.3} parent=11 // pred_fallthru
        _
      // Predicated region
      $region41: #{tree2seq_forward.3} parent=11 // pred_check
        %p315 = pneg %p211
      $region42: #{tree2seq_forward.3} parent=11 // pred_check_branch
        %317 = sbr.rel (%p315) target = $region44
      $region43: #{tree2seq_forward.3} parent=11 // pred_region
        _
      $region44: #{tree2seq_forward.3} parent=11 // pred_fallthru
        _
      // Predicated region
      $region45: #{tree2seq_forward.3} parent=11 // pred_check
        %p318 = pneg %p232
      $region46: #{tree2seq_forward.3} parent=11 // pred_check_branch
        %320 = sbr.rel (%p318) target = $region48
      $region47: #{tree2seq_forward.3} parent=11 // pred_region
        _
      $region48: #{tree2seq_forward.3} parent=11 // pred_fallthru
        _
      // Predicated region
      $region49: #{tree2seq_forward.3} parent=11 // pred_check
        %p321 = pneg %p253
      $region50: #{tree2seq_forward.3} parent=11 // pred_check_branch
        %323 = sbr.rel (%p321) target = $region52
      $region51: #{tree2seq_forward.3} parent=11 // pred_region
        _
      $region52: #{tree2seq_forward.3} parent=11 // pred_fallthru
        _
    $region12: #{tree2seq_forward.3} parent=5 // pred_fallthru
      _
    %p324 = scmp.lt.s32.totalorder %s17, 5
    // Predicated region
    $region53: #{tree2seq_forward.3} parent=5 // pred_check
      %p325 = pneg %p324
    $region54: #{tree2seq_forward.3} parent=5 // pred_check_branch
      %327 = sbr.rel (%p325) target = $region56
    $region55: #{tree2seq_forward.3} parent=5 // pred_region
      // Predicated region
      $region57: #{tree2seq_forward.3} parent=55 // pred_check
        %p328 = pneg %p37
      $region58: #{tree2seq_forward.3} parent=55 // pred_check_branch
        %330 = sbr.rel (%p328) target = $region60
      $region59: #{tree2seq_forward.3} parent=55 // pred_region
        %p331 = scmp.lt.s32.totalorder %s17, 4
        %s332 = scalar_select %p331, %s17, 4
        %s333 = smul.addr %s332, 2
        %s334 = scalar_lea.vmem %s0, %s333
      $region60: #{tree2seq_forward.3} parent=55 // pred_fallthru
        _
    $region56: #{tree2seq_forward.3} parent=5 // pred_fallthru
      _
    %p335 = scmp.le.s32.totalorder 1, %s17
    %p336 = scmp.lt.s32.totalorder %s17, 6
    %p337 = pnand %p335, %p336
    %p338 = pneg %p337
    // Predicated region
    $region61: #{tree2seq_forward.3} parent=5 // pred_check
      _
    $region62: #{tree2seq_forward.3} parent=5 // pred_check_branch
      %340 = sbr.rel (%p337) target = $region64
    $region63: #{tree2seq_forward.3} parent=5 // pred_region
      %s341 = ssub.s32 %s17, 1
      %p342 = scmp.lt.s32.totalorder %s22, 4
      %s343 = scalar_select %p342, %s22, 4
      %s344 = smul.addr %s343, 2
      %s345 = scalar_lea.vmem %s0, %s344
      %p346 = pneg %p43
      %p347 = pneg %p40
      %p348 = pneg %p64
      %p349 = pneg %p61
      %p350 = pneg %p85
      %p351 = pneg %p82
      %p352 = pneg %p106
      %p353 = pneg %p103
      %p354 = pneg %p127
      %p355 = pneg %p124
      %p356 = pneg %p148
      %p357 = pneg %p145
      %p358 = pneg %p169
      %p359 = pneg %p166
      %p360 = pneg %p190
      %p361 = pneg %p187
      %p362 = pneg %p211
      %p363 = pneg %p208
      %p364 = pneg %p232
      %p365 = pneg %p229
      %p366 = pneg %p253
      %p367 = pneg %p250
      %p368 = pneg %p279
      %p369 = pneg %p276
      %p370 = scmp.lt.s32.totalorder %s22, 4
      %s371 = scalar_select %p370, %s22, 4
      %s372 = smul.addr %s371, 2
      %s373 = scalar_lea.vmem %s11, %s372
      %p374 = scmp.lt.s32.totalorder %s22, 4
      %s375 = scalar_select %p374, %s22, 4
      %s376 = smul.addr %s375, 2
      %s377 = scalar_lea.vmem %s0, %s376
      %p378 = scmp.lt.s32.totalorder %s22, 4
      %s379 = scalar_select %p378, %s22, 4
      %s380 = smul.addr %s379, 2
      %s381 = scalar_lea.vmem %s11, %s380
      %p383 = scmp.eq.s32.totalorder %s22, 0
      // Predicated region
      $region65: #{tree2seq_forward.3} parent=63 // pred_check
        %p384 = pneg %p383
      $region66: #{tree2seq_forward.3} parent=63 // pred_check_branch
        %386 = sbr.rel (%p384) target = $region68
      $region67: #{tree2seq_forward.3} parent=63 // pred_region
        %v387 = vld [vmem:[%s1] sm:$0x3]
        %388 = vst [vmem:[#allocation2] sm:$0x3] %v387
        %v389 = vld [vmem:[%s2] sm:$0x3]
        %390 = vst [vmem:[#allocation3] sm:$0x3] %v389
      $region68: #{tree2seq_forward.3} parent=63 // pred_fallthru
        _
      %v391 = vld [vmem:[%s377] sm:$0x3]
      %v392 = vld [vmem:[#allocation2] sm:$0x3]
      %v393 = vld [vmem:[#allocation3] sm:$0x3]
      %v394 = vpack.c.bf16 %v391, %v391
      %v395 = vpack.c.bf16 %v392, %v392
      %v396 = vld [vmem:[%s5] sm:$0xff]
      %v397 = vld [vmem:[%s5 + $0x8] sm:$0xff]
      %v398 = vld [vmem:[%s5 + $0x10] sm:$0xff]
      %v399 = vld [vmem:[%s5 + $0x18] sm:$0xff]
      %v400 = vld [vmem:[%s5 + $0x20] sm:$0xff]
      %v401 = vld [vmem:[%s5 + $0x28] sm:$0xff]
      %v402 = vld [vmem:[%s5 + $0x30] sm:$0xff]
      %v403 = vld [vmem:[%s5 + $0x38] sm:$0xff]
      %v404 = vld [vmem:[%s5 + $0x40] sm:$0xff]
      %v405 = vld [vmem:[%s5 + $0x48] sm:$0xff]
      %v406 = vld [vmem:[%s5 + $0x50] sm:$0xff]
      %v407 = vld [vmem:[%s5 + $0x58] sm:$0xff]
      %v408 = vld [vmem:[%s5 + $0x60] sm:$0xff]
      %v409 = vld [vmem:[%s5 + $0x68] sm:$0xff]
      %v410 = vld [vmem:[%s5 + $0x70] sm:$0xff]
      %v411 = vld [vmem:[%s5 + $0x78] sm:$0xff]
      %v412 = vld [vmem:[%s5 + $0x80] sm:$0xff]
      %v413 = vld [vmem:[%s5 + $0x88] sm:$0xff]
      %v414 = vld [vmem:[%s5 + $0x90] sm:$0xff]
      %v415 = vld [vmem:[%s5 + $0x98] sm:$0xff]
      %v416 = vld [vmem:[%s5 + $0xa0] sm:$0xff]
      %v417 = vld [vmem:[%s5 + $0xa8] sm:$0xff]
      %v418 = vld [vmem:[%s5 + $0xb0] sm:$0xff]
      %v419 = vld [vmem:[%s5 + $0xb8] sm:$0xff]
      %v420 = vld [vmem:[%s5 + $0xc0] sm:$0xff]
      %v421 = vld [vmem:[%s5 + $0xc8] sm:$0xff]
      %v422 = vld [vmem:[%s5 + $0xd0] sm:$0xff]
      %v423 = vld [vmem:[%s5 + $0xd8] sm:$0xff]
      %v424 = vld [vmem:[%s5 + $0xe0] sm:$0xff]
      %v425 = vld [vmem:[%s5 + $0xe8] sm:$0xff]
      %v426 = vld [vmem:[%s5 + $0xf0] sm:$0xff]
      %v427 = vld [vmem:[%s5 + $0xf8] sm:$0xff]
      %v428 = vld [vmem:[%s5 + $0x100] sm:$0xff]
      %v429 = vld [vmem:[%s5 + $0x108] sm:$0xff]
      %v430 = vld [vmem:[%s5 + $0x110] sm:$0xff]
      %v431 = vld [vmem:[%s5 + $0x118] sm:$0xff]
      %v432 = vld [vmem:[%s5 + $0x120] sm:$0xff]
      %v433 = vld [vmem:[%s5 + $0x128] sm:$0xff]
      %v434 = vld [vmem:[%s5 + $0x130] sm:$0xff]
      %v435 = vld [vmem:[%s5 + $0x138] sm:$0xff]
      %v436 = vld [vmem:[%s5 + $0x140] sm:$0xff]
      %v437 = vld [vmem:[%s5 + $0x148] sm:$0xff]
      %v438 = vld [vmem:[%s5 + $0x150] sm:$0xff]
      %v439 = vld [vmem:[%s5 + $0x158] sm:$0xff]
      %v440 = vld [vmem:[%s5 + $0x160] sm:$0xff]
      %v441 = vld [vmem:[%s5 + $0x168] sm:$0xff]
      %v442 = vld [vmem:[%s5 + $0x170] sm:$0xff]
      %v443 = vld [vmem:[%s5 + $0x178] sm:$0xff]
      %v444 = vld [vmem:[%s5 + $0x180] sm:$0xff]
      %v445 = vld [vmem:[%s5 + $0x188] sm:$0xff]
      %v446 = vld [vmem:[%s5 + $0x190] sm:$0xff]
      %v447 = vld [vmem:[%s5 + $0x198] sm:$0xff]
      %v448 = vld [vmem:[%s5 + $0x1a0] sm:$0xff]
      %v449 = vld [vmem:[%s5 + $0x1a8] sm:$0xff]
      %v450 = vld [vmem:[%s5 + $0x1b0] sm:$0xff]
      %v451 = vld [vmem:[%s5 + $0x1b8] sm:$0xff]
      %v452 = vld [vmem:[%s5 + $0x1c0] sm:$0xff]
      %v453 = vld [vmem:[%s5 + $0x1c8] sm:$0xff]
      %v454 = vld [vmem:[%s5 + $0x1d0] sm:$0xff]
      %v455 = vld [vmem:[%s5 + $0x1d8] sm:$0xff]
      %v456 = vld [vmem:[%s5 + $0x1e0] sm:$0xff]
      %v457 = vld [vmem:[%s5 + $0x1e8] sm:$0xff]
      %v458 = vld [vmem:[%s5 + $0x1f0] sm:$0xff]
      %v459 = vld [vmem:[%s5 + $0x1f8] sm:$0xff]
      %v460 = vld [vmem:[%s6] sm:$0xf]
      %v462 = vlaneseq
      %v463 = vshrl.u32 %v462, 7
      %v464 = vsub.s32 0, %v463
      %v465 = vrot.slane %v460, %v464
      %v466 = vlaneseq
      %v467 = vshrl.u32 %v466, 7
      %v468 = vsub.s32 1, %v467
      %v469 = vrot.slane %v460, %v468
      %v470 = vlaneseq
      %v471 = vshrl.u32 %v470, 7
      %v472 = vsub.s32 2, %v471
      %v473 = vrot.slane %v460, %v472
      %v474 = vlaneseq
      %v475 = vshrl.u32 %v474, 7
      %v476 = vsub.s32 3, %v475
      %v477 = vrot.slane %v460, %v476
      %v546 = vunpack.c.l.b16 %v396
      %v547 = vunpack.c.h.b16 %v396
      %v548 = vunpack.c.l.b16 %v397
      %v549 = vunpack.c.h.b16 %v397
      %v550 = vunpack.c.l.b16 %v398
      %v551 = vunpack.c.h.b16 %v398
      %v552 = vunpack.c.l.b16 %v399
      %v553 = vunpack.c.h.b16 %v399
      %v554 = vunpack.c.l.b16 %v400
      %v555 = vunpack.c.h.b16 %v400
      %v556 = vunpack.c.l.b16 %v401
      %v557 = vunpack.c.h.b16 %v401
      %v558 = vunpack.c.l.b16 %v402
      %v559 = vunpack.c.h.b16 %v402
      %v560 = vunpack.c.l.b16 %v403
      %v561 = vunpack.c.h.b16 %v403
      %v562 = vunpack.c.l.b16 %v404
      %v563 = vunpack.c.h.b16 %v404
      %v564 = vunpack.c.l.b16 %v405
      %v565 = vunpack.c.h.b16 %v405
      %v566 = vunpack.c.l.b16 %v406
      %v567 = vunpack.c.h.b16 %v406
      %v568 = vunpack.c.l.b16 %v407
      %v569 = vunpack.c.h.b16 %v407
      %v570 = vunpack.c.l.b16 %v408
      %v571 = vunpack.c.h.b16 %v408
      %v572 = vunpack.c.l.b16 %v409
      %v573 = vunpack.c.h.b16 %v409
      %v574 = vunpack.c.l.b16 %v410
      %v575 = vunpack.c.h.b16 %v410
      %v576 = vunpack.c.l.b16 %v411
      %v577 = vunpack.c.h.b16 %v411
      %v578 = vunpack.c.l.b16 %v412
      %v579 = vunpack.c.h.b16 %v412
      %v580 = vunpack.c.l.b16 %v413
      %v581 = vunpack.c.h.b16 %v413
      %v582 = vunpack.c.l.b16 %v414
      %v583 = vunpack.c.h.b16 %v414
      %v584 = vunpack.c.l.b16 %v415
      %v585 = vunpack.c.h.b16 %v415
      %v586 = vunpack.c.l.b16 %v416
      %v587 = vunpack.c.h.b16 %v416
      %v588 = vunpack.c.l.b16 %v417
      %v589 = vunpack.c.h.b16 %v417
      %v590 = vunpack.c.l.b16 %v418
      %v591 = vunpack.c.h.b16 %v418
      %v592 = vunpack.c.l.b16 %v419
      %v593 = vunpack.c.h.b16 %v419
      %v594 = vunpack.c.l.b16 %v420
      %v595 = vunpack.c.h.b16 %v420
      %v596 = vunpack.c.l.b16 %v421
      %v597 = vunpack.c.h.b16 %v421
      %v598 = vunpack.c.l.b16 %v422
      %v599 = vunpack.c.h.b16 %v422
      %v600 = vunpack.c.l.b16 %v423
      %v601 = vunpack.c.h.b16 %v423
      %v602 = vunpack.c.l.b16 %v424
      %v603 = vunpack.c.h.b16 %v424
      %v604 = vunpack.c.l.b16 %v425
      %v605 = vunpack.c.h.b16 %v425
      %v606 = vunpack.c.l.b16 %v426
      %v607 = vunpack.c.h.b16 %v426
      %v608 = vunpack.c.l.b16 %v427
      %v609 = vunpack.c.h.b16 %v427
      %v610 = vunpack.c.l.b16 %v428
      %v611 = vunpack.c.h.b16 %v428
      %v612 = vunpack.c.l.b16 %v429
      %v613 = vunpack.c.h.b16 %v429
      %v614 = vunpack.c.l.b16 %v430
      %v615 = vunpack.c.h.b16 %v430
      %v616 = vunpack.c.l.b16 %v431
      %v617 = vunpack.c.h.b16 %v431
      %v618 = vunpack.c.l.b16 %v432
      %v619 = vunpack.c.h.b16 %v432
      %v620 = vunpack.c.l.b16 %v433
      %v621 = vunpack.c.h.b16 %v433
      %v622 = vunpack.c.l.b16 %v434
      %v623 = vunpack.c.h.b16 %v434
      %v624 = vunpack.c.l.b16 %v435
      %v625 = vunpack.c.h.b16 %v435
      %v626 = vunpack.c.l.b16 %v436
      %v627 = vunpack.c.h.b16 %v436
      %v628 = vunpack.c.l.b16 %v437
      %v629 = vunpack.c.h.b16 %v437
      %v630 = vunpack.c.l.b16 %v438
      %v631 = vunpack.c.h.b16 %v438
      %v632 = vunpack.c.l.b16 %v439
      %v633 = vunpack.c.h.b16 %v439
      %v634 = vunpack.c.l.b16 %v440
      %v635 = vunpack.c.h.b16 %v440
      %v636 = vunpack.c.l.b16 %v441
      %v637 = vunpack.c.h.b16 %v441
      %v638 = vunpack.c.l.b16 %v442
      %v639 = vunpack.c.h.b16 %v442
      %v640 = vunpack.c.l.b16 %v443
      %v641 = vunpack.c.h.b16 %v443
      %v642 = vunpack.c.l.b16 %v444
      %v643 = vunpack.c.h.b16 %v444
      %v644 = vunpack.c.l.b16 %v445
      %v645 = vunpack.c.h.b16 %v445
      %v646 = vunpack.c.l.b16 %v446
      %v647 = vunpack.c.h.b16 %v446
      %v648 = vunpack.c.l.b16 %v447
      %v649 = vunpack.c.h.b16 %v447
      %v650 = vunpack.c.l.b16 %v448
      %v651 = vunpack.c.h.b16 %v448
      %v652 = vunpack.c.l.b16 %v449
      %v653 = vunpack.c.h.b16 %v449
      %v654 = vunpack.c.l.b16 %v450
      %v655 = vunpack.c.h.b16 %v450
      %v656 = vunpack.c.l.b16 %v451
      %v657 = vunpack.c.h.b16 %v451
      %v658 = vunpack.c.l.b16 %v452
      %v659 = vunpack.c.h.b16 %v452
      %v660 = vunpack.c.l.b16 %v453
      %v661 = vunpack.c.h.b16 %v453
      %v662 = vunpack.c.l.b16 %v454
      %v663 = vunpack.c.h.b16 %v454
      %v664 = vunpack.c.l.b16 %v455
      %v665 = vunpack.c.h.b16 %v455
      %v666 = vunpack.c.l.b16 %v456
      %v667 = vunpack.c.h.b16 %v456
      %v668 = vunpack.c.l.b16 %v457
      %v669 = vunpack.c.h.b16 %v457
      %v670 = vunpack.c.l.b16 %v458
      %v671 = vunpack.c.h.b16 %v458
      %v672 = vunpack.c.l.b16 %v459
      %v673 = vunpack.c.h.b16 %v459
      %v674 = vpack.c.b16 %v550, %v546
      %v675 = vpack.c.b16 %v551, %v547
      %v676 = vpack.c.b16 %v552, %v548
      %v677 = vpack.c.b16 %v553, %v549
      %v678 = vpack.c.b16 %v558, %v554
      %v679 = vpack.c.b16 %v559, %v555
      %v680 = vpack.c.b16 %v560, %v556
      %v681 = vpack.c.b16 %v561, %v557
      %v682 = vpack.c.b16 %v566, %v562
      %v683 = vpack.c.b16 %v567, %v563
      %v684 = vpack.c.b16 %v568, %v564
      %v685 = vpack.c.b16 %v569, %v565
      %v686 = vpack.c.b16 %v574, %v570
      %v687 = vpack.c.b16 %v575, %v571
      %v688 = vpack.c.b16 %v576, %v572
      %v689 = vpack.c.b16 %v577, %v573
      %v690 = vpack.c.b16 %v582, %v578
      %v691 = vpack.c.b16 %v583, %v579
      %v692 = vpack.c.b16 %v584, %v580
      %v693 = vpack.c.b16 %v585, %v581
      %v694 = vpack.c.b16 %v590, %v586
      %v695 = vpack.c.b16 %v591, %v587
      %v696 = vpack.c.b16 %v592, %v588
      %v697 = vpack.c.b16 %v593, %v589
      %v698 = vpack.c.b16 %v598, %v594
      %v699 = vpack.c.b16 %v599, %v595
      %v700 = vpack.c.b16 %v600, %v596
      %v701 = vpack.c.b16 %v601, %v597
      %v702 = vpack.c.b16 %v606, %v602
      %v703 = vpack.c.b16 %v607, %v603
      %v704 = vpack.c.b16 %v608, %v604
      %v705 = vpack.c.b16 %v609, %v605
      %v706 = vpack.c.b16 %v614, %v610
      %v707 = vpack.c.b16 %v615, %v611
      %v708 = vpack.c.b16 %v616, %v612
      %v709 = vpack.c.b16 %v617, %v613
      %v710 = vpack.c.b16 %v622, %v618
      %v711 = vpack.c.b16 %v623, %v619
      %v712 = vpack.c.b16 %v624, %v620
      %v713 = vpack.c.b16 %v625, %v621
      %v714 = vpack.c.b16 %v630, %v626
      %v715 = vpack.c.b16 %v631, %v627
      %v716 = vpack.c.b16 %v632, %v628
      %v717 = vpack.c.b16 %v633, %v629
      %v718 = vpack.c.b16 %v638, %v634
      %v719 = vpack.c.b16 %v639, %v635
      %v720 = vpack.c.b16 %v640, %v636
      %v721 = vpack.c.b16 %v641, %v637
      %v722 = vpack.c.b16 %v646, %v642
      %v723 = vpack.c.b16 %v647, %v643
      %v724 = vpack.c.b16 %v648, %v644
      %v725 = vpack.c.b16 %v649, %v645
      %v726 = vpack.c.b16 %v654, %v650
      %v727 = vpack.c.b16 %v655, %v651
      %v728 = vpack.c.b16 %v656, %v652
      %v729 = vpack.c.b16 %v657, %v653
      %v730 = vpack.c.b16 %v662, %v658
      %v731 = vpack.c.b16 %v663, %v659
      %v732 = vpack.c.b16 %v664, %v660
      %v733 = vpack.c.b16 %v665, %v661
      %v734 = vpack.c.b16 %v670, %v666
      %v735 = vpack.c.b16 %v671, %v667
      %v736 = vpack.c.b16 %v672, %v668
      %v737 = vpack.c.b16 %v673, %v669
      %802 = vmatprep.subr.bf16.mxu0 %v675
      %803 = vmatpush1.bf16.msra.mxu0 %v674
      %804 = vmatprep.subr.bf16.mxu0 %v679
      %805 = vmatpush1.bf16.msra.mxu0 %v678
      %806 = vmatprep.subr.bf16.mxu0 %v683
      %807 = vmatpush1.bf16.msra.mxu0 %v682
      %808 = vmatprep.subr.bf16.mxu0 %v687
      %809 = vmatpush1.bf16.msra.mxu0 %v686
      %810 = vmatprep.subr.bf16.mxu0 %v691
      %811 = vmatpush1.bf16.msra.mxu0 %v690
      %812 = vmatprep.subr.bf16.mxu0 %v695
      %813 = vmatpush1.bf16.msra.mxu0 %v694
      %814 = vmatprep.subr.bf16.mxu0 %v699
      %815 = vmatpush1.bf16.msra.mxu0 %v698
      %816 = vmatprep.subr.bf16.mxu0 %v703
      %817 = vmatpush1.bf16.msra.mxu0 %v702
      %818 = vmatprep.subr.bf16.mxu0 %v707
      %819 = vmatpush1.bf16.msra.mxu0 %v706
      %820 = vmatprep.subr.bf16.mxu0 %v711
      %821 = vmatpush1.bf16.msra.mxu0 %v710
      %822 = vmatprep.subr.bf16.mxu0 %v715
      %823 = vmatpush1.bf16.msra.mxu0 %v714
      %824 = vmatprep.subr.bf16.mxu0 %v719
      %825 = vmatpush1.bf16.msra.mxu0 %v718
      %826 = vmatprep.subr.bf16.mxu0 %v723
      %827 = vmatpush1.bf16.msra.mxu0 %v722
      %828 = vmatprep.subr.bf16.mxu0 %v727
      %829 = vmatpush1.bf16.msra.mxu0 %v726
      %830 = vmatprep.subr.bf16.mxu0 %v731
      %831 = vmatpush1.bf16.msra.mxu0 %v730
      %832 = vmatprep.subr.bf16.mxu0 %v735
      %833 = vmatpush1.bf16.msra.mxu0 %v734
      %834 = vmatprep.mubr.bf16.mxu0 %v395
      %835 = vmatmul.mubr.bf16.gmra.mrb[0].mxu0 %v394
      %v836 = vpop.f32.mrb[0].mxu0
      %v837 = vadd.f32 %v465, %v836
      %v838 = vpop.f32.mrb[0].mxu0
      %v839 = vadd.f32 %v469, %v838
      %v840 = vpop.f32.mrb[0].mxu0
      %v841 = vpop.f32.mrb[0].mxu0
      %842 = vdwg.mxu0
      %843 = vmatprep.subr.bf16.mxu0 %v677
      %844 = vmatpush1.bf16.msra.mxu0 %v676
      %845 = vmatprep.subr.bf16.mxu0 %v681
      %846 = vmatpush1.bf16.msra.mxu0 %v680
      %847 = vmatprep.subr.bf16.mxu0 %v685
      %848 = vmatpush1.bf16.msra.mxu0 %v684
      %849 = vmatprep.subr.bf16.mxu0 %v689
      %850 = vmatpush1.bf16.msra.mxu0 %v688
      %851 = vmatprep.subr.bf16.mxu0 %v693
      %852 = vmatpush1.bf16.msra.mxu0 %v692
      %853 = vmatprep.subr.bf16.mxu0 %v697
      %854 = vmatpush1.bf16.msra.mxu0 %v696
      %855 = vmatprep.subr.bf16.mxu0 %v701
      %856 = vmatpush1.bf16.msra.mxu0 %v700
      %857 = vmatprep.subr.bf16.mxu0 %v705
      %858 = vmatpush1.bf16.msra.mxu0 %v704
      %859 = vmatprep.subr.bf16.mxu0 %v709
      %860 = vmatpush1.bf16.msra.mxu0 %v708
      %861 = vmatprep.subr.bf16.mxu0 %v713
      %862 = vmatpush1.bf16.msra.mxu0 %v712
      %863 = vmatprep.subr.bf16.mxu0 %v717
      %864 = vmatpush1.bf16.msra.mxu0 %v716
      %865 = vmatprep.subr.bf16.mxu0 %v721
      %866 = vmatpush1.bf16.msra.mxu0 %v720
      %867 = vmatprep.subr.bf16.mxu0 %v725
      %868 = vmatpush1.bf16.msra.mxu0 %v724
      %869 = vmatprep.subr.bf16.mxu0 %v729
      %870 = vmatpush1.bf16.msra.mxu0 %v728
      %871 = vmatprep.subr.bf16.mxu0 %v733
      %872 = vmatpush1.bf16.msra.mxu0 %v732
      %873 = vmatprep.subr.bf16.mxu0 %v737
      %874 = vmatpush1.bf16.msra.mxu0 %v736
      %875 = vmatprep.mubr.bf16.mxu0 %v395
      %876 = vmatmul.mubr.bf16.gmra.mrb[0].mxu0 %v394
      %v877 = vpop.f32.mrb[0].mxu0
      %v878 = vadd.f32 %v473, %v877
      %v879 = vpop.f32.mrb[0].mxu0
      %v880 = vadd.f32 %v477, %v879
      %v881 = vpop.f32.mrb[0].mxu0
      %v882 = vpop.f32.mrb[0].mxu0
      %883 = vdwg.mxu0
      %v884 = vxor.u32 %v837, 2147483648
      %v885 = vmul.f32 %v884, 1.442695
      %v886 = vpow.pop %v885
      %v887 = vadd.f32 %v886, 1.0
      %v888 = vrcp.pop %v887
      %v889 = vmul.f32 1.0, %v888
      %v890 = vxor.u32 %v839, 2147483648
      %v891 = vmul.f32 %v890, 1.442695
      %v892 = vpow.pop %v891
      %v893 = vadd.f32 %v892, 1.0
      %v894 = vrcp.pop %v893
      %v895 = vmul.f32 1.0, %v894
      %v896 = vtanh.pop %v878
      %v897 = vxor.u32 %v880, 2147483648
      %v898 = vmul.f32 %v897, 1.442695
      %v899 = vpow.pop %v898
      %v900 = vadd.f32 %v899, 1.0
      %v901 = vrcp.pop %v900
      %v902 = vmul.f32 1.0, %v901
      %v903 = vmul.f32 %v895, %v393
      %v904 = vmul.f32 %v889, %v896
      %v905 = vadd.f32 %v903, %v904
      %v906 = vtanh.pop %v905
      %v907 = vmul.f32 %v902, %v906
      %908 = vst [vmem:[#allocation2] sm:$0x3] %v907
      %909 = vst [vmem:[#allocation3] sm:$0x3] %v905
      %v910 = vld [vmem:[%s3] sm:$0x7f]
      %v911 = vld [vmem:[%s3 + $0x8] sm:$0x7f]
      %v914 = vunpack.c.l.s4 1966171168
      %v915 = vunpack.c.0.s8 %v914
      %v916 = vlaneseq
      %v917 = vshrl.u32 %v916, 7
      %v918 = vsub.s32 %v915, %v917
      %v919 = vrot.slane %v907, %v918
      %v920 = vcombine.high %v919, %v919
      %v922 = vunpack.c.l.s4 1966171168
      %v923 = vunpack.c.0.s8 %v922
      %v924 = vlaneseq
      %v925 = vshrl.u32 %v924, 7
      %v926 = vsub.s32 %v923, %v925
      %v927 = vrot.slane %v919, %v926
      %v929 = vunpack.c.l.s4 1966171168
      %v930 = vunpack.c.0.s8 %v929
      %v931 = vlaneseq
      %v932 = vshrl.u32 %v931, 7
      %v933 = vsub.s32 %v930, %v932
      %v934 = vrot.slane %v920, %v933
      %v935 = vlaneseq
      %v936 = vshrl.u32 %v935, 7
      %v937 = vsub.s32 0, %v936
      %v938 = vrot.slane %v927, %v937
      %v939 = vlaneseq
      %v940 = vshrl.u32 %v939, 7
      %v941 = vsub.s32 0, %v940
      %v942 = vrot.slane %v934, %v941
      %v945 = vmul.f32 %v910, %v938
      %v946 = vmul.f32 %v911, %v942
      %vm947 = vcmask 1046528
      %v948 = vsel %vm947, %v945, 0.0
      %949 = vadd.xlane.f32.xlu0 %v948
      %v950 = vpop.xlane.xlu0 %949
      %v951 = vsel %vm947, %v946, 0.0
      %952 = vadd.xlane.f32.xlu0 %v951
      %v953 = vpop.xlane.xlu0 %952
      %v954 = vld [vmem:[%s4] sm:$0x3]
      %v956 = vlaneseq
      %v957 = vshrl.u32 %v956, 7
      %v958 = vsub.s32 0, %v957
      %v959 = vrot.slane %v954, %v958
      %961 = vbcast.lane.b32.xlu0 %v959, 256
      %v962 = vpop.permute.xlu0 %961
      %v963 = vlaneseq
      %v964 = vshrl.u32 %v963, 7
      %v965 = vsub.s32 1, %v964
      %v966 = vrot.slane %v954, %v965
      %968 = vbcast.lane.b32.xlu0 %v966, 256
      %v969 = vpop.permute.xlu0 %968
      %v972 = vadd.f32 %v950, %v962
      %v973 = vadd.f32 %v953, %v969
      %976 = vset.pattern.permute.xlu0 0
      %977 = vperm.xlu0 %976, %v972
      %v978 = vpop.permute.xlu0 %977
      %979 = vset.pattern.permute.xlu0 0
      %980 = vperm.xlu0 %979, %v973
      %v981 = vpop.permute.xlu0 %980
      %v982 = vlaneseq
      %v983 = vand.u32 %v982, 127
      %v984 = vlaneseq
      %v985 = vshrl.u32 %v984, 7
      %v986 = vsub.s32 %v983, %v985
      %v987 = vrot.slane %v978, %v986
      %v988 = vlaneseq
      %v989 = vshrl.u32 %v988, 7
      %v990 = vsub.s32 %v983, %v989
      %v991 = vrot.slane %v981, %v990
      %vm992 = vcmask 1041409
      %v993 = vsel %vm992, %v991, %v987
      %vm995 = vcmask 50176
      %v996 = vsel %vm995, %v993, -inf
      %997 = vmax.xlane.f32.xlu0 %v996
      %v998 = vpop.xlane.xlu0 %997
      %v1000 = vlaneseq
      %v1001 = vshrl.u32 %v1000, 7
      %v1002 = vsub.s32 0, %v1001
      %v1003 = vrot.slane %v998, %v1002
      %v1004 = vlaneseq
      %v1005 = vshrl.u32 %v1004, 7
      %v1006 = vsub.s32 1, %v1005
      %v1007 = vrot.slane %v998, %v1006
      %v1010 = vsub.f32 %v972, %v1003
      %v1011 = vsub.f32 %v973, %v1007
      %v1012 = vmul.f32 %v1010, 1.442695
      %v1013 = vpow.pop %v1012
      %v1014 = vmul.f32 %v1011, 1.442695
      %v1015 = vpow.pop %v1014
      %1018 = vset.pattern.permute.xlu0 0
      %1019 = vperm.xlu0 %1018, %v1013
      %v1020 = vpop.permute.xlu0 %1019
      %1021 = vset.pattern.permute.xlu0 0
      %1022 = vperm.xlu0 %1021, %v1015
      %v1023 = vpop.permute.xlu0 %1022
      %v1024 = vlaneseq
      %v1025 = vshrl.u32 %v1024, 7
      %v1026 = vsub.s32 %v983, %v1025
      %v1027 = vrot.slane %v1020, %v1026
      %v1028 = vlaneseq
      %v1029 = vshrl.u32 %v1028, 7
      %v1030 = vsub.s32 %v983, %v1029
      %v1031 = vrot.slane %v1023, %v1030
      %v1032 = vsel %vm992, %v1031, %v1027
      %v1034 = vsel %vm995, %v1032, 0.0
      %1035 = vadd.xlane.f32.xlu0 %v1034
      %v1036 = vpop.xlane.xlu0 %1035
      %v1038 = vlaneseq
      %v1039 = vshrl.u32 %v1038, 7
      %v1040 = vsub.s32 0, %v1039
      %v1041 = vrot.slane %v1036, %v1040
      %v1042 = vlaneseq
      %v1043 = vshrl.u32 %v1042, 7
      %v1044 = vsub.s32 1, %v1043
      %v1045 = vrot.slane %v1036, %v1044
      %v1048 = vrcp.pop %v1041
      %v1049 = vmul.f32 %v1013, %v1048
      %v1050 = vrcp.pop %v1045
      %v1051 = vmul.f32 %v1015, %v1050
      %1053 = vset.pattern.permute.xlu0 0
      %1054 = vperm.xlu0 %1053, %v1049
      %v1055 = vpop.permute.xlu0 %1054
      %1058 = vset.pattern.permute.xlu0 0
      %1059 = vperm.xlu0 %1058, %v1051
      %v1060 = vpop.permute.xlu0 %1059
      %v1062 = vmul.f32 %v910, %v1055
      %v1063 = vmul.f32 %v911, %v1060
      %v1064 = vsel %vm947, %v1062, 0.0
      %v1065 = vrot.slane %v1064, 4
      %v1066 = vadd.f32 %v1064, %v1065
      %v1067 = vrot.slane %v1066, 2
      %v1068 = vadd.f32 %v1066, %v1067
      %v1069 = vrot.slane %v1068, 1
      %v1070 = vadd.f32 %v1068, %v1069
      %v1071 = vsel %vm947, %v1063, 0.0
      %v1072 = vrot.slane %v1071, 4
      %v1073 = vadd.f32 %v1071, %v1072
      %v1074 = vrot.slane %v1073, 2
      %v1075 = vadd.f32 %v1073, %v1074
      %v1076 = vrot.slane %v1075, 1
      %v1077 = vadd.f32 %v1075, %v1076
      %v1080 = vsel %vm992, %v1077, %v1070
      %v1082 = vpack.c.bf16 %v1080, %v1080
      %v1083 = vpack.c.bf16 %v907, %v907
      %v1084 = vld [vmem:[%s7] sm:$0xf]
      %v1085 = vld [vmem:[%s7 + $0x4] sm:$0xf]
      %v1086 = vld [vmem:[%s7 + $0x8] sm:$0xf]
      %v1087 = vld [vmem:[%s7 + $0xc] sm:$0xf]
      %v1088 = vld [vmem:[%s7 + $0x10] sm:$0xf]
      %v1089 = vld [vmem:[%s7 + $0x14] sm:$0xf]
      %v1090 = vld [vmem:[%s7 + $0x18] sm:$0xf]
      %v1091 = vld [vmem:[%s7 + $0x1c] sm:$0xf]
      %v1092 = vld [vmem:[%s7 + $0x20] sm:$0xf]
      %v1093 = vld [vmem:[%s7 + $0x24] sm:$0xf]
      %v1094 = vld [vmem:[%s7 + $0x28] sm:$0xf]
      %v1095 = vld [vmem:[%s7 + $0x2c] sm:$0xf]
      %v1096 = vld [vmem:[%s7 + $0x30] sm:$0xf]
      %v1097 = vld [vmem:[%s7 + $0x34] sm:$0xf]
      %v1098 = vld [vmem:[%s7 + $0x38] sm:$0xf]
      %v1099 = vld [vmem:[%s7 + $0x3c] sm:$0xf]
      %v1100 = vld [vmem:[%s7 + $0x40] sm:$0xf]
      %v1101 = vld [vmem:[%s7 + $0x44] sm:$0xf]
      %v1102 = vld [vmem:[%s7 + $0x48] sm:$0xf]
      %v1103 = vld [vmem:[%s7 + $0x4c] sm:$0xf]
      %v1104 = vld [vmem:[%s7 + $0x50] sm:$0xf]
      %v1105 = vld [vmem:[%s7 + $0x54] sm:$0xf]
      %v1106 = vld [vmem:[%s7 + $0x58] sm:$0xf]
      %v1107 = vld [vmem:[%s7 + $0x5c] sm:$0xf]
      %v1108 = vld [vmem:[%s7 + $0x60] sm:$0xf]
      %v1109 = vld [vmem:[%s7 + $0x64] sm:$0xf]
      %v1110 = vld [vmem:[%s7 + $0x68] sm:$0xf]
      %v1111 = vld [vmem:[%s7 + $0x6c] sm:$0xf]
      %v1112 = vld [vmem:[%s7 + $0x70] sm:$0xf]
      %v1113 = vld [vmem:[%s7 + $0x74] sm:$0xf]
      %v1114 = vld [vmem:[%s7 + $0x78] sm:$0xf]
      %v1115 = vld [vmem:[%s7 + $0x7c] sm:$0xf]
      %v1116 = vld [vmem:[%s8] sm:$0x1]
      %v1118 = vlaneseq
      %v1119 = vshrl.u32 %v1118, 7
      %v1120 = vsub.s32 0, %v1119
      %v1121 = vrot.slane %v1116, %v1120
      %v1155 = vunpack.c.l.b16 %v1084
      %v1156 = vunpack.c.l.b16 %v1085
      %v1157 = vunpack.c.l.b16 %v1086
      %v1158 = vunpack.c.l.b16 %v1087
      %v1159 = vunpack.c.l.b16 %v1088
      %v1160 = vunpack.c.l.b16 %v1089
      %v1161 = vunpack.c.l.b16 %v1090
      %v1162 = vunpack.c.l.b16 %v1091
      %v1163 = vunpack.c.l.b16 %v1092
      %v1164 = vunpack.c.l.b16 %v1093
      %v1165 = vunpack.c.l.b16 %v1094
      %v1166 = vunpack.c.l.b16 %v1095
      %v1167 = vunpack.c.l.b16 %v1096
      %v1168 = vunpack.c.l.b16 %v1097
      %v1169 = vunpack.c.l.b16 %v1098
      %v1170 = vunpack.c.l.b16 %v1099
      %v1171 = vunpack.c.l.b16 %v1100
      %v1172 = vunpack.c.l.b16 %v1101
      %v1173 = vunpack.c.l.b16 %v1102
      %v1174 = vunpack.c.l.b16 %v1103
      %v1175 = vunpack.c.l.b16 %v1104
      %v1176 = vunpack.c.l.b16 %v1105
      %v1177 = vunpack.c.l.b16 %v1106
      %v1178 = vunpack.c.l.b16 %v1107
      %v1179 = vunpack.c.l.b16 %v1108
      %v1180 = vunpack.c.l.b16 %v1109
      %v1181 = vunpack.c.l.b16 %v1110
      %v1182 = vunpack.c.l.b16 %v1111
      %v1183 = vunpack.c.l.b16 %v1112
      %v1184 = vunpack.c.l.b16 %v1113
      %v1185 = vunpack.c.l.b16 %v1114
      %v1186 = vunpack.c.l.b16 %v1115
      %v1187 = vpack.c.b16 %v1156, %v1155
      %v1188 = vpack.c.b16 %v1158, %v1157
      %v1189 = vpack.c.b16 %v1160, %v1159
      %v1190 = vpack.c.b16 %v1162, %v1161
      %v1191 = vpack.c.b16 %v1164, %v1163
      %v1192 = vpack.c.b16 %v1166, %v1165
      %v1193 = vpack.c.b16 %v1168, %v1167
      %v1194 = vpack.c.b16 %v1170, %v1169
      %v1195 = vpack.c.b16 %v1172, %v1171
      %v1196 = vpack.c.b16 %v1174, %v1173
      %v1197 = vpack.c.b16 %v1176, %v1175
      %v1198 = vpack.c.b16 %v1178, %v1177
      %v1199 = vpack.c.b16 %v1180, %v1179
      %v1200 = vpack.c.b16 %v1182, %v1181
      %v1201 = vpack.c.b16 %v1184, %v1183
      %v1202 = vpack.c.b16 %v1186, %v1185
      %1219 = vmatprep.subr.bf16.mxu0 0
      %1220 = vmatpush1.bf16.msra.mxu0 %v1187
      %1221 = vmatprep.subr.bf16.mxu0 0
      %1222 = vmatpush1.bf16.msra.mxu0 %v1188
      %1223 = vmatprep.subr.bf16.mxu0 0
      %1224 = vmatpush1.bf16.msra.mxu0 %v1189
      %1225 = vmatprep.subr.bf16.mxu0 0
      %1226 = vmatpush1.bf16.msra.mxu0 %v1190
      %1227 = vmatprep.subr.bf16.mxu0 0
      %1228 = vmatpush1.bf16.msra.mxu0 %v1191
      %1229 = vmatprep.subr.bf16.mxu0 0
      %1230 = vmatpush1.bf16.msra.mxu0 %v1192
      %1231 = vmatprep.subr.bf16.mxu0 0
      %1232 = vmatpush1.bf16.msra.mxu0 %v1193
      %1233 = vmatprep.subr.bf16.mxu0 0
      %1234 = vmatpush1.bf16.msra.mxu0 %v1194
      %1235 = vmatprep.subr.bf16.mxu0 0
      %1236 = vmatpush1.bf16.msra.mxu0 %v1195
      %1237 = vmatprep.subr.bf16.mxu0 0
      %1238 = vmatpush1.bf16.msra.mxu0 %v1196
      %1239 = vmatprep.subr.bf16.mxu0 0
      %1240 = vmatpush1.bf16.msra.mxu0 %v1197
      %1241 = vmatprep.subr.bf16.mxu0 0
      %1242 = vmatpush1.bf16.msra.mxu0 %v1198
      %1243 = vmatprep.subr.bf16.mxu0 0
      %1244 = vmatpush1.bf16.msra.mxu0 %v1199
      %1245 = vmatprep.subr.bf16.mxu0 0
      %1246 = vmatpush1.bf16.msra.mxu0 %v1200
      %1247 = vmatprep.subr.bf16.mxu0 0
      %1248 = vmatpush1.bf16.msra.mxu0 %v1201
      %1249 = vmatprep.subr.bf16.mxu0 0
      %1250 = vmatpush1.bf16.msra.mxu0 %v1202
      %1251 = vmatprep.mubr.bf16.mxu0 %v1083
      %1252 = vmatmul.mubr.bf16.gmra.mrb[0].mxu0 %v1082
      %v1253 = vpop.f32.mrb[0].mxu0
      %v1254 = vadd.f32 %v1121, %v1253
      %v1255 = vpop.f32.mrb[0].mxu0
      %v1256 = vpop.f32.mrb[0].mxu0
      %v1257 = vpop.f32.mrb[0].mxu0
      %1258 = vdwg.mxu0
      %v1259 = vtanh.pop %v1254
      %v1260 = vpack.c.bf16 %v1259, %v1259
      %v1261 = vld [vmem:[%s9] sm:$0xf]
      %v1262 = vld [vmem:[%s9 + $0x4] sm:$0xf]
      %v1263 = vld [vmem:[%s9 + $0x8] sm:$0xf]
      %v1264 = vld [vmem:[%s9 + $0xc] sm:$0xf]
      %v1265 = vld [vmem:[%s9 + $0x10] sm:$0xf]
      %v1266 = vld [vmem:[%s9 + $0x14] sm:$0xf]
      %v1267 = vld [vmem:[%s9 + $0x18] sm:$0xf]
      %v1268 = vld [vmem:[%s9 + $0x1c] sm:$0xf]
      %v1269 = vld [vmem:[%s9 + $0x20] sm:$0xf]
      %v1270 = vld [vmem:[%s9 + $0x24] sm:$0xf]
      %v1271 = vld [vmem:[%s9 + $0x28] sm:$0xf]
      %v1272 = vld [vmem:[%s9 + $0x2c] sm:$0xf]
      %v1273 = vld [vmem:[%s9 + $0x30] sm:$0xf]
      %v1274 = vld [vmem:[%s9 + $0x34] sm:$0xf]
      %v1275 = vld [vmem:[%s9 + $0x38] sm:$0xf]
      %v1276 = vld [vmem:[%s9 + $0x3c] sm:$0xf]
      %v1277 = vld [vmem:[%s10] sm:$0x1]
      %v1279 = vlaneseq
      %v1280 = vshrl.u32 %v1279, 7
      %v1281 = vsub.s32 0, %v1280
      %v1282 = vrot.slane %v1277, %v1281
      %v1300 = vunpack.c.l.b16 %v1261
      %v1301 = vunpack.c.l.b16 %v1262
      %v1302 = vunpack.c.l.b16 %v1263
      %v1303 = vunpack.c.l.b16 %v1264
      %v1304 = vunpack.c.l.b16 %v1265
      %v1305 = vunpack.c.l.b16 %v1266
      %v1306 = vunpack.c.l.b16 %v1267
      %v1307 = vunpack.c.l.b16 %v1268
      %v1308 = vunpack.c.l.b16 %v1269
      %v1309 = vunpack.c.l.b16 %v1270
      %v1310 = vunpack.c.l.b16 %v1271
      %v1311 = vunpack.c.l.b16 %v1272
      %v1312 = vunpack.c.l.b16 %v1273
      %v1313 = vunpack.c.l.b16 %v1274
      %v1314 = vunpack.c.l.b16 %v1275
      %v1315 = vunpack.c.l.b16 %v1276
      %v1316 = vpack.c.b16 %v1301, %v1300
      %v1317 = vpack.c.b16 %v1303, %v1302
      %v1318 = vpack.c.b16 %v1305, %v1304
      %v1319 = vpack.c.b16 %v1307, %v1306
      %v1320 = vpack.c.b16 %v1309, %v1308
      %v1321 = vpack.c.b16 %v1311, %v1310
      %v1322 = vpack.c.b16 %v1313, %v1312
      %v1323 = vpack.c.b16 %v1315, %v1314
      %1332 = vmatprep.subr.bf16.mxu0 0
      %1333 = vmatpush1.bf16.msra.mxu0 %v1316
      %1334 = vmatprep.subr.bf16.mxu0 0
      %1335 = vmatpush1.bf16.msra.mxu0 %v1317
      %1336 = vmatprep.subr.bf16.mxu0 0
      %1337 = vmatpush1.bf16.msra.mxu0 %v1318
      %1338 = vmatprep.subr.bf16.mxu0 0
      %1339 = vmatpush1.bf16.msra.mxu0 %v1319
      %1340 = vmatprep.subr.bf16.mxu0 0
      %1341 = vmatpush1.bf16.msra.mxu0 %v1320
      %1342 = vmatprep.subr.bf16.mxu0 0
      %1343 = vmatpush1.bf16.msra.mxu0 %v1321
      %1344 = vmatprep.subr.bf16.mxu0 0
      %1345 = vmatpush1.bf16.msra.mxu0 %v1322
      %1346 = vmatprep.subr.bf16.mxu0 0
      %1347 = vmatpush1.bf16.msra.mxu0 %v1323
      %1348 = vmatprep.subr.bf16.mxu0 0
      %1349 = vmatpush1.bf16.msra.mxu0 0
      %1350 = vmatprep.subr.bf16.mxu0 0
      %1351 = vmatpush1.bf16.msra.mxu0 0
      %1352 = vmatprep.subr.bf16.mxu0 0
      %1353 = vmatpush1.bf16.msra.mxu0 0
      %1354 = vmatprep.subr.bf16.mxu0 0
      %1355 = vmatpush1.bf16.msra.mxu0 0
      %1356 = vmatprep.subr.bf16.mxu0 0
      %1357 = vmatpush1.bf16.msra.mxu0 0
      %1358 = vmatprep.subr.bf16.mxu0 0
      %1359 = vmatpush1.bf16.msra.mxu0 0
      %1360 = vmatprep.subr.bf16.mxu0 0
      %1361 = vmatpush1.bf16.msra.mxu0 0
      %1362 = vmatprep.subr.bf16.mxu0 0
      %1363 = vmatpush1.bf16.msra.mxu0 0
      %1364 = vmatprep.mubr.bf16.mxu0 0
      %1365 = vmatmul.mubr.bf16.gmra.mrb[0].mxu0 %v1260
      %v1366 = vpop.f32.mrb[0].mxu0
      %v1367 = vadd.f32 %v1282, %v1366
      %v1368 = vpop.f32.mrb[0].mxu0
      %v1369 = vpop.f32.mrb[0].mxu0
      %v1370 = vpop.f32.mrb[0].mxu0
      %1371 = vdwg.mxu0
      %vm1372 = vcmask 1041408
      %v1373 = vsel %vm1372, %v1367, -inf
      %1374 = vmax.xlane.f32.xlu0 %v1373
      %v1375 = vpop.xlane.xlu0 %1374
      %v1376 = vsub.f32 %v1367, %v1375
      %v1377 = vmul.f32 %v1376, 1.442695
      %v1378 = vpow.pop %v1377
      %v1379 = vsel %vm1372, %v1378, 0.0
      %1380 = vadd.xlane.f32.xlu0 %v1379
      %v1381 = vpop.xlane.xlu0 %1380
      %v1382 = vlog2.pop %v1381
      %v1383 = vmul.f32 %v1382, 0.6931472
      %v1384 = vadd.f32 %v1375, %v1383
      %v1385 = vsub.f32 %v1367, %v1384
      %1386 = vst [vmem:[%s381] sm:$0x3] %v1385
      %p1387 = scmp.lt.s32.totalorder %s22, 4
      %s1388 = scalar_select %p1387, %s22, 4
      %s1389 = smul.addr %s1388, 2
      %s1390 = scalar_lea.vmem %s11, %s1389
      // Predicated region
      $region69: #{tree2seq_forward.3} parent=63 // pred_check
        %p1391 = pneg %p276
      $region70: #{tree2seq_forward.3} parent=63 // pred_check_branch
        %1393 = sbr.rel (%p1391) target = $region72
      $region71: #{tree2seq_forward.3} parent=63 // pred_region
        _
      $region72: #{tree2seq_forward.3} parent=63 // pred_fallthru
        _
    $region64: #{tree2seq_forward.3} parent=5 // pred_fallthru
      _
    %p1394 = scmp.le.s32.totalorder 2, %s17
    // Predicated region
    $region73: #{tree2seq_forward.3} parent=5 // pred_check
      %p1395 = pneg %p1394
    $region74: #{tree2seq_forward.3} parent=5 // pred_check_branch
      %1397 = sbr.rel (%p1395) target = $region76
    $region75: #{tree2seq_forward.3} parent=5 // pred_region
      %s1398 = ssub.s32 %s17, 2
      // Predicated region
      $region77: #{tree2seq_forward.3} parent=75 // pred_check
        %p1399 = pneg %p282
      $region78: #{tree2seq_forward.3} parent=75 // pred_check_branch
        %1401 = sbr.rel (%p1399) target = $region80
      $region79: #{tree2seq_forward.3} parent=75 // pred_region
        %p1402 = scmp.lt.s32.totalorder %s23, 4
        %s1403 = scalar_select %p1402, %s23, 4
        %s1404 = smul.addr %s1403, 2
        %s1405 = scalar_lea.vmem %s11, %s1404
      $region80: #{tree2seq_forward.3} parent=75 // pred_fallthru
        _
    $region76: #{tree2seq_forward.3} parent=5 // pred_fallthru
      _
  $region6: #{tree2seq_forward.3} parent=0 // loop_footer
    %s21 = sadd.s32 1, %s17
  $region7: #{tree2seq_forward.3} parent=0 // loop_footer_branch
    %16 = sbr.rel target = $region3
  $region8: #{tree2seq_forward.3} parent=0 // loop_exit
    _

// kernel: tree2seq_forward.2
$region0: #{tree2seq_forward.2}
  #allocation0 [shape = 'u32[]', space=smem, size = 0x4, offset = 0x4, fixed_abs, tag = 'smem constant byte address 0x4 - core index']
  #allocation1 [shape = 'u32[144,128]{1,0:T(1,128)}', space=vmem, size = 0x12000, scoped, tag = 'internal scratch']
  #allocation2 [shape = 's32[1]{0}', space=sflag, size = 0x4, scoped, tag = 'scoped memory for tree2seq_forward.2']
  #allocation3 [shape = 'u8[1024]{0}', space=smem, size = 0x400, scoped, tag = 'prefetched SMEM operand 0']
  #allocation4 [shape = 'u8[1024]{0}', space=smem, size = 0x400, scoped, tag = 'prefetched SMEM operand 1']
  %s0 = inlined_call_operand.vmem [shape: s32[2,7], index: 0, kind: input, shape index: {}]
  %s1 = inlined_call_operand.vmem [shape: s32[2,7], index: 1, kind: input, shape index: {}]
  %s2 = inlined_call_operand.vmem [shape: f32[7,2,128], index: 2, kind: input, shape index: {}]
  %s3 = inlined_call_operand.hbm [shape: bf16[384,640], index: 3, kind: input, shape index: {}]
  %s4 = inlined_call_operand.vmem [shape: f32[1,640], index: 4, kind: input, shape index: {}]
  %s5 = inlined_call_operand.vmem [shape: f32[7,2,128], index: 5, kind: output, shape index: {0}]
  %s6 = inlined_call_operand.vmem [shape: f32[7,2,128], index: 6, kind: output, shape index: {1}]
  %7 = xla_tuple %s5, %s6
  %s8 = sld [smem:[#allocation0]]
  $region61: #{tree2seq_forward.2} parent=0
    _
  %s10 = ssub.s32 1, %s8
  %s11 = scalar_select 0, %s10, %s8
  %s12 = sshll.u32 %s0, 4
  %s13 = int_to_ptr.vmem [resolvable:$true] %s12
  %15 = dma.vmem_to_smem %s13, 32, [#allocation3], [#allocation2]
  %s16 = sshll.u32 %s1, 4
  %s17 = int_to_ptr.vmem [resolvable:$true] %s16
  %19 = dma.vmem_to_smem %s17, 32, [#allocation4], [#allocation2]
  %20 = dma.done [#allocation2], 64
  %21 = sfence
  $region1: #{tree2seq_forward.2} parent=0
    #allocation5 [shape = 'u8[491520]{0}', space=vmem, size = 0x78000, scoped, tag = 'input window, operand 3, single buffered']
    #allocation6 [shape = 's32[2]{0}', space=sflag, size = 0x8, scoped, tag = 'scoped memory for tree2seq_forward.2']
    %22 = vsyncpa [#allocation6], 0
    loop: start=0, step=1, limit=9
    $region2: #{tree2seq_forward.2} parent=1 // loop_pre_header
      _
    $region3: #{tree2seq_forward.2} parent=1 // loop_header
      %s24 = sphi 0, %s28
      %p25 = scmp.ge.s32.totalorder %s24, 9
      %s36 = sphi 0, %s38
      %s39 = sphi 0, %s36
      %s40 = sphi 0, %s39
      %s56 = sphi 0, %s40
      %s60 = sphi 0, %s60
      %s62 = sphi 0, %s60
      %s63 = sphi 0, %s62
      %s77 = sphi 0, %s63
      %s81 = sphi 0, %s81
      %s83 = sphi 0, %s81
      %s84 = sphi 0, %s83
      %s98 = sphi 0, %s84
      %s102 = sphi 0, %s102
      %s104 = sphi 0, %s102
      %s105 = sphi 0, %s104
      %s119 = sphi 0, %s105
      %s123 = sphi 0, %s123
      %s125 = sphi 0, %s123
      %s126 = sphi 0, %s125
      %s140 = sphi 0, %s126
    $region4: #{tree2seq_forward.2} parent=1 // loop_header_branch
      %27 = sbr.rel (%p25) target = $region8
    $region5: #{tree2seq_forward.2} parent=1 // loop_body
      %s29 = ssub.s32 %s24, 1
      %s30 = ssub.s32 %s24, 2
      %s31 = sadd.s32 %s24, 1
      %s32 = ssub.s32 6, %s24
      %s33 = ssub.s32 6, %s31
      %s34 = ssub.s32 %s32, %s33
      %p35 = scmp.eq.s32.totalorder %s34, 0
      %s37 = sadd.s32 %s36, 1
      %s38 = scalar_select %p35, %s36, %s37
      %p41 = pneg %p35
      %p42 = scmp.eq.s32.totalorder %s24, 6
      %p43 = por %p41, %p42
      %p44 = scmp.ne.s32.totalorder %s36, %s39
      %p45 = scmp.eq.s32.totalorder %s24, 0
      %p46 = por %p44, %p45
      %p47 = scmp.ne.s32.totalorder %s36, %s39
      %p48 = scmp.eq.s32.totalorder %s29, 6
      %p49 = por %p47, %p48
      %p50 = scmp.ne.s32.totalorder %s39, %s40
      %p51 = scmp.eq.s32.totalorder %s29, 0
      %p52 = por %p50, %p51
      %p53 = scmp.ne.s32.totalorder %s39, %s40
      %p54 = scmp.eq.s32.totalorder %s30, 6
      %p55 = por %p53, %p54
      %p57 = scmp.ne.s32.totalorder %s40, %s56
      %p58 = scmp.eq.s32.totalorder %s30, 0
      %p59 = por %p57, %p58
      %s61 = sadd.s32 %s60, 1
      %p64 = scmp.eq.s32.totalorder %s24, 6
      %p65 = scmp.ne.s32.totalorder %s60, %s62
      %p66 = scmp.eq.s32.totalorder %s24, 0
      %p67 = por %p65, %p66
      %p68 = scmp.ne.s32.totalorder %s60, %s62
      %p69 = scmp.eq.s32.totalorder %s29, 6
      %p70 = por %p68, %p69
      %p71 = scmp.ne.s32.totalorder %s62, %s63
      %p72 = scmp.eq.s32.totalorder %s29, 0
      %p73 = por %p71, %p72
      %p74 = scmp.ne.s32.totalorder %s62, %s63
      %p75 = scmp.eq.s32.totalorder %s30, 6
      %p76 = por %p74, %p75
      %p78 = scmp.ne.s32.totalorder %s63, %s77
      %p79 = scmp.eq.s32.totalorder %s30, 0
      %p80 = por %p78, %p79
      %s82 = sadd.s32 %s81, 1
      %p85 = scmp.eq.s32.totalorder %s24, 6
      %p86 = scmp.ne.s32.totalorder %s81, %s83
      %p87 = scmp.eq.s32.totalorder %s24, 0
      %p88 = por %p86, %p87
      %p89 = scmp.ne.s32.totalorder %s81, %s83
      %p90 = scmp.eq.s32.totalorder %s29, 6
      %p91 = por %p89, %p90
      %p92 = scmp.ne.s32.totalorder %s83, %s84
      %p93 = scmp.eq.s32.totalorder %s29, 0
      %p94 = por %p92, %p93
      %p95 = scmp.ne.s32.totalorder %s83, %s84
      %p96 = scmp.eq.s32.totalorder %s30, 6
      %p97 = por %p95, %p96
      %p99 = scmp.ne.s32.totalorder %s84, %s98
      %p100 = scmp.eq.s32.totalorder %s30, 0
      %p101 = por %p99, %p100
      %s103 = sadd.s32 %s102, 1
      %p106 = scmp.eq.s32.totalorder %s24, 6
      %p107 = scmp.ne.s32.totalorder %s102, %s104
      %p108 = scmp.eq.s32.totalorder %s24, 0
      %p109 = por %p107, %p108
      %p110 = scmp.ne.s32.totalorder %s102, %s104
      %p111 = scmp.eq.s32.totalorder %s29, 6
      %p112 = por %p110, %p111
      %p113 = scmp.ne.s32.totalorder %s104, %s105
      %p114 = scmp.eq.s32.totalorder %s29, 0
      %p115 = por %p113, %p114
      %p116 = scmp.ne.s32.totalorder %s104, %s105
      %p117 = scmp.eq.s32.totalorder %s30, 6
      %p118 = por %p116, %p117
      %p120 = scmp.ne.s32.totalorder %s105, %s119
      %p121 = scmp.eq.s32.totalorder %s30, 0
      %p122 = por %p120, %p121
      %s124 = sadd.s32 %s123, 1
      %p127 = scmp.eq.s32.totalorder %s24, 6
      %p128 = scmp.ne.s32.totalorder %s123, %s125
      %p129 = scmp.eq.s32.totalorder %s24, 0
      %p130 = por %p128, %p129
      %p131 = scmp.ne.s32.totalorder %s123, %s125
      %p132 = scmp.eq.s32.totalorder %s29, 6
      %p133 = por %p131, %p132
      %p134 = scmp.ne.s32.totalorder %s125, %s126
      %p135 = scmp.eq.s32.totalorder %s29, 0
      %p136 = por %p134, %p135
      %p137 = scmp.ne.s32.totalorder %s125, %s126
      %p138 = scmp.eq.s32.totalorder %s30, 6
      %p139 = por %p137, %p138
      %p141 = scmp.ne.s32.totalorder %s126, %s140
      %p142 = scmp.eq.s32.totalorder %s30, 0
      %p143 = por %p141, %p142
      %p144 = scmp.le.s32.totalorder 1, %s24
      %p145 = scmp.lt.s32.totalorder %s24, 8
      %p146 = pnand %p144, %p145
      %p147 = pneg %p146
      // Predicated region
      $region9: #{tree2seq_forward.2} parent=5 // pred_check
        _
      $region10: #{tree2seq_forward.2} parent=5 // pred_check_branch
        %149 = sbr.rel (%p146) target = $region12
      $region11: #{tree2seq_forward.2} parent=5 // pred_region
        %s150 = ssub.s32 %s24, 1
        // Predicated region
        $region13: #{tree2seq_forward.2} parent=11 // pred_check
          %p151 = pneg %p73
        $region14: #{tree2seq_forward.2} parent=11 // pred_check_branch
          %153 = sbr.rel (%p151) target = $region16
        $region15: #{tree2seq_forward.2} parent=11 // pred_region
          %s155 = ssub.s32 15360, 15360
          %156 = vsyncadd [#allocation6], %s155
          %s157 = sshll.u32 [#allocation5], 4
          %s158 = int_to_ptr.vmem [resolvable:$true] %s157
          %163 = dma.hbm_to_vmem [thread:$0]  %s3, 15360, %s158, [#allocation6], 320, 320, 20
        $region16: #{tree2seq_forward.2} parent=11 // pred_fallthru
          _
        // Predicated region
        $region17: #{tree2seq_forward.2} parent=11 // pred_check
          %p164 = pneg %p94
        $region18: #{tree2seq_forward.2} parent=11 // pred_check_branch
          %166 = sbr.rel (%p164) target = $region20
        $region19: #{tree2seq_forward.2} parent=11 // pred_region
          _
        $region20: #{tree2seq_forward.2} parent=11 // pred_fallthru
          _
      $region12: #{tree2seq_forward.2} parent=5 // pred_fallthru
        _
      %p167 = scmp.lt.s32.totalorder %s24, 7
      // Predicated region
      $region21: #{tree2seq_forward.2} parent=5 // pred_check
        %p168 = pneg %p167
      $region22: #{tree2seq_forward.2} parent=5 // pred_check_branch
        %170 = sbr.rel (%p168) target = $region24
      $region23: #{tree2seq_forward.2} parent=5 // pred_region
        // Predicated region
        $region25: #{tree2seq_forward.2} parent=23 // pred_check
          %p171 = pneg %p46
        $region26: #{tree2seq_forward.2} parent=23 // pred_check_branch
          %173 = sbr.rel (%p171) target = $region28
        $region27: #{tree2seq_forward.2} parent=23 // pred_region
          %s174 = ssub.s32 6, %s24
          %p175 = scmp.lt.s32.totalorder %s174, 6
          %s176 = scalar_select %p175, %s174, 6
          %s177 = smul.addr %s176, 2
          %s178 = scalar_lea.vmem %s2, %s177
          %s179 = ssub.s32 6, %s24
        $region28: #{tree2seq_forward.2} parent=23 // pred_fallthru
          _
      $region24: #{tree2seq_forward.2} parent=5 // pred_fallthru
        _
      %p180 = scmp.le.s32.totalorder 1, %s24
      %p181 = scmp.lt.s32.totalorder %s24, 8
      %p182 = pnand %p180, %p181
      %p183 = pneg %p182
      // Predicated region
      $region29: #{tree2seq_forward.2} parent=5 // pred_check
        _
      $region30: #{tree2seq_forward.2} parent=5 // pred_check_branch
        %185 = sbr.rel (%p182) target = $region32
      $region31: #{tree2seq_forward.2} parent=5 // pred_region
        %s186 = ssub.s32 %s24, 1
        // Predicated region
        $region33: #{tree2seq_forward.2} parent=31 // pred_check
          %p187 = pneg %p73
        $region34: #{tree2seq_forward.2} parent=31 // pred_check_branch
          %189 = sbr.rel (%p187) target = $region36
        $region35: #{tree2seq_forward.2} parent=31 // pred_region
          %190 = dma.done [#allocation6], 15360
        $region36: #{tree2seq_forward.2} parent=31 // pred_fallthru
          _
        %s191 = ssub.s32 6, %s29
        %p192 = scmp.lt.s32.totalorder %s191, 6
        %s193 = scalar_select %p192, %s191, 6
        %s194 = smul.addr %s193, 2
        %s195 = scalar_lea.vmem %s2, %s194
        %p196 = pneg %p52
        %p197 = pneg %p49
        %p198 = pneg %p73
        %p199 = pneg %p70
        %p200 = pneg %p94
        %p201 = pneg %p91
        %p202 = pneg %p115
        %p203 = pneg %p112
        %p204 = pneg %p136
        %p205 = pneg %p133
        %s206 = ssub.s32 6, %s29
        %p207 = scmp.lt.s32.totalorder %s206, 6
        %s208 = scalar_select %p207, %s206, 6
        %s209 = smul.addr %s208, 2
        %s210 = scalar_lea.vmem %s2, %s209
        %s211 = ssub.s32 6, %s29
        %s213 = ssub.s32 6, %s29
        %p214 = scmp.eq.s32.totalorder %s29, 0
        // Predicated region
        $region37: #{tree2seq_forward.2} parent=31 // pred_check
          %p215 = pneg %p214
        $region38: #{tree2seq_forward.2} parent=31 // pred_check_branch
          %217 = sbr.rel (%p215) target = $region40
        $region39: #{tree2seq_forward.2} parent=31 // pred_region
          %218 = vst [vmem:[%s5] sm:$0x3] 0.0
          %219 = vst [vmem:[%s5 + $0x2] sm:$0x3] 0.0
          %220 = vst [vmem:[%s5 + $0x4] sm:$0x3] 0.0
          %221 = vst [vmem:[%s5 + $0x6] sm:$0x3] 0.0
          %222 = vst [vmem:[%s5 + $0x8] sm:$0x3] 0.0
          %223 = vst [vmem:[%s5 + $0xa] sm:$0x3] 0.0
          %224 = vst [vmem:[%s5 + $0xc] sm:$0x3] 0.0
          %225 = vst [vmem:[%s6] sm:$0x3] 0.0
          %226 = vst [vmem:[%s6 + $0x2] sm:$0x3] 0.0
          %227 = vst [vmem:[%s6 + $0x4] sm:$0x3] 0.0
          %228 = vst [vmem:[%s6 + $0x6] sm:$0x3] 0.0
          %229 = vst [vmem:[%s6 + $0x8] sm:$0x3] 0.0
          %230 = vst [vmem:[%s6 + $0xa] sm:$0x3] 0.0
          %231 = vst [vmem:[%s6 + $0xc] sm:$0x3] 0.0
        $region40: #{tree2seq_forward.2} parent=31 // pred_fallthru
          _
        %v232 = vld [vmem:[%s210] sm:$0x3]
        %s233 = sld [smem:[#allocation3 + %s213]]
        %s234 = sld [smem:[#allocation4 + %s213]]
        %p235 = scmp.gt.s32.totalorder %s233, 0
        %s236 = scalar_select %p235, %s233, 0
        %p237 = scmp.gt.s32.totalorder %s234, 0
        %s238 = scalar_select %p237, %s234, 0
        %p239 = scmp.ge.s32.totalorder %s233, 0
        %s240 = scalar_select %p239, 1, 0
        %s241 = scvt.s32.f32 %s240
        %p242 = scmp.ge.s32.totalorder %s234, 0
        %s243 = scalar_select %p242, 1, 0
        %s244 = scvt.s32.f32 %s243
        %s245 = smul.u32 %s236, 2
        %s246 = scalar_lea.vmem %s5, %s245
        %v247 = vld [vmem:[%s246] sm:$0x3]
        %v248 = vstv %s241
        %v249 = vmul.f32 %v247, %v248
        %s250 = scalar_lea.vmem %s6, %s245
        %v251 = vld [vmem:[%s250] sm:$0x3]
        %v252 = vmul.f32 %v251, %v248
        %s253 = smul.u32 %s238, 2
        %s254 = scalar_lea.vmem %s5, %s253
        %v255 = vld [vmem:[%s254] sm:$0x3]
        %v256 = vstv %s244
        %v257 = vmul.f32 %v255, %v256
        %s258 = scalar_lea.vmem %s6, %s253
        %v259 = vld [vmem:[%s258] sm:$0x3]
        %v260 = vmul.f32 %v259, %v256
        %s261 = sshra.s32 %s213, 7
        %s262 = sand.u32 %s213, 127
        %s263 = sadd.s32 %s261, 1
        %s264 = smul.u32 %s263, 128
        %s265 = sshra.s32 %s213, 7
        %s266 = sand.u32 %s213, 127
        %s267 = sadd.s32 %s264, %s266
        %s268 = sld [smem:[#allocation3 + %s267]]
        %s269 = sld [smem:[#allocation4 + %s267]]
        %p270 = scmp.gt.s32.totalorder %s268, 0
        %s271 = scalar_select %p270, %s268, 0
        %p272 = scmp.gt.s32.totalorder %s269, 0
        %s273 = scalar_select %p272, %s269, 0
        %p274 = scmp.ge.s32.totalorder %s268, 0
        %s275 = scalar_select %p274, 1, 0
        %s276 = scvt.s32.f32 %s275
        %p277 = scmp.ge.s32.totalorder %s269, 0
        %s278 = scalar_select %p277, 1, 0
        %s279 = scvt.s32.f32 %s278
        %s280 = smul.u32 %s271, 2
        %s281 = scalar_lea.vmem %s5, %s280
        %v282 = vld [vmem:[%s281] sm:$0x3]
        %v283 = vstv %s276
        %v284 = vmul.f32 %v282, %v283
        %s285 = scalar_lea.vmem %s6, %s280
        %v286 = vld [vmem:[%s285] sm:$0x3]
        %v287 = vmul.f32 %v286, %v283
        %s288 = smul.u32 %s273, 2
        %s289 = scalar_lea.vmem %s5, %s288
        %v290 = vld [vmem:[%s289] sm:$0x3]
        %v291 = vstv %s279
        %v292 = vmul.f32 %v290, %v291
        %s293 = scalar_lea.vmem %s6, %s288
        %v294 = vld [vmem:[%s293] sm:$0x3]
        %v295 = vmul.f32 %v294, %v291
        %vm296 = vcmask 1040384
        %v297 = vsel %vm296, %v249, %v284
        %v298 = vsel %vm296, %v257, %v292
        %v299 = vsel %vm296, %v252, %v287
        %v300 = vsel %vm296, %v260, %v295
        %v301 = vpack.c.bf16 %v232, %v232
        %v302 = vpack.c.bf16 %v297, %v297
        %v303 = vpack.c.bf16 %v298, %v298
        %v304 = vld [vmem:[#allocation5] sm:$0xff]
        %v305 = vld [vmem:[#allocation5 + $0x8] sm:$0xff]
        %v306 = vld [vmem:[#allocation5 + $0x10] sm:$0xf]
        %v307 = vld [vmem:[#allocation5 + $0x14] sm:$0xff]
        %v308 = vld [vmem:[#allocation5 + $0x1c] sm:$0xff]
        %v309 = vld [vmem:[#allocation5 + $0x24] sm:$0xf]
        %v310 = vld [vmem:[#allocation5 + $0x28] sm:$0xff]
        %v311 = vld [vmem:[#allocation5 + $0x30] sm:$0xff]
        %v312 = vld [vmem:[#allocation5 + $0x38] sm:$0xf]
        %v313 = vld [vmem:[#allocation5 + $0x3c] sm:$0xff]
        %v314 = vld [vmem:[#allocation5 + $0x44] sm:$0xff]
        %v315 = vld [vmem:[#allocation5 + $0x4c] sm:$0xf]
        %v316 = vld [vmem:[#allocation5 + $0x50] sm:$0xff]
        %v317 = vld [vmem:[#allocation5 + $0x58] sm:$0xff]
        %v318 = vld [vmem:[#allocation5 + $0x60] sm:$0xf]
        %v319 = vld [vmem:[#allocation5 + $0x64] sm:$0xff]
        %v320 = vld [vmem:[#allocation5 + $0x6c] sm:$0xff]
        %v321 = vld [vmem:[#allocation5 + $0x74] sm:$0xf]
        %v322 = vld [vmem:[#allocation5 + $0x78] sm:$0xff]
        %v323 = vld [vmem:[#allocation5 + $0x80] sm:$0xff]
        %v324 = vld [vmem:[#allocation5 + $0x88] sm:$0xf]
        %v325 = vld [vmem:[#allocation5 + $0x8c] sm:$0xff]
        %v326 = vld [vmem:[#allocation5 + $0x94] sm:$0xff]
        %v327 = vld [vmem:[#allocation5 + $0x9c] sm:$0xf]
        %v328 = vld [vmem:[#allocation5 + $0xa0] sm:$0xff]
        %v329 = vld [vmem:[#allocation5 + $0xa8] sm:$0xff]
        %v330 = vld [vmem:[#allocation5 + $0xb0] sm:$0xf]
        %v331 = vld [vmem:[#allocation5 + $0xb4] sm:$0xff]
        %v332 = vld [vmem:[#allocation5 + $0xbc] sm:$0xff]
        %v333 = vld [vmem:[#allocation5 + $0xc4] sm:$0xf]
        %v334 = vld [vmem:[#allocation5 + $0xc8] sm:$0xff]
        %v335 = vld [vmem:[#allocation5 + $0xd0] sm:$0xff]
        %v336 = vld [vmem:[#allocation5 + $0xd8] sm:$0xf]
        %v337 = vld [vmem:[#allocation5 + $0xdc] sm:$0xff]
        %v338 = vld [vmem:[#allocation5 + $0xe4] sm:$0xff]
        %v339 = vld [vmem:[#allocation5 + $0xec] sm:$0xf]
        %v340 = vld [vmem:[#allocation5 + $0xf0] sm:$0xff]
        %v341 = vld [vmem:[#allocation5 + $0xf8] sm:$0xff]
        %v342 = vld [vmem:[#allocation5 + $0x100] sm:$0xf]
        %v343 = vld [vmem:[#allocation5 + $0x104] sm:$0xff]
        %v344 = vld [vmem:[#allocation5 + $0x10c] sm:$0xff]
        %v345 = vld [vmem:[#allocation5 + $0x114] sm:$0xf]
        %v346 = vld [vmem:[#allocation5 + $0x118] sm:$0xff]
        %v347 = vld [vmem:[#allocation5 + $0x120] sm:$0xff]
        %v348 = vld [vmem:[#allocation5 + $0x128] sm:$0xf]
        %v349 = vld [vmem:[#allocation5 + $0x12c] sm:$0xff]
        %v350 = vld [vmem:[#allocation5 + $0x134] sm:$0xff]
        %v351 = vld [vmem:[#allocation5 + $0x13c] sm:$0xf]
        %v352 = vld [vmem:[#allocation5 + $0x140] sm:$0xff]
        %v353 = vld [vmem:[#allocation5 + $0x148] sm:$0xff]
        %v354 = vld [vmem:[#allocation5 + $0x150] sm:$0xf]
        %v355 = vld [vmem:[#allocation5 + $0x154] sm:$0xff]
        %v356 = vld [vmem:[#allocation5 + $0x15c] sm:$0xff]
        %v357 = vld [vmem:[#allocation5 + $0x164] sm:$0xf]
        %v358 = vld [vmem:[#allocation5 + $0x168] sm:$0xff]
        %v359 = vld [vmem:[#allocation5 + $0x170] sm:$0xff]
        %v360 = vld [vmem:[#allocation5 + $0x178] sm:$0xf]
        %v361 = vld [vmem:[#allocation5 + $0x17c] sm:$0xff]
        %v362 = vld [vmem:[#allocation5 + $0x184] sm:$0xff]
        %v363 = vld [vmem:[#allocation5 + $0x18c] sm:$0xf]
        %v364 = vld [vmem:[#allocation5 + $0x190] sm:$0xff]
        %v365 = vld [vmem:[#allocation5 + $0x198] sm:$0xff]
        %v366 = vld [vmem:[#allocation5 + $0x1a0] sm:$0xf]
        %v367 = vld [vmem:[#allocation5 + $0x1a4] sm:$0xff]
        %v368 = vld [vmem:[#allocation5 + $0x1ac] sm:$0xff]
        %v369 = vld [vmem:[#allocation5 + $0x1b4] sm:$0xf]
        %v370 = vld [vmem:[#allocation5 + $0x1b8] sm:$0xff]
        %v371 = vld [vmem:[#allocation5 + $0x1c0] sm:$0xff]
        %v372 = vld [vmem:[#allocation5 + $0x1c8] sm:$0xf]
        %v373 = vld [vmem:[#allocation5 + $0x1cc] sm:$0xff]
        %v374 = vld [vmem:[#allocation5 + $0x1d4] sm:$0xff]
        %v375 = vld [vmem:[#allocation5 + $0x1dc] sm:$0xf]
        %v376 = vld [vmem:[#allocation5 + $0x1e0] sm:$0xff]
        %v377 = vld [vmem:[#allocation5 + $0x1e8] sm:$0xff]
        %v378 = vld [vmem:[#allocation5 + $0x1f0] sm:$0xf]
        %v379 = vld [vmem:[#allocation5 + $0x1f4] sm:$0xff]
        %v380 = vld [vmem:[#allocation5 + $0x1fc] sm:$0xff]
        %v381 = vld [vmem:[#allocation5 + $0x204] sm:$0xf]
        %v382 = vld [vmem:[#allocation5 + $0x208] sm:$0xff]
        %v383 = vld [vmem:[#allocation5 + $0x210] sm:$0xff]
        %v384 = vld [vmem:[#allocation5 + $0x218] sm:$0xf]
        %v385 = vld [vmem:[#allocation5 + $0x21c] sm:$0xff]
        %v386 = vld [vmem:[#allocation5 + $0x224] sm:$0xff]
        %v387 = vld [vmem:[#allocation5 + $0x22c] sm:$0xf]
        %v388 = vld [vmem:[#allocation5 + $0x230] sm:$0xff]
        %v389 = vld [vmem:[#allocation5 + $0x238] sm:$0xff]
        %v390 = vld [vmem:[#allocation5 + $0x240] sm:$0xf]
        %v391 = vld [vmem:[#allocation5 + $0x244] sm:$0xff]
        %v392 = vld [vmem:[#allocation5 + $0x24c] sm:$0xff]
        %v393 = vld [vmem:[#allocation5 + $0x254] sm:$0xf]
        %v394 = vld [vmem:[#allocation5 + $0x258] sm:$0xff]
        %v395 = vld [vmem:[#allocation5 + $0x260] sm:$0xff]
        %v396 = vld [vmem:[#allocation5 + $0x268] sm:$0xf]
        %v397 = vld [vmem:[#allocation5 + $0x26c] sm:$0xff]
        %v398 = vld [vmem:[#allocation5 + $0x274] sm:$0xff]
        %v399 = vld [vmem:[#allocation5 + $0x27c] sm:$0xf]
        %v400 = vld [vmem:[#allocation5 + $0x280] sm:$0xff]
        %v401 = vld [vmem:[#allocation5 + $0x288] sm:$0xff]
        %v402 = vld [vmem:[#allocation5 + $0x290] sm:$0xf]
        %v403 = vld [vmem:[#allocation5 + $0x294] sm:$0xff]
        %v404 = vld [vmem:[#allocation5 + $0x29c] sm:$0xff]
        %v405 = vld [vmem:[#allocation5 + $0x2a4] sm:$0xf]
        %v406 = vld [vmem:[#allocation5 + $0x2a8] sm:$0xff]
        %v407 = vld [vmem:[#allocation5 + $0x2b0] sm:$0xff]
        %v408 = vld [vmem:[#allocation5 + $0x2b8] sm:$0xf]
        %v409 = vld [vmem:[#allocation5 + $0x2bc] sm:$0xff]
        %v410 = vld [vmem:[#allocation5 + $0x2c4] sm:$0xff]
        %v411 = vld [vmem:[#allocation5 + $0x2cc] sm:$0xf]
        %v412 = vld [vmem:[#allocation5 + $0x2d0] sm:$0xff]
        %v413 = vld [vmem:[#allocation5 + $0x2d8] sm:$0xff]
        %v414 = vld [vmem:[#allocation5 + $0x2e0] sm:$0xf]
        %v415 = vld [vmem:[#allocation5 + $0x2e4] sm:$0xff]
        %v416 = vld [vmem:[#allocation5 + $0x2ec] sm:$0xff]
        %v417 = vld [vmem:[#allocation5 + $0x2f4] sm:$0xf]
        %v418 = vld [vmem:[#allocation5 + $0x2f8] sm:$0xff]
        %v419 = vld [vmem:[#allocation5 + $0x300] sm:$0xff]
        %v420 = vld [vmem:[#allocation5 + $0x308] sm:$0xf]
        %v421 = vld [vmem:[#allocation5 + $0x30c] sm:$0xff]
        %v422 = vld [vmem:[#allocation5 + $0x314] sm:$0xff]
        %v423 = vld [vmem:[#allocation5 + $0x31c] sm:$0xf]
        %v424 = vld [vmem:[#allocation5 + $0x320] sm:$0xff]
        %v425 = vld [vmem:[#allocation5 + $0x328] sm:$0xff]
        %v426 = vld [vmem:[#allocation5 + $0x330] sm:$0xf]
        %v427 = vld [vmem:[#allocation5 + $0x334] sm:$0xff]
        %v428 = vld [vmem:[#allocation5 + $0x33c] sm:$0xff]
        %v429 = vld [vmem:[#allocation5 + $0x344] sm:$0xf]
        %v430 = vld [vmem:[#allocation5 + $0x348] sm:$0xff]
        %v431 = vld [vmem:[#allocation5 + $0x350] sm:$0xff]
        %v432 = vld [vmem:[#allocation5 + $0x358] sm:$0xf]
        %v433 = vld [vmem:[#allocation5 + $0x35c] sm:$0xff]
        %v434 = vld [vmem:[#allocation5 + $0x364] sm:$0xff]
        %v435 = vld [vmem:[#allocation5 + $0x36c] sm:$0xf]
        %v436 = vld [vmem:[#allocation5 + $0x370] sm:$0xff]
        %v437 = vld [vmem:[#allocation5 + $0x378] sm:$0xff]
        %v438 = vld [vmem:[#allocation5 + $0x380] sm:$0xf]
        %v439 = vld [vmem:[#allocation5 + $0x384] sm:$0xff]
        %v440 = vld [vmem:[#allocation5 + $0x38c] sm:$0xff]
        %v441 = vld [vmem:[#allocation5 + $0x394] sm:$0xf]
        %v442 = vld [vmem:[#allocation5 + $0x398] sm:$0xff]
        %v443 = vld [vmem:[#allocation5 + $0x3a0] sm:$0xff]
        %v444 = vld [vmem:[#allocation5 + $0x3a8] sm:$0xf]
        %v445 = vld [vmem:[#allocation5 + $0x3ac] sm:$0xff]
        %v446 = vld [vmem:[#allocation5 + $0x3b4] sm:$0xff]
        %v447 = vld [vmem:[#allocation5 + $0x3bc] sm:$0xf]
        %v448 = vld [vmem:[%s4] sm:$0x1f]
        %v450 = vlaneseq
        %v451 = vshrl.u32 %v450, 7
        %v452 = vsub.s32 0, %v451
        %v453 = vrot.slane %v448, %v452
        %v454 = vlaneseq
        %v455 = vshrl.u32 %v454, 7
        %v456 = vsub.s32 1, %v455
        %v457 = vrot.slane %v448, %v456
        %v458 = vlaneseq
        %v459 = vshrl.u32 %v458, 7
        %v460 = vsub.s32 2, %v459
        %v461 = vrot.slane %v448, %v460
        %v462 = vlaneseq
        %v463 = vshrl.u32 %v462, 7
        %v464 = vsub.s32 3, %v463
        %v465 = vrot.slane %v448, %v464
        %v466 = vlaneseq
        %v467 = vshrl.u32 %v466, 7
        %v468 = vsub.s32 4, %v467
        %v469 = vrot.slane %v448, %v468
        %v619 = vunpack.c.l.b16 %v304
        %v620 = vunpack.c.h.b16 %v304
        %v621 = vunpack.c.l.b16 %v305
        %v622 = vunpack.c.h.b16 %v305
        %v623 = vunpack.c.l.b16 %v306
        %v624 = vunpack.c.l.b16 %v307
        %v625 = vunpack.c.h.b16 %v307
        %v626 = vunpack.c.l.b16 %v308
        %v627 = vunpack.c.h.b16 %v308
        %v628 = vunpack.c.l.b16 %v309
        %v629 = vunpack.c.l.b16 %v310
        %v630 = vunpack.c.h.b16 %v310
        %v631 = vunpack.c.l.b16 %v311
        %v632 = vunpack.c.h.b16 %v311
        %v633 = vunpack.c.l.b16 %v312
        %v634 = vunpack.c.l.b16 %v313
        %v635 = vunpack.c.h.b16 %v313
        %v636 = vunpack.c.l.b16 %v314
        %v637 = vunpack.c.h.b16 %v314
        %v638 = vunpack.c.l.b16 %v315
        %v639 = vunpack.c.l.b16 %v316
        %v640 = vunpack.c.h.b16 %v316
        %v641 = vunpack.c.l.b16 %v317
        %v642 = vunpack.c.h.b16 %v317
        %v643 = vunpack.c.l.b16 %v318
        %v644 = vunpack.c.l.b16 %v319
        %v645 = vunpack.c.h.b16 %v319
        %v646 = vunpack.c.l.b16 %v320
        %v647 = vunpack.c.h.b16 %v320
        %v648 = vunpack.c.l.b16 %v321
        %v649 = vunpack.c.l.b16 %v322
        %v650 = vunpack.c.h.b16 %v322
        %v651 = vunpack.c.l.b16 %v323
        %v652 = vunpack.c.h.b16 %v323
        %v653 = vunpack.c.l.b16 %v324
        %v654 = vunpack.c.l.b16 %v325
        %v655 = vunpack.c.h.b16 %v325
        %v656 = vunpack.c.l.b16 %v326
        %v657 = vunpack.c.h.b16 %v326
        %v658 = vunpack.c.l.b16 %v327
        %v659 = vunpack.c.l.b16 %v328
        %v660 = vunpack.c.h.b16 %v328
        %v661 = vunpack.c.l.b16 %v329
        %v662 = vunpack.c.h.b16 %v329
        %v663 = vunpack.c.l.b16 %v330
        %v664 = vunpack.c.l.b16 %v331
        %v665 = vunpack.c.h.b16 %v331
        %v666 = vunpack.c.l.b16 %v332
        %v667 = vunpack.c.h.b16 %v332
        %v668 = vunpack.c.l.b16 %v333
        %v669 = vunpack.c.l.b16 %v334
        %v670 = vunpack.c.h.b16 %v334
        %v671 = vunpack.c.l.b16 %v335
        %v672 = vunpack.c.h.b16 %v335
        %v673 = vunpack.c.l.b16 %v336
        %v674 = vunpack.c.l.b16 %v337
        %v675 = vunpack.c.h.b16 %v337
        %v676 = vunpack.c.l.b16 %v338
        %v677 = vunpack.c.h.b16 %v338
        %v678 = vunpack.c.l.b16 %v339
        %v679 = vunpack.c.l.b16 %v340
        %v680 = vunpack.c.h.b16 %v340
        %v681 = vunpack.c.l.b16 %v341
        %v682 = vunpack.c.h.b16 %v341
        %v683 = vunpack.c.l.b16 %v342
        %v684 = vunpack.c.l.b16 %v343
        %v685 = vunpack.c.h.b16 %v343
        %v686 = vunpack.c.l.b16 %v344
        %v687 = vunpack.c.h.b16 %v344
        %v688 = vunpack.c.l.b16 %v345
        %v689 = vunpack.c.l.b16 %v346
        %v690 = vunpack.c.h.b16 %v346
        %v691 = vunpack.c.l.b16 %v347
        %v692 = vunpack.c.h.b16 %v347
        %v693 = vunpack.c.l.b16 %v348
        %v694 = vunpack.c.l.b16 %v349
        %v695 = vunpack.c.h.b16 %v349
        %v696 = vunpack.c.l.b16 %v350
        %v697 = vunpack.c.h.b16 %v350
        %v698 = vunpack.c.l.b16 %v351
        %v699 = vunpack.c.l.b16 %v352
        %v700 = vunpack.c.h.b16 %v352
        %v701 = vunpack.c.l.b16 %v353
        %v702 = vunpack.c.h.b16 %v353
        %v703 = vunpack.c.l.b16 %v354
        %v704 = vunpack.c.l.b16 %v355
        %v705 = vunpack.c.h.b16 %v355
        %v706 = vunpack.c.l.b16 %v356
        %v707 = vunpack.c.h.b16 %v356
        %v708 = vunpack.c.l.b16 %v357
        %v709 = vunpack.c.l.b16 %v358
        %v710 = vunpack.c.h.b16 %v358
        %v711 = vunpack.c.l.b16 %v359
        %v712 = vunpack.c.h.b16 %v359
        %v713 = vunpack.c.l.b16 %v360
        %v714 = vunpack.c.l.b16 %v361
        %v715 = vunpack.c.h.b16 %v361
        %v716 = vunpack.c.l.b16 %v362
        %v717 = vunpack.c.h.b16 %v362
        %v718 = vunpack.c.l.b16 %v363
        %v719 = vunpack.c.l.b16 %v364
        %v720 = vunpack.c.h.b16 %v364
        %v721 = vunpack.c.l.b16 %v365
        %v722 = vunpack.c.h.b16 %v365
        %v723 = vunpack.c.l.b16 %v366
        %v724 = vunpack.c.l.b16 %v367
        %v725 = vunpack.c.h.b16 %v367
        %v726 = vunpack.c.l.b16 %v368
        %v727 = vunpack.c.h.b16 %v368
        %v728 = vunpack.c.l.b16 %v369
        %v729 = vunpack.c.l.b16 %v370
        %v730 = vunpack.c.h.b16 %v370
        %v731 = vunpack.c.l.b16 %v371
        %v732 = vunpack.c.h.b16 %v371
        %v733 = vunpack.c.l.b16 %v372
        %v734 = vunpack.c.l.b16 %v373
        %v735 = vunpack.c.h.b16 %v373
        %v736 = vunpack.c.l.b16 %v374
        %v737 = vunpack.c.h.b16 %v374
        %v738 = vunpack.c.l.b16 %v375
        %v739 = vunpack.c.l.b16 %v376
        %v740 = vunpack.c.h.b16 %v376
        %v741 = vunpack.c.l.b16 %v377
        %v742 = vunpack.c.h.b16 %v377
        %v743 = vunpack.c.l.b16 %v378
        %v744 = vunpack.c.l.b16 %v379
        %v745 = vunpack.c.h.b16 %v379
        %v746 = vunpack.c.l.b16 %v380
        %v747 = vunpack.c.h.b16 %v380
        %v748 = vunpack.c.l.b16 %v381
        %v749 = vunpack.c.l.b16 %v382
        %v750 = vunpack.c.h.b16 %v382
        %v751 = vunpack.c.l.b16 %v383
        %v752 = vunpack.c.h.b16 %v383
        %v753 = vunpack.c.l.b16 %v384
        %v754 = vunpack.c.l.b16 %v385
        %v755 = vunpack.c.h.b16 %v385
        %v756 = vunpack.c.l.b16 %v386
        %v757 = vunpack.c.h.b16 %v386
        %v758 = vunpack.c.l.b16 %v387
        %v759 = vunpack.c.l.b16 %v388
        %v760 = vunpack.c.h.b16 %v388
        %v761 = vunpack.c.l.b16 %v389
        %v762 = vunpack.c.h.b16 %v389
        %v763 = vunpack.c.l.b16 %v390
        %v764 = vunpack.c.l.b16 %v391
        %v765 = vunpack.c.h.b16 %v391
        %v766 = vunpack.c.l.b16 %v392
        %v767 = vunpack.c.h.b16 %v392
        %v768 = vunpack.c.l.b16 %v393
        %v769 = vunpack.c.l.b16 %v394
        %v770 = vunpack.c.h.b16 %v394
        %v771 = vunpack.c.l.b16 %v395
        %v772 = vunpack.c.h.b16 %v395
        %v773 = vunpack.c.l.b16 %v396
        %v774 = vunpack.c.l.b16 %v397
        %v775 = vunpack.c.h.b16 %v397
        %v776 = vunpack.c.l.b16 %v398
        %v777 = vunpack.c.h.b16 %v398
        %v778 = vunpack.c.l.b16 %v399
        %v779 = vunpack.c.l.b16 %v400
        %v780 = vunpack.c.h.b16 %v400
        %v781 = vunpack.c.l.b16 %v401
        %v782 = vunpack.c.h.b16 %v401
        %v783 = vunpack.c.l.b16 %v402
        %v784 = vunpack.c.l.b16 %v403
        %v785 = vunpack.c.h.b16 %v403
        %v786 = vunpack.c.l.b16 %v404
        %v787 = vunpack.c.h.b16 %v404
        %v788 = vunpack.c.l.b16 %v405
        %v789 = vunpack.c.l.b16 %v406
        %v790 = vunpack.c.h.b16 %v406
        %v791 = vunpack.c.l.b16 %v407
        %v792 = vunpack.c.h.b16 %v407
        %v793 = vunpack.c.l.b16 %v408
        %v794 = vunpack.c.l.b16 %v409
        %v795 = vunpack.c.h.b16 %v409
        %v796 = vunpack.c.l.b16 %v410
        %v797 = vunpack.c.h.b16 %v410
        %v798 = vunpack.c.l.b16 %v411
        %v799 = vunpack.c.l.b16 %v412
        %v800 = vunpack.c.h.b16 %v412
        %v801 = vunpack.c.l.b16 %v413
        %v802 = vunpack.c.h.b16 %v413
        %v803 = vunpack.c.l.b16 %v414
        %v804 = vunpack.c.l.b16 %v415
        %v805 = vunpack.c.h.b16 %v415
        %v806 = vunpack.c.l.b16 %v416
        %v807 = vunpack.c.h.b16 %v416
        %v808 = vunpack.c.l.b16 %v417
        %v809 = vunpack.c.l.b16 %v418
        %v810 = vunpack.c.h.b16 %v418
        %v811 = vunpack.c.l.b16 %v419
        %v812 = vunpack.c.h.b16 %v419
        %v813 = vunpack.c.l.b16 %v420
        %v814 = vunpack.c.l.b16 %v421
        %v815 = vunpack.c.h.b16 %v421
        %v816 = vunpack.c.l.b16 %v422
        %v817 = vunpack.c.h.b16 %v422
        %v818 = vunpack.c.l.b16 %v423
        %v819 = vunpack.c.l.b16 %v424
        %v820 = vunpack.c.h.b16 %v424
        %v821 = vunpack.c.l.b16 %v425
        %v822 = vunpack.c.h.b16 %v425
        %v823 = vunpack.c.l.b16 %v426
        %v824 = vunpack.c.l.b16 %v427
        %v825 = vunpack.c.h.b16 %v427
        %v826 = vunpack.c.l.b16 %v428
        %v827 = vunpack.c.h.b16 %v428
        %v828 = vunpack.c.l.b16 %v429
        %v829 = vunpack.c.l.b16 %v430
        %v830 = vunpack.c.h.b16 %v430
        %v831 = vunpack.c.l.b16 %v431
        %v832 = vunpack.c.h.b16 %v431
        %v833 = vunpack.c.l.b16 %v432
        %v834 = vunpack.c.l.b16 %v433
        %v835 = vunpack.c.h.b16 %v433
        %v836 = vunpack.c.l.b16 %v434
        %v837 = vunpack.c.h.b16 %v434
        %v838 = vunpack.c.l.b16 %v435
        %v839 = vunpack.c.l.b16 %v436
        %v840 = vunpack.c.h.b16 %v436
        %v841 = vunpack.c.l.b16 %v437
        %v842 = vunpack.c.h.b16 %v437
        %v843 = vunpack.c.l.b16 %v438
        %v844 = vunpack.c.l.b16 %v439
        %v845 = vunpack.c.h.b16 %v439
        %v846 = vunpack.c.l.b16 %v440
        %v847 = vunpack.c.h.b16 %v440
        %v848 = vunpack.c.l.b16 %v441
        %v849 = vunpack.c.l.b16 %v442
        %v850 = vunpack.c.h.b16 %v442
        %v851 = vunpack.c.l.b16 %v443
        %v852 = vunpack.c.h.b16 %v443
        %v853 = vunpack.c.l.b16 %v444
        %v854 = vunpack.c.l.b16 %v445
        %v855 = vunpack.c.h.b16 %v445
        %v856 = vunpack.c.l.b16 %v446
        %v857 = vunpack.c.h.b16 %v446
        %v858 = vunpack.c.l.b16 %v447
        %v859 = vpack.c.b16 %v624, %v619
        %v860 = vpack.c.b16 %v625, %v620
        %v861 = vpack.c.b16 %v626, %v621
        %v862 = vpack.c.b16 %v627, %v622
        %v863 = vpack.c.b16 %v628, %v623
        %v864 = vpack.c.b16 %v634, %v629
        %v865 = vpack.c.b16 %v635, %v630
        %v866 = vpack.c.b16 %v636, %v631
        %v867 = vpack.c.b16 %v637, %v632
        %v868 = vpack.c.b16 %v638, %v633
        %v869 = vpack.c.b16 %v644, %v639
        %v870 = vpack.c.b16 %v645, %v640
        %v871 = vpack.c.b16 %v646, %v641
        %v872 = vpack.c.b16 %v647, %v642
        %v873 = vpack.c.b16 %v648, %v643
        %v874 = vpack.c.b16 %v654, %v649
        %v875 = vpack.c.b16 %v655, %v650
        %v876 = vpack.c.b16 %v656, %v651
        %v877 = vpack.c.b16 %v657, %v652
        %v878 = vpack.c.b16 %v658, %v653
        %v879 = vpack.c.b16 %v664, %v659
        %v880 = vpack.c.b16 %v665, %v660
        %v881 = vpack.c.b16 %v666, %v661
        %v882 = vpack.c.b16 %v667, %v662
        %v883 = vpack.c.b16 %v668, %v663
        %v884 = vpack.c.b16 %v674, %v669
        %v885 = vpack.c.b16 %v675, %v670
        %v886 = vpack.c.b16 %v676, %v671
        %v887 = vpack.c.b16 %v677, %v672
        %v888 = vpack.c.b16 %v678, %v673
        %v889 = vpack.c.b16 %v684, %v679
        %v890 = vpack.c.b16 %v685, %v680
        %v891 = vpack.c.b16 %v686, %v681
        %v892 = vpack.c.b16 %v687, %v682
        %v893 = vpack.c.b16 %v688, %v683
        %v894 = vpack.c.b16 %v694, %v689
        %v895 = vpack.c.b16 %v695, %v690
        %v896 = vpack.c.b16 %v696, %v691
        %v897 = vpack.c.b16 %v697, %v692
        %v898 = vpack.c.b16 %v698, %v693
        %v899 = vpack.c.b16 %v704, %v699
        %v900 = vpack.c.b16 %v705, %v700
        %v901 = vpack.c.b16 %v706, %v701
        %v902 = vpack.c.b16 %v707, %v702
        %v903 = vpack.c.b16 %v708, %v703
        %v904 = vpack.c.b16 %v714, %v709
        %v905 = vpack.c.b16 %v715, %v710
        %v906 = vpack.c.b16 %v716, %v711
        %v907 = vpack.c.b16 %v717, %v712
        %v908 = vpack.c.b16 %v718, %v713
        %v909 = vpack.c.b16 %v724, %v719
        %v910 = vpack.c.b16 %v725, %v720
        %v911 = vpack.c.b16 %v726, %v721
        %v912 = vpack.c.b16 %v727, %v722
        %v913 = vpack.c.b16 %v728, %v723
        %v914 = vpack.c.b16 %v734, %v729
        %v915 = vpack.c.b16 %v735, %v730
        %v916 = vpack.c.b16 %v736, %v731
        %v917 = vpack.c.b16 %v737, %v732
        %v918 = vpack.c.b16 %v738, %v733
        %v919 = vpack.c.b16 %v744, %v739
        %v920 = vpack.c.b16 %v745, %v740
        %v921 = vpack.c.b16 %v746, %v741
        %v922 = vpack.c.b16 %v747, %v742
        %v923 = vpack.c.b16 %v748, %v743
        %v924 = vpack.c.b16 %v754, %v749
        %v925 = vpack.c.b16 %v755, %v750
        %v926 = vpack.c.b16 %v756, %v751
        %v927 = vpack.c.b16 %v757, %v752
        %v928 = vpack.c.b16 %v758, %v753
        %v929 = vpack.c.b16 %v764, %v759
        %v930 = vpack.c.b16 %v765, %v760
        %v931 = vpack.c.b16 %v766, %v761
        %v932 = vpack.c.b16 %v767, %v762
        %v933 = vpack.c.b16 %v768, %v763
        %v934 = vpack.c.b16 %v774, %v769
        %v935 = vpack.c.b16 %v775, %v770
        %v936 = vpack.c.b16 %v776, %v771
        %v937 = vpack.c.b16 %v777, %v772
        %v938 = vpack.c.b16 %v778, %v773
        %v939 = vpack.c.b16 %v784, %v779
        %v940 = vpack.c.b16 %v785, %v780
        %v941 = vpack.c.b16 %v786, %v781
        %v942 = vpack.c.b16 %v787, %v782
        %v943 = vpack.c.b16 %v788, %v783
        %v944 = vpack.c.b16 %v794, %v789
        %v945 = vpack.c.b16 %v795, %v790
        %v946 = vpack.c.b16 %v796, %v791
        %v947 = vpack.c.b16 %v797, %v792
        %v948 = vpack.c.b16 %v798, %v793
        %v949 = vpack.c.b16 %v804, %v799
        %v950 = vpack.c.b16 %v805, %v800
        %v951 = vpack.c.b16 %v806, %v801
        %v952 = vpack.c.b16 %v807, %v802
        %v953 = vpack.c.b16 %v808, %v803
        %v954 = vpack.c.b16 %v814, %v809
        %v955 = vpack.c.b16 %v815, %v810
        %v956 = vpack.c.b16 %v816, %v811
        %v957 = vpack.c.b16 %v817, %v812
        %v958 = vpack.c.b16 %v818, %v813
        %v959 = vpack.c.b16 %v824, %v819
        %v960 = vpack.c.b16 %v825, %v820
        %v961 = vpack.c.b16 %v826, %v821
        %v962 = vpack.c.b16 %v827, %v822
        %v963 = vpack.c.b16 %v828, %v823
        %v964 = vpack.c.b16 %v834, %v829
        %v965 = vpack.c.b16 %v835, %v830
        %v966 = vpack.c.b16 %v836, %v831
        %v967 = vpack.c.b16 %v837, %v832
        %v968 = vpack.c.b16 %v838, %v833
        %v969 = vpack.c.b16 %v844, %v839
        %v970 = vpack.c.b16 %v845, %v840
        %v971 = vpack.c.b16 %v846, %v841
        %v972 = vpack.c.b16 %v847, %v842
        %v973 = vpack.c.b16 %v848, %v843
        %v974 = vpack.c.b16 %v854, %v849
        %v975 = vpack.c.b16 %v855, %v850
        %v976 = vpack.c.b16 %v856, %v851
        %v977 = vpack.c.b16 %v857, %v852
        %v978 = vpack.c.b16 %v858, %v853
        %1099 = vmatprep.subr.bf16.mxu0 %v860
        %1100 = vmatpush1.bf16.msra.mxu0 %v859
        %1101 = vmatprep.subr.bf16.mxu0 %v865
        %1102 = vmatpush1.bf16.msra.mxu0 %v864
        %1103 = vmatprep.subr.bf16.mxu0 %v870
        %1104 = vmatpush1.bf16.msra.mxu0 %v869
        %1105 = vmatprep.subr.bf16.mxu0 %v875
        %1106 = vmatpush1.bf16.msra.mxu0 %v874
        %1107 = vmatprep.subr.bf16.mxu0 %v880
        %1108 = vmatpush1.bf16.msra.mxu0 %v879
        %1109 = vmatprep.subr.bf16.mxu0 %v885
        %1110 = vmatpush1.bf16.msra.mxu0 %v884
        %1111 = vmatprep.subr.bf16.mxu0 %v890
        %1112 = vmatpush1.bf16.msra.mxu0 %v889
        %1113 = vmatprep.subr.bf16.mxu0 %v895
        %1114 = vmatpush1.bf16.msra.mxu0 %v894
        %1115 = vmatprep.subr.bf16.mxu0 %v900
        %1116 = vmatpush1.bf16.msra.mxu0 %v899
        %1117 = vmatprep.subr.bf16.mxu0 %v905
        %1118 = vmatpush1.bf16.msra.mxu0 %v904
        %1119 = vmatprep.subr.bf16.mxu0 %v910
        %1120 = vmatpush1.bf16.msra.mxu0 %v909
        %1121 = vmatprep.subr.bf16.mxu0 %v915
        %1122 = vmatpush1.bf16.msra.mxu0 %v914
        %1123 = vmatprep.subr.bf16.mxu0 %v920
        %1124 = vmatpush1.bf16.msra.mxu0 %v919
        %1125 = vmatprep.subr.bf16.mxu0 %v925
        %1126 = vmatpush1.bf16.msra.mxu0 %v924
        %1127 = vmatprep.subr.bf16.mxu0 %v930
        %1128 = vmatpush1.bf16.msra.mxu0 %v929
        %1129 = vmatprep.subr.bf16.mxu0 %v935
        %1130 = vmatpush1.bf16.msra.mxu0 %v934
        %1131 = vmatprep.mubr.bf16.mxu0 %v302
        %1132 = vmatmul.mubr.bf16.gmra.mrb[0].mxu0 %v301
        %v1133 = vpop.f32.mrb[0].mxu0
        %v1134 = vadd.f32 %v453, %v1133
        %v1135 = vpop.f32.mrb[0].mxu0
        %v1136 = vadd.f32 %v457, %v1135
        %v1137 = vpop.f32.mrb[0].mxu0
        %v1138 = vpop.f32.mrb[0].mxu0
        %1139 = vdwg.mxu0
        %1140 = vmatprep.subr.bf16.mxu0 %v940
        %1141 = vmatpush1.bf16.msra.mxu0 %v939
        %1142 = vmatprep.subr.bf16.mxu0 %v945
        %1143 = vmatpush1.bf16.msra.mxu0 %v944
        %1144 = vmatprep.subr.bf16.mxu0 %v950
        %1145 = vmatpush1.bf16.msra.mxu0 %v949
        %1146 = vmatprep.subr.bf16.mxu0 %v955
        %1147 = vmatpush1.bf16.msra.mxu0 %v954
        %1148 = vmatprep.subr.bf16.mxu0 %v960
        %1149 = vmatpush1.bf16.msra.mxu0 %v959
        %1150 = vmatprep.subr.bf16.mxu0 %v965
        %1151 = vmatpush1.bf16.msra.mxu0 %v964
        %1152 = vmatprep.subr.bf16.mxu0 %v970
        %1153 = vmatpush1.bf16.msra.mxu0 %v969
        %1154 = vmatprep.subr.bf16.mxu0 %v975
        %1155 = vmatpush1.bf16.msra.mxu0 %v974
        %1156 = vmatprep.subr.bf16.mxu0 0
        %1157 = vmatpush1.bf16.msra.mxu0 0
        %1158 = vmatprep.subr.bf16.mxu0 0
        %1159 = vmatpush1.bf16.msra.mxu0 0
        %1160 = vmatprep.subr.bf16.mxu0 0
        %1161 = vmatpush1.bf16.msra.mxu0 0
        %1162 = vmatprep.subr.bf16.mxu0 0
        %1163 = vmatpush1.bf16.msra.mxu0 0
        %1164 = vmatprep.subr.bf16.mxu0 0
        %1165 = vmatpush1.bf16.msra.mxu0 0
        %1166 = vmatprep.subr.bf16.mxu0 0
        %1167 = vmatpush1.bf16.msra.mxu0 0
        %1168 = vmatprep.subr.bf16.mxu0 0
        %1169 = vmatpush1.bf16.msra.mxu0 0
        %1170 = vmatprep.subr.bf16.mxu0 0
        %1171 = vmatpush1.bf16.msra.mxu0 0
        %1172 = vmatprep.mubr.bf16.mxu0 0
        %1173 = vmatmul.mubr.bf16.gmra.mrb[0].mxu0 %v303
        %v1174 = vpop.f32.mrb[0].mxu0
        %v1175 = vadd.f32 %v1134, %v1174
        %v1176 = vpop.f32.mrb[0].mxu0
        %v1177 = vadd.f32 %v1136, %v1176
        %v1178 = vpop.f32.mrb[0].mxu0
        %v1179 = vpop.f32.mrb[0].mxu0
        %1180 = vdwg.mxu0
        %1181 = vmatprep.subr.bf16.mxu0 %v862
        %1182 = vmatpush1.bf16.msra.mxu0 %v861
        %1183 = vmatprep.subr.bf16.mxu0 %v867
        %1184 = vmatpush1.bf16.msra.mxu0 %v866
        %1185 = vmatprep.subr.bf16.mxu0 %v872
        %1186 = vmatpush1.bf16.msra.mxu0 %v871
        %1187 = vmatprep.subr.bf16.mxu0 %v877
        %1188 = vmatpush1.bf16.msra.mxu0 %v876
        %1189 = vmatprep.subr.bf16.mxu0 %v882
        %1190 = vmatpush1.bf16.msra.mxu0 %v881
        %1191 = vmatprep.subr.bf16.mxu0 %v887
        %1192 = vmatpush1.bf16.msra.mxu0 %v886
        %1193 = vmatprep.subr.bf16.mxu0 %v892
        %1194 = vmatpush1.bf16.msra.mxu0 %v891
        %1195 = vmatprep.subr.bf16.mxu0 %v897
        %1196 = vmatpush1.bf16.msra.mxu0 %v896
        %1197 = vmatprep.subr.bf16.mxu0 %v902
        %1198 = vmatpush1.bf16.msra.mxu0 %v901
        %1199 = vmatprep.subr.bf16.mxu0 %v907
        %1200 = vmatpush1.bf16.msra.mxu0 %v906
        %1201 = vmatprep.subr.bf16.mxu0 %v912
        %1202 = vmatpush1.bf16.msra.mxu0 %v911
        %1203 = vmatprep.subr.bf16.mxu0 %v917
        %1204 = vmatpush1.bf16.msra.mxu0 %v916
        %1205 = vmatprep.subr.bf16.mxu0 %v922
        %1206 = vmatpush1.bf16.msra.mxu0 %v921
        %1207 = vmatprep.subr.bf16.mxu0 %v927
        %1208 = vmatpush1.bf16.msra.mxu0 %v926
        %1209 = vmatprep.subr.bf16.mxu0 %v932
        %1210 = vmatpush1.bf16.msra.mxu0 %v931
        %1211 = vmatprep.subr.bf16.mxu0 %v937
        %1212 = vmatpush1.bf16.msra.mxu0 %v936
        %1213 = vmatprep.mubr.bf16.mxu0 %v302
        %1214 = vmatmul.mubr.bf16.gmra.mrb[0].mxu0 %v301
        %v1215 = vpop.f32.mrb[0].mxu0
        %v1216 = vadd.f32 %v461, %v1215
        %v1217 = vpop.f32.mrb[0].mxu0
        %v1218 = vadd.f32 %v465, %v1217
        %v1219 = vpop.f32.mrb[0].mxu0
        %v1220 = vpop.f32.mrb[0].mxu0
        %1221 = vdwg.mxu0
        %1222 = vmatprep.subr.bf16.mxu0 %v942
        %1223 = vmatpush1.bf16.msra.mxu0 %v941
        %1224 = vmatprep.subr.bf16.mxu0 %v947
        %1225 = vmatpush1.bf16.msra.mxu0 %v946
        %1226 = vmatprep.subr.bf16.mxu0 %v952
        %1227 = vmatpush1.bf16.msra.mxu0 %v951
        %1228 = vmatprep.subr.bf16.mxu0 %v957
        %1229 = vmatpush1.bf16.msra.mxu0 %v956
        %1230 = vmatprep.subr.bf16.mxu0 %v962
        %1231 = vmatpush1.bf16.msra.mxu0 %v961
        %1232 = vmatprep.subr.bf16.mxu0 %v967
        %1233 = vmatpush1.bf16.msra.mxu0 %v966
        %1234 = vmatprep.subr.bf16.mxu0 %v972
        %1235 = vmatpush1.bf16.msra.mxu0 %v971
        %1236 = vmatprep.subr.bf16.mxu0 %v977
        %1237 = vmatpush1.bf16.msra.mxu0 %v976
        %1238 = vmatprep.subr.bf16.mxu0 0
        %1239 = vmatpush1.bf16.msra.mxu0 0
        %1240 = vmatprep.subr.bf16.mxu0 0
        %1241 = vmatpush1.bf16.msra.mxu0 0
        %1242 = vmatprep.subr.bf16.mxu0 0
        %1243 = vmatpush1.bf16.msra.mxu0 0
        %1244 = vmatprep.subr.bf16.mxu0 0
        %1245 = vmatpush1.bf16.msra.mxu0 0
        %1246 = vmatprep.subr.bf16.mxu0 0
        %1247 = vmatpush1.bf16.msra.mxu0 0
        %1248 = vmatprep.subr.bf16.mxu0 0
        %1249 = vmatpush1.bf16.msra.mxu0 0
        %1250 = vmatprep.subr.bf16.mxu0 0
        %1251 = vmatpush1.bf16.msra.mxu0 0
        %1252 = vmatprep.subr.bf16.mxu0 0
        %1253 = vmatpush1.bf16.msra.mxu0 0
        %1254 = vmatprep.mubr.bf16.mxu0 0
        %1255 = vmatmul.mubr.bf16.gmra.mrb[0].mxu0 %v303
        %v1256 = vpop.f32.mrb[0].mxu0
        %v1257 = vadd.f32 %v1216, %v1256
        %v1258 = vpop.f32.mrb[0].mxu0
        %v1259 = vadd.f32 %v1218, %v1258
        %v1260 = vpop.f32.mrb[0].mxu0
        %v1261 = vpop.f32.mrb[0].mxu0
        %1262 = vdwg.mxu0
        %1263 = vmatprep.subr.bf16.mxu0 0
        %1264 = vmatpush1.bf16.msra.mxu0 %v863
        %1265 = vmatprep.subr.bf16.mxu0 0
        %1266 = vmatpush1.bf16.msra.mxu0 %v868
        %1267 = vmatprep.subr.bf16.mxu0 0
        %1268 = vmatpush1.bf16.msra.mxu0 %v873
        %1269 = vmatprep.subr.bf16.mxu0 0
        %1270 = vmatpush1.bf16.msra.mxu0 %v878
        %1271 = vmatprep.subr.bf16.mxu0 0
        %1272 = vmatpush1.bf16.msra.mxu0 %v883
        %1273 = vmatprep.subr.bf16.mxu0 0
        %1274 = vmatpush1.bf16.msra.mxu0 %v888
        %1275 = vmatprep.subr.bf16.mxu0 0
        %1276 = vmatpush1.bf16.msra.mxu0 %v893
        %1277 = vmatprep.subr.bf16.mxu0 0
        %1278 = vmatpush1.bf16.msra.mxu0 %v898
        %1279 = vmatprep.subr.bf16.mxu0 0
        %1280 = vmatpush1.bf16.msra.mxu0 %v903
        %1281 = vmatprep.subr.bf16.mxu0 0
        %1282 = vmatpush1.bf16.msra.mxu0 %v908
        %1283 = vmatprep.subr.bf16.mxu0 0
        %1284 = vmatpush1.bf16.msra.mxu0 %v913
        %1285 = vmatprep.subr.bf16.mxu0 0
        %1286 = vmatpush1.bf16.msra.mxu0 %v918
        %1287 = vmatprep.subr.bf16.mxu0 0
        %1288 = vmatpush1.bf16.msra.mxu0 %v923
        %1289 = vmatprep.subr.bf16.mxu0 0
        %1290 = vmatpush1.bf16.msra.mxu0 %v928
        %1291 = vmatprep.subr.bf16.mxu0 0
        %1292 = vmatpush1.bf16.msra.mxu0 %v933
        %1293 = vmatprep.subr.bf16.mxu0 0
        %1294 = vmatpush1.bf16.msra.mxu0 %v938
        %1295 = vmatprep.mubr.bf16.mxu0 %v302
        %1296 = vmatmul.mubr.bf16.gmra.mrb[0].mxu0 %v301
        %v1297 = vpop.f32.mrb[0].mxu0
        %v1298 = vadd.f32 %v469, %v1297
        %v1299 = vpop.f32.mrb[0].mxu0
        %v1300 = vpop.f32.mrb[0].mxu0
        %v1301 = vpop.f32.mrb[0].mxu0
        %1302 = vdwg.mxu0
        %1303 = vmatprep.subr.bf16.mxu0 0
        %1304 = vmatpush1.bf16.msra.mxu0 %v943
        %1305 = vmatprep.subr.bf16.mxu0 0
        %1306 = vmatpush1.bf16.msra.mxu0 %v948
        %1307 = vmatprep.subr.bf16.mxu0 0
        %1308 = vmatpush1.bf16.msra.mxu0 %v953
        %1309 = vmatprep.subr.bf16.mxu0 0
        %1310 = vmatpush1.bf16.msra.mxu0 %v958
        %1311 = vmatprep.subr.bf16.mxu0 0
        %1312 = vmatpush1.bf16.msra.mxu0 %v963
        %1313 = vmatprep.subr.bf16.mxu0 0
        %1314 = vmatpush1.bf16.msra.mxu0 %v968
        %1315 = vmatprep.subr.bf16.mxu0 0
        %1316 = vmatpush1.bf16.msra.mxu0 %v973
        %1317 = vmatprep.subr.bf16.mxu0 0
        %1318 = vmatpush1.bf16.msra.mxu0 %v978
        %1319 = vmatprep.subr.bf16.mxu0 0
        %1320 = vmatpush1.bf16.msra.mxu0 0
        %1321 = vmatprep.subr.bf16.mxu0 0
        %1322 = vmatpush1.bf16.msra.mxu0 0
        %1323 = vmatprep.subr.bf16.mxu0 0
        %1324 = vmatpush1.bf16.msra.mxu0 0
        %1325 = vmatprep.subr.bf16.mxu0 0
        %1326 = vmatpush1.bf16.msra.mxu0 0
        %1327 = vmatprep.subr.bf16.mxu0 0
        %1328 = vmatpush1.bf16.msra.mxu0 0
        %1329 = vmatprep.subr.bf16.mxu0 0
        %1330 = vmatpush1.bf16.msra.mxu0 0
        %1331 = vmatprep.subr.bf16.mxu0 0
        %1332 = vmatpush1.bf16.msra.mxu0 0
        %1333 = vmatprep.subr.bf16.mxu0 0
        %1334 = vmatpush1.bf16.msra.mxu0 0
        %1335 = vmatprep.mubr.bf16.mxu0 0
        %1336 = vmatmul.mubr.bf16.gmra.mrb[0].mxu0 %v303
        %v1337 = vpop.f32.mrb[0].mxu0
        %v1338 = vadd.f32 %v1298, %v1337
        %v1339 = vpop.f32.mrb[0].mxu0
        %v1340 = vpop.f32.mrb[0].mxu0
        %v1341 = vpop.f32.mrb[0].mxu0
        %1342 = vdwg.mxu0
        %v1343 = vxor.u32 %v1175, 2147483648
        %v1344 = vmul.f32 %v1343, 1.442695
        %v1345 = vpow.pop %v1344
        %v1346 = vadd.f32 %v1345, 1.0
        %v1347 = vrcp.pop %v1346
        %v1348 = vmul.f32 1.0, %v1347
        %v1349 = vxor.u32 %v1177, 2147483648
        %v1350 = vmul.f32 %v1349, 1.442695
        %v1351 = vpow.pop %v1350
        %v1352 = vadd.f32 %v1351, 1.0
        %v1353 = vrcp.pop %v1352
        %v1354 = vmul.f32 1.0, %v1353
        %v1355 = vxor.u32 %v1257, 2147483648
        %v1356 = vmul.f32 %v1355, 1.442695
        %v1357 = vpow.pop %v1356
        %v1358 = vadd.f32 %v1357, 1.0
        %v1359 = vrcp.pop %v1358
        %v1360 = vmul.f32 1.0, %v1359
        %v1361 = vxor.u32 %v1259, 2147483648
        %v1362 = vmul.f32 %v1361, 1.442695
        %v1363 = vpow.pop %v1362
        %v1364 = vadd.f32 %v1363, 1.0
        %v1365 = vrcp.pop %v1364
        %v1366 = vmul.f32 1.0, %v1365
        %v1367 = vtanh.pop %v1338
        %v1368 = vmul.f32 %v1348, %v1367
        %v1369 = vmul.f32 %v1354, %v299
        %v1370 = vadd.f32 %v1368, %v1369
        %v1371 = vmul.f32 %v1360, %v300
        %v1372 = vadd.f32 %v1370, %v1371
        %v1373 = vtanh.pop %v1372
        %v1374 = vmul.f32 %v1366, %v1373
        %s1375 = smul.u32 %s213, 2
        %s1376 = scalar_lea.vmem %s5, %s1375
        %1377 = vst [vmem:[%s1376] sm:$0x3] %v1374
        %s1378 = scalar_lea.vmem %s6, %s1375
        %1379 = vst [vmem:[%s1378] sm:$0x3] %v1372
        // Predicated region
        $region41: #{tree2seq_forward.2} parent=31 // pred_check
          %p1380 = pneg %p112
        $region42: #{tree2seq_forward.2} parent=31 // pred_check_branch
          %1382 = sbr.rel (%p1380) target = $region44
        $region43: #{tree2seq_forward.2} parent=31 // pred_region
          _
        $region44: #{tree2seq_forward.2} parent=31 // pred_fallthru
          _
        // Predicated region
        $region45: #{tree2seq_forward.2} parent=31 // pred_check
          %p1383 = pneg %p133
        $region46: #{tree2seq_forward.2} parent=31 // pred_check_branch
          %1385 = sbr.rel (%p1383) target = $region48
        $region47: #{tree2seq_forward.2} parent=31 // pred_region
          _
        $region48: #{tree2seq_forward.2} parent=31 // pred_fallthru
          _
        // Predicated region
        $region49: #{tree2seq_forward.2} parent=31 // pred_check
          %p1386 = pneg %p112
        $region50: #{tree2seq_forward.2} parent=31 // pred_check_branch
          %1388 = sbr.rel (%p1386) target = $region52
        $region51: #{tree2seq_forward.2} parent=31 // pred_region
          _
        $region52: #{tree2seq_forward.2} parent=31 // pred_fallthru
          _
        // Predicated region
        $region53: #{tree2seq_forward.2} parent=31 // pred_check
          %p1389 = pneg %p133
        $region54: #{tree2seq_forward.2} parent=31 // pred_check_branch
          %1391 = sbr.rel (%p1389) target = $region56
        $region55: #{tree2seq_forward.2} parent=31 // pred_region
          _
        $region56: #{tree2seq_forward.2} parent=31 // pred_fallthru
          _
      $region32: #{tree2seq_forward.2} parent=5 // pred_fallthru
        _
      %p1392 = scmp.le.s32.totalorder 2, %s24
      // Predicated region
      $region57: #{tree2seq_forward.2} parent=5 // pred_check
        %p1393 = pneg %p1392
      $region58: #{tree2seq_forward.2} parent=5 // pred_check_branch
        %1395 = sbr.rel (%p1393) target = $region60
      $region59: #{tree2seq_forward.2} parent=5 // pred_region
        %s1396 = ssub.s32 %s24, 2
      $region60: #{tree2seq_forward.2} parent=5 // pred_fallthru
        _
    $region6: #{tree2seq_forward.2} parent=1 // loop_footer
      %s28 = sadd.s32 1, %s24
    $region7: #{tree2seq_forward.2} parent=1 // loop_footer_branch
      %23 = sbr.rel target = $region3
    $region8: #{tree2seq_forward.2} parent=1 // loop_exit
      _
    %1397 = vsyncpa [#allocation6], 1
    %s1398 = scalar_lea.sflag [#allocation6], 1
    %1399 = vsyncpa %s1398, 1

</llo_original>
